<compile_context>
chip_gen: v7x
topology: tpu7x:2x2x1
jax: 0.10.0
libtpu: 0.0.40
codegen_flags: <defaults>
</compile_context>

<pallas_src>
import functools

import jax
import jax.numpy as jnp
from jax import lax
from jax.experimental import pallas as pl
from jax.experimental.pallas import tpu as pltpu

# ----------------------------- configuration --------------------------------
MAX_N = 12            # number of vertices in the fixed cell graph
NVT = 8               # number of vertex types
NVT_PAD = 16          # x one-hot width padded to a sublane-tile-friendly 16
HS = 32               # hidden size (hs)
NZ = 16               # latent size (nz)
VS = HS + MAX_N       # vid=True -> vs = hs + max_n
START_TYPE = 0
END_TYPE = 1
ADD_TYPE = START_TYPE + 1
BETA = 0.005
EPS_SCALE = 0.01
B_TILE = 128          # batch tile (128 good on all gens; 256 also fits v6e/v7x VMEM)

_MXU_DTYPE = jnp.bfloat16   # matmul operand dtype (f32 accumulate everywhere)

# predecessors of each vertex in the fixed decode/encode topology
PRED = {0: [], 1: [0], 2: [1], 3: [2], 4: [1], 5: [3], 6: [4, 5],
        7: [1], 8: [3], 9: [6], 10: [7, 8, 9], 11: [10]}

# teacher-forced type column used when updating each decoded vertex
# (reference uses g_true.vs[11]['type'] for BOTH vertex 10 and 11)
DEC_TYPE_COL = {2: 2, 3: 3, 4: 4, 5: 5, 6: 6, 7: 7, 8: 8, 9: 9, 10: 11, 11: 11}

# add_vertex scorings: graph state at scoring time is the last-added vertex
SCORE_SRC = (1, 3, 4, 6, 7, 8)     # Hd[v] used as graph state
SCORE_TGT = (2, 4, 5, 7, 8, 9)     # true-type column being scored


# ----------------------- weight-slab layout (host + kernel) ------------------
def _slab_layout(entries, row_align):
    offs, off = {}, 0
    for name, (r, c) in entries:
        offs[name] = (off, r, c)
        off += ((r + row_align - 1) // row_align) * row_align
    return offs, off

_W_ENTRIES = [
    ("wex", (NVT_PAD, 4 * HS)),   # encoder GRU x-weights, 8 real rows + 8 zero rows
    ("weh", (HS, 4 * HS)),        # encoder GRU h-weights
    ("wdx", (NVT_PAD, 4 * HS)),   # decoder GRU x-weights
    ("wdh", (HS, 4 * HS)),        # decoder GRU h-weights
    ("wgm", (HS, 2 * HS)),        # fused [gate | mapper] (hidden part)
    ("wfc12", (HS, 2 * NZ)),      # fused [fc1 | fc2]
    ("wfc3", (NZ, HS)),
    ("wav1", (HS, 2 * HS)),
    ("wav2", (2 * HS, NVT)),
]
_B_ENTRIES = [
    ("be", (1, 4 * HS)),
    ("bd", (1, 4 * HS)),
    ("bd0", (1, 4 * HS)),         # bd + wdx[START_TYPE]  (constant x folded in)
    ("bd1", (1, 4 * HS)),         # bd + wdx[ADD_TYPE]
    ("bgm", (MAX_N, 2 * HS)),     # per-vertex-id [gate | mapper] bias rows
    ("bfc12", (1, 2 * NZ)),
    ("bfc3", (1, HS)),
    ("bav1", (1, 2 * HS)),
    ("bav2", (1, NVT)),
]
_W_OFFS, _W_ROWS = _slab_layout(_W_ENTRIES, 16)   # bf16 sublane tile = 16 rows
_B_OFFS, _B_ROWS = _slab_layout(_B_ENTRIES, 8)    # f32  sublane tile = 8 rows


# ------------------------------- fused kernel --------------------------------
def _dvae_fused_kernel(b_real, nt_ref, eps_ref, wslab_ref, bslab_ref, out_ref):
    f32 = jnp.float32
    mxu = wslab_ref.dtype
    B = nt_ref.shape[0]

    nt = nt_ref[...]                                        # (B, MAX_N) int32
    iota_nvt = lax.broadcasted_iota(jnp.int32, (B, NVT), 1)
    iota_x = lax.broadcasted_iota(jnp.int32, (B, NVT_PAD), 1)

    # in-kernel padding mask (1.0 for real rows of the global batch)
    row = pl.program_id(0) * B + lax.broadcasted_iota(jnp.int32, (B, 1), 0)
    mask = (row < b_real).astype(f32)                       # (B, 1)

    def wsl(name):
        off, r, c = _W_OFFS[name]
        return wslab_ref[off:off + r, 0:c]                  # bf16 weight slice

    def bsl(name):
        off, r, c = _B_OFFS[name]
        return bslab_ref[off:off + r, 0:c]                  # f32 bias slice

    weh = wsl("weh")
    wdh = wsl("wdh")
    wgm = wsl("wgm")

    def onehot_x(col):      # padded-width one-hot for the GRU x side (types < NVT)
        return (iota_x == nt[:, col:col + 1]).astype(mxu)

    # ---- batch all x-side GRU contributions off the serial recurrence -------
    xe = jnp.concatenate([onehot_x(v) for v in range(MAX_N)], axis=0)          # (12B,16)
    gxe = jnp.dot(xe, wsl("wex"), preferred_element_type=f32) + bsl("be")      # (12B,128)
    xd = jnp.concatenate([onehot_x(DEC_TYPE_COL[v]) for v in range(2, MAX_N)], axis=0)
    gxd = jnp.dot(xd, wsl("wdx"), preferred_element_type=f32) + bsl("bd")      # (10B,128)
    gxd0 = bsl("bd0")      # constant START_TYPE one-hot folded into a bias row
    gxd1 = bsl("bd1")      # constant ADD_TYPE  one-hot folded into a bias row

    # ---- hoisted per-vertex-id gate/mapper bias broadcasts -------------------
    bgm = bsl("bgm")                                                           # (12, 64)
    bgm_b = [jnp.broadcast_to(bgm[p:p + 1, :], (B, 2 * HS)) for p in range(MAX_N)]

    def gru_step(gx, h, wh):
        # gx already holds x@Wx + packed bias, columns = [r | z | n_x | n_h]
        g = gx + jnp.dot(h.astype(mxu), wh, preferred_element_type=f32)        # (B,128)
        s = jax.nn.sigmoid(g)                    # one full-vreg EUP pass for r and z
        r = s[:, 0:HS]
        z = s[:, HS:2 * HS]
        n = jnp.tanh(g[:, 2 * HS:3 * HS] + r * g[:, 3 * HS:4 * HS])
        return (1.0 - z) * n + z * h

    def gated_agg(H, preds):
        # sum_p sigmoid(gate([H_p|vid_p])) * mapper([H_p|vid_p]); vid one-hot folded
        # into the pre-broadcast per-vertex-id bias rows bgm_b[p].
        acc = None
        for p in preds:
            gm = jnp.dot(H[p].astype(mxu), wgm, preferred_element_type=f32) + bgm_b[p]
            prod = jax.nn.sigmoid(gm[:, 0:HS]) * gm[:, HS:2 * HS]
            acc = prod if acc is None else acc + prod
        return acc

    # ------------------------------- encode ----------------------------------
    Hf = {}
    zero_h = jnp.zeros((B, HS), f32)
    for v in range(MAX_N):
        hin = zero_h if v == 0 else gated_agg(Hf, PRED[v])
        Hf[v] = gru_step(gxe[v * B:(v + 1) * B, :], hin, weh)

    # mu / logvar from one fused (HS, 2*NZ) head
    ml = (jnp.dot(Hf[MAX_N - 1].astype(mxu), wsl("wfc12"), preferred_element_type=f32)
          + bsl("bfc12"))
    mu = ml[:, 0:NZ]
    logvar = ml[:, NZ:2 * NZ]

    # reparameterize (training mode, eps_scale=0.01)
    z = (EPS_SCALE * eps_ref[...]) * jnp.exp(0.5 * logvar) + mu
    h0 = jnp.tanh(jnp.dot(z.astype(mxu), wsl("wfc3"), preferred_element_type=f32)
                  + bsl("bfc3"))

    # ---------------------- teacher-forced decode (loss) ---------------------
    # TODO(synk): the reference skips adding a vertex when its true type == START_TYPE;
    # we assume well-formed inputs (no START_TYPE among decoded nodes), matching usage.
    # TODO(synk): the edge-likelihood term (add_edge MLP) of DVAE.loss is not modeled.
    Hd = {}
    Hd[0] = gru_step(gxd0, h0, wdh)
    Hd[1] = gru_step(gxd1, gated_agg(Hd, PRED[1]), wdh)
    for v in range(2, MAX_N):
        Hd[v] = gru_step(gxd[(v - 2) * B:(v - 1) * B, :], gated_agg(Hd, PRED[v]), wdh)

    # ----------------- batched add_vertex scoring + loss ---------------------
    hstack = jnp.concatenate([Hd[s] for s in SCORE_SRC], axis=0).astype(mxu)   # (6B,HS)
    a1 = jnp.maximum(
        jnp.dot(hstack, wsl("wav1"), preferred_element_type=f32) + bsl("bav1"), 0.0)
    scores = (jnp.dot(a1.astype(mxu), wsl("wav2"), preferred_element_type=f32)
              + bsl("bav2"))                                                   # (6B,NVT)

    # target one-hots (masked for padded batch rows), stacked to match scores
    tgt_oh = jnp.concatenate(
        [(iota_nvt == nt[:, c:c + 1]).astype(f32) * mask for c in SCORE_TGT], axis=0)

    m = jnp.max(scores, axis=-1, keepdims=True)
    logp = scores - (m + jnp.log(jnp.sum(jnp.exp(scores - m), axis=-1, keepdims=True)))
    vll = jnp.sum(logp * tgt_oh)

    kld = -0.5 * jnp.sum(mask * (1.0 + logvar - mu * mu - jnp.exp(logvar)))
    partial = -vll + BETA * kld                                                # per-tile

    out_ref[...] = jnp.broadcast_to(partial, out_ref.shape)                    # lane-dense


# ------------------------------ parameter init --------------------------------
def init_params(key):
    keys = iter(jax.random.split(key, 64))

    def u(shape, fan_in):
        bound = 1.0 / (fan_in ** 0.5)
        return jax.random.uniform(next(keys), shape, jnp.float32, -bound, bound)

    def gru(in_dim):
        return dict(
            w_ir=u((in_dim, HS), HS), w_iz=u((in_dim, HS), HS), w_in=u((in_dim, HS), HS),
            w_hr=u((HS, HS), HS), w_hz=u((HS, HS), HS), w_hn=u((HS, HS), HS),
            b_ir=u((1, HS), HS), b_iz=u((1, HS), HS), b_in=u((1, HS), HS),
            b_hr=u((1, HS), HS), b_hz=u((1, HS), HS), b_hn=u((1, HS), HS),
        )

    return dict(
        grue_fw=gru(NVT),                    # encoder forward GRUCell
        grud=gru(NVT),                       # decoder GRUCell
        fc1_w_t=u((HS, NZ), HS), fc1_b=u((1, NZ), HS),
        fc2_w_t=u((HS, NZ), HS), fc2_b=u((1, NZ), HS),
        fc3_w_t=u((NZ, HS), NZ), fc3_b=u((1, HS), NZ),
        av1_w_t=u((HS, 2 * HS), HS), av1_b=u((1, 2 * HS), HS),
        av2_w_t=u((2 * HS, NVT), 2 * HS), av2_b=u((1, NVT), 2 * HS),
        gate_fw_w_t=u((VS, HS), VS), gate_fw_b=u((1, HS), VS),
        mapper_fw_w_t=u((VS, HS), VS),       # bias=False
        # grue_backward / gate_backward / mapper_backward / hv_unify / hg_unify /
        # add_edge are unused in forward() with bidirectional=False, so omitted.
    )


def _pack_gru(gp):
    """Pack GRUCell into one (NVT+HS, 4*HS) weight: columns = [r | z | n_x | n_h]."""
    w = jnp.zeros((NVT + HS, 4 * HS), jnp.float32)
    w = w.at[:NVT, 0 * HS:1 * HS].set(gp["w_ir"]).at[NVT:, 0 * HS:1 * HS].set(gp["w_hr"])
    w = w.at[:NVT, 1 * HS:2 * HS].set(gp["w_iz"]).at[NVT:, 1 * HS:2 * HS].set(gp["w_hz"])
    w = w.at[:NVT, 2 * HS:3 * HS].set(gp["w_in"])
    w = w.at[NVT:, 3 * HS:4 * HS].set(gp["w_hn"])
    b = jnp.concatenate([gp["b_ir"] + gp["b_hr"],
                         gp["b_iz"] + gp["b_hz"],
                         gp["b_in"], gp["b_hn"]], axis=1)                 # (1, 4*HS)
    return w, b


def _pad_rows(a, rows):
    return jnp.zeros((rows, a.shape[1]), a.dtype).at[:a.shape[0], :].set(a)


def pack_params(raw):
    """Pack everything into two lane-padded resident slabs (bf16 weights, f32 biases)."""
    we, be = _pack_gru(raw["grue_fw"])
    wd, bd = _pack_gru(raw["grud"])
    wex, weh = we[:NVT], we[NVT:]
    wdx, wdh = wd[:NVT], wd[NVT:]

    wg = raw["gate_fw_w_t"]                  # (VS, HS)   input = [h | vid]
    bg = raw["gate_fw_b"]                    # (1, HS)
    wm = raw["mapper_fw_w_t"]                # (VS, HS)
    # hidden part fused side by side; vid one-hot part folded into per-vid bias rows
    wgm = jnp.concatenate([wg[:HS, :], wm[:HS, :]], axis=1)               # (HS, 2*HS)
    bgm = jnp.concatenate([bg + wg[HS:, :], wm[HS:, :]], axis=1)          # (MAX_N, 2*HS)
    wfc12 = jnp.concatenate([raw["fc1_w_t"], raw["fc2_w_t"]], axis=1)     # (HS, 2*NZ)
    bfc12 = jnp.concatenate([raw["fc1_b"], raw["fc2_b"]], axis=1)         # (1, 2*NZ)

    # constant decode one-hot contributions folded into bias rows
    bd0 = bd + wdx[START_TYPE:START_TYPE + 1, :]
    bd1 = bd + wdx[ADD_TYPE:ADD_TYPE + 1, :]

    wvals = dict(wex=_pad_rows(wex, NVT_PAD), weh=weh,
                 wdx=_pad_rows(wdx, NVT_PAD), wdh=wdh,
                 wgm=wgm, wfc12=wfc12, wfc3=raw["fc3_w_t"],
                 wav1=raw["av1_w_t"], wav2=raw["av2_w_t"])
    bvals = dict(be=be, bd=bd, bd0=bd0, bd1=bd1, bgm=bgm, bfc12=bfc12,
                 bfc3=raw["fc3_b"], bav1=raw["av1_b"], bav2=raw["av2_b"])

    wslab = jnp.zeros((_W_ROWS, 4 * HS), jnp.float32)
    for name, (off, r, c) in _W_OFFS.items():
        wslab = wslab.at[off:off + r, 0:c].set(wvals[name])
    bslab = jnp.zeros((_B_ROWS, 4 * HS), jnp.float32)
    for name, (off, r, c) in _B_OFFS.items():
        bslab = bslab.at[off:off + r, 0:c].set(bvals[name])

    return dict(wslab=wslab.astype(_MXU_DTYPE), bslab=bslab)


# ------------------------------ model forward ---------------------------------
def dvae_forward(node_types, packed, key, b_tile=B_TILE):
    B = node_types.shape[0]
    # Large tiles for MXU M utilization, but don't burn a full 128-row tile on a
    # tiny batch; tile stays a sublane multiple of 8.
    b_tile = max(8, min(b_tile, ((B + 7) // 8) * 8))
    num_tiles = pl.cdiv(B, b_tile)
    B_pad = num_tiles * b_tile

    nt = jnp.zeros((B_pad, MAX_N), jnp.int32).at[:B, :].set(node_types)
    eps = jax.random.normal(key, (B_pad, NZ), jnp.float32)   # scaled by EPS_SCALE in-kernel

    wslab = packed["wslab"]
    bslab = packed["bslab"]

    kernel = functools.partial(_dvae_fused_kernel, B)

    out = pl.pallas_call(
        kernel,
        grid=(num_tiles,),
        in_specs=[
            pl.BlockSpec((b_tile, MAX_N), lambda i: (i, 0)),
            pl.BlockSpec((b_tile, NZ), lambda i: (i, 0)),
            # constant index_map -> slabs stay resident in VMEM across all tiles
            pl.BlockSpec(wslab.shape, lambda i: (0, 0)),
            pl.BlockSpec(bslab.shape, lambda i: (0, 0)),
        ],
        out_specs=pl.BlockSpec((1, 8, 128), lambda i: (i, 0, 0)),
        out_shape=jax.ShapeDtypeStruct((num_tiles, 8, 128), jnp.float32),
        compiler_params=pltpu.CompilerParams(
            dimension_semantics=("parallel",),   # batch tiles split across TCs (v7x)
        ),
    )(nt, eps, wslab, bslab)

    # per-tile partial losses (broadcast within each block) -> total loss
    return jnp.sum(out[:, 0, 0])


def _make_node_types(key, batch):
    """NAS-cell-like node types: structural nodes fixed, op nodes random in [2, NVT)."""
    rand_ops = jax.random.randint(key, (batch, MAX_N), 2, NVT)
    fixed = jnp.array([START_TYPE, ADD_TYPE, -1, ADD_TYPE, -1, -1,
                       ADD_TYPE, -1, -1, -1, ADD_TYPE, END_TYPE], jnp.int32)
    return jnp.where(fixed[None, :] >= 0, fixed[None, :], rand_ops).astype(jnp.int32)


# ------------------------------------ main -------------------------------------
if __name__ == "__main__":
    root = jax.random.PRNGKey(0)
    k_params, k_types, k_eps, k_types2, k_eps2 = jax.random.split(root, 5)

    raw_params = init_params(k_params)
    packed_params = pack_params(raw_params)

    loss_fn = jax.jit(dvae_forward)

    # small deterministic example (batch=2)
    node_types = _make_node_types(k_types, 2)
    loss_small = loss_fn(node_types, packed_params, k_eps)
    jax.block_until_ready(loss_small)
    assert jnp.isfinite(loss_small)

    # larger batch to exercise the full 128-row tiles and the multi-tile grid path
    node_types_big = _make_node_types(k_types2, 256)
    loss_big = loss_fn(node_types_big, packed_params, k_eps2)
    jax.block_until_ready(loss_big)
    assert jnp.isfinite(loss_big)

    print("KERNEL_OK")
</pallas_src>

<mosaic_0001>
module attributes {stable_mosaic.version = 11 : i64} {
  func.func @_dvae_fused_kernel(%arg0: i32, %arg1: memref<8x12xi32, #tpu.memory_space<vmem>>, %arg2: memref<8x16xf32, #tpu.memory_space<vmem>>, %arg3: memref<272x128xbf16, #tpu.memory_space<vmem>>, %arg4: memref<80x128xf32, #tpu.memory_space<vmem>>, %arg5: memref<1x8x128xf32, #tpu.memory_space<vmem>>) attributes {dimension_semantics = [#tpu.dimension_semantics<parallel>], iteration_bounds = array<i64: 1>, scalar_prefetch = 0 : i64, scratch_operands = 0 : i64, tpu.core_type = #tpu.core_type<tc>, window_params = [{transform_indices = @transform_0, window_bounds = array<i64: 8, 12>}, {transform_indices = @transform_1, window_bounds = array<i64: 8, 16>}, {pipeline_mode = #tpu.pipeline_mode<synchronous>, transform_indices = @transform_2, window_bounds = array<i64: 272, 128>}, {pipeline_mode = #tpu.pipeline_mode<synchronous>, transform_indices = @transform_3, window_bounds = array<i64: 80, 128>}, {transform_indices = @transform_4, window_bounds = array<i64: 1, 8, 128>}]} {
    %c0 = arith.constant 0 : index
    %c0_0 = arith.constant 0 : index
    %0 = vector.load %arg1[%c0, %c0_0] : memref<8x12xi32, #tpu.memory_space<vmem>>, vector<8x12xi32>
    %1 = tpu.iota {dimensions = array<i32: 1>} : vector<8x8xi32>
    %2 = tpu.iota {dimensions = array<i32: 1>} : vector<8x16xi32>
    %c8_i32 = arith.constant 8 : i32
    %3 = arith.muli %arg0, %c8_i32 : i32
    %4 = tpu.iota {dimensions = array<i32: 0>} : vector<8x1xi32>
    %5 = vector.broadcast %3 : i32 to vector<8x1xi32>
    %6 = arith.addi %5, %4 : vector<8x1xi32>
    %c2_i32 = arith.constant 2 : i32
    %7 = vector.broadcast %c2_i32 : i32 to vector<8x1xi32>
    %8 = arith.cmpi slt, %6, %7 : vector<8x1xi32>
    %9 = arith.extui %8 : vector<8x1xi1> to vector<8x1xi32>
    %10 = arith.sitofp %9 : vector<8x1xi32> to vector<8x1xf32>
    %c16 = arith.constant 16 : index
    %c0_1 = arith.constant 0 : index
    %11 = vector.load %arg3[%c16, %c0_1] : memref<272x128xbf16, #tpu.memory_space<vmem>>, vector<32x128xbf16>
    %c64 = arith.constant 64 : index
    %c0_2 = arith.constant 0 : index
    %12 = vector.load %arg3[%c64, %c0_2] : memref<272x128xbf16, #tpu.memory_space<vmem>>, vector<32x128xbf16>
    %c96 = arith.constant 96 : index
    %c0_3 = arith.constant 0 : index
    %13 = vector.load %arg3[%c96, %c0_3] : memref<272x128xbf16, #tpu.memory_space<vmem>>, vector<32x64xbf16>
    %14 = vector.extract_strided_slice %0 {offsets = [0, 0], sizes = [8, 1], strides = [1, 1]} : vector<8x12xi32> to vector<8x1xi32>
    %15 = vector.broadcast %14 : vector<8x1xi32> to vector<8x16xi32>
    %16 = arith.cmpi eq, %2, %15 : vector<8x16xi32>
    %17 = arith.extui %16 : vector<8x16xi1> to vector<8x16xi32>
    %18 = arith.sitofp %17 : vector<8x16xi32> to vector<8x16xf32>
    %19 = arith.truncf %18 : vector<8x16xf32> to vector<8x16xbf16>
    %20 = vector.extract_strided_slice %0 {offsets = [0, 1], sizes = [8, 1], strides = [1, 1]} : vector<8x12xi32> to vector<8x1xi32>
    %21 = vector.broadcast %20 : vector<8x1xi32> to vector<8x16xi32>
    %22 = arith.cmpi eq, %2, %21 : vector<8x16xi32>
    %23 = arith.extui %22 : vector<8x16xi1> to vector<8x16xi32>
    %24 = arith.sitofp %23 : vector<8x16xi32> to vector<8x16xf32>
    %25 = arith.truncf %24 : vector<8x16xf32> to vector<8x16xbf16>
    %26 = vector.extract_strided_slice %0 {offsets = [0, 2], sizes = [8, 1], strides = [1, 1]} : vector<8x12xi32> to vector<8x1xi32>
    %27 = vector.broadcast %26 : vector<8x1xi32> to vector<8x16xi32>
    %28 = arith.cmpi eq, %2, %27 : vector<8x16xi32>
    %29 = arith.extui %28 : vector<8x16xi1> to vector<8x16xi32>
    %30 = arith.sitofp %29 : vector<8x16xi32> to vector<8x16xf32>
    %31 = arith.truncf %30 : vector<8x16xf32> to vector<8x16xbf16>
    %32 = vector.extract_strided_slice %0 {offsets = [0, 3], sizes = [8, 1], strides = [1, 1]} : vector<8x12xi32> to vector<8x1xi32>
    %33 = vector.broadcast %32 : vector<8x1xi32> to vector<8x16xi32>
    %34 = arith.cmpi eq, %2, %33 : vector<8x16xi32>
    %35 = arith.extui %34 : vector<8x16xi1> to vector<8x16xi32>
    %36 = arith.sitofp %35 : vector<8x16xi32> to vector<8x16xf32>
    %37 = arith.truncf %36 : vector<8x16xf32> to vector<8x16xbf16>
    %38 = vector.extract_strided_slice %0 {offsets = [0, 4], sizes = [8, 1], strides = [1, 1]} : vector<8x12xi32> to vector<8x1xi32>
    %39 = vector.broadcast %38 : vector<8x1xi32> to vector<8x16xi32>
    %40 = arith.cmpi eq, %2, %39 : vector<8x16xi32>
    %41 = arith.extui %40 : vector<8x16xi1> to vector<8x16xi32>
    %42 = arith.sitofp %41 : vector<8x16xi32> to vector<8x16xf32>
    %43 = arith.truncf %42 : vector<8x16xf32> to vector<8x16xbf16>
    %44 = vector.extract_strided_slice %0 {offsets = [0, 5], sizes = [8, 1], strides = [1, 1]} : vector<8x12xi32> to vector<8x1xi32>
    %45 = vector.broadcast %44 : vector<8x1xi32> to vector<8x16xi32>
    %46 = arith.cmpi eq, %2, %45 : vector<8x16xi32>
    %47 = arith.extui %46 : vector<8x16xi1> to vector<8x16xi32>
    %48 = arith.sitofp %47 : vector<8x16xi32> to vector<8x16xf32>
    %49 = arith.truncf %48 : vector<8x16xf32> to vector<8x16xbf16>
    %50 = vector.extract_strided_slice %0 {offsets = [0, 6], sizes = [8, 1], strides = [1, 1]} : vector<8x12xi32> to vector<8x1xi32>
    %51 = vector.broadcast %50 : vector<8x1xi32> to vector<8x16xi32>
    %52 = arith.cmpi eq, %2, %51 : vector<8x16xi32>
    %53 = arith.extui %52 : vector<8x16xi1> to vector<8x16xi32>
    %54 = arith.sitofp %53 : vector<8x16xi32> to vector<8x16xf32>
    %55 = arith.truncf %54 : vector<8x16xf32> to vector<8x16xbf16>
    %56 = vector.extract_strided_slice %0 {offsets = [0, 7], sizes = [8, 1], strides = [1, 1]} : vector<8x12xi32> to vector<8x1xi32>
    %57 = vector.broadcast %56 : vector<8x1xi32> to vector<8x16xi32>
    %58 = arith.cmpi eq, %2, %57 : vector<8x16xi32>
    %59 = arith.extui %58 : vector<8x16xi1> to vector<8x16xi32>
    %60 = arith.sitofp %59 : vector<8x16xi32> to vector<8x16xf32>
    %61 = arith.truncf %60 : vector<8x16xf32> to vector<8x16xbf16>
    %62 = vector.extract_strided_slice %0 {offsets = [0, 8], sizes = [8, 1], strides = [1, 1]} : vector<8x12xi32> to vector<8x1xi32>
    %63 = vector.broadcast %62 : vector<8x1xi32> to vector<8x16xi32>
    %64 = arith.cmpi eq, %2, %63 : vector<8x16xi32>
    %65 = arith.extui %64 : vector<8x16xi1> to vector<8x16xi32>
    %66 = arith.sitofp %65 : vector<8x16xi32> to vector<8x16xf32>
    %67 = arith.truncf %66 : vector<8x16xf32> to vector<8x16xbf16>
    %68 = vector.extract_strided_slice %0 {offsets = [0, 9], sizes = [8, 1], strides = [1, 1]} : vector<8x12xi32> to vector<8x1xi32>
    %69 = vector.broadcast %68 : vector<8x1xi32> to vector<8x16xi32>
    %70 = arith.cmpi eq, %2, %69 : vector<8x16xi32>
    %71 = arith.extui %70 : vector<8x16xi1> to vector<8x16xi32>
    %72 = arith.sitofp %71 : vector<8x16xi32> to vector<8x16xf32>
    %73 = arith.truncf %72 : vector<8x16xf32> to vector<8x16xbf16>
    %74 = vector.extract_strided_slice %0 {offsets = [0, 10], sizes = [8, 1], strides = [1, 1]} : vector<8x12xi32> to vector<8x1xi32>
    %75 = vector.broadcast %74 : vector<8x1xi32> to vector<8x16xi32>
    %76 = arith.cmpi eq, %2, %75 : vector<8x16xi32>
    %77 = arith.extui %76 : vector<8x16xi1> to vector<8x16xi32>
    %78 = arith.sitofp %77 : vector<8x16xi32> to vector<8x16xf32>
    %79 = arith.truncf %78 : vector<8x16xf32> to vector<8x16xbf16>
    %80 = vector.extract_strided_slice %0 {offsets = [0, 11], sizes = [8, 1], strides = [1, 1]} : vector<8x12xi32> to vector<8x1xi32>
    %81 = vector.broadcast %80 : vector<8x1xi32> to vector<8x16xi32>
    %82 = arith.cmpi eq, %2, %81 : vector<8x16xi32>
    %83 = arith.extui %82 : vector<8x16xi1> to vector<8x16xi32>
    %84 = arith.sitofp %83 : vector<8x16xi32> to vector<8x16xf32>
    %85 = arith.truncf %84 : vector<8x16xf32> to vector<8x16xbf16>
    %86 = tpu.concatenate %19, %25, %31, %37, %43, %49, %55, %61, %67, %73, %79, %85 in 0 : vector<8x16xbf16>, vector<8x16xbf16>, vector<8x16xbf16>, vector<8x16xbf16>, vector<8x16xbf16>, vector<8x16xbf16>, vector<8x16xbf16>, vector<8x16xbf16>, vector<8x16xbf16>, vector<8x16xbf16>, vector<8x16xbf16>, vector<8x16xbf16> -> vector<96x16xbf16>
    %c0_4 = arith.constant 0 : index
    %c0_5 = arith.constant 0 : index
    %87 = vector.load %arg3[%c0_4, %c0_5] : memref<272x128xbf16, #tpu.memory_space<vmem>>, vector<16x128xbf16>
    %cst = arith.constant dense<0.000000e+00> : vector<96x128xf32>
    %88 = tpu.matmul %86, %87, %cst {dimension_numbers = #tpu.dot_dimension_numbers<[1], [0], [0], [1], [0, 0, 1, 1], [], []>} : vector<96x16xbf16>, vector<16x128xbf16>, vector<96x128xf32> -> vector<96x128xf32>
    %c0_6 = arith.constant 0 : index
    %c0_7 = arith.constant 0 : index
    %89 = vector.load %arg4[%c0_6, %c0_7] : memref<80x128xf32, #tpu.memory_space<vmem>>, vector<1x128xf32>
    %90 = vector.broadcast %89 : vector<1x128xf32> to vector<96x128xf32>
    %91 = arith.addf %88, %90 : vector<96x128xf32>
    %92 = vector.extract_strided_slice %0 {offsets = [0, 2], sizes = [8, 1], strides = [1, 1]} : vector<8x12xi32> to vector<8x1xi32>
    %93 = vector.broadcast %92 : vector<8x1xi32> to vector<8x16xi32>
    %94 = arith.cmpi eq, %2, %93 : vector<8x16xi32>
    %95 = arith.extui %94 : vector<8x16xi1> to vector<8x16xi32>
    %96 = arith.sitofp %95 : vector<8x16xi32> to vector<8x16xf32>
    %97 = arith.truncf %96 : vector<8x16xf32> to vector<8x16xbf16>
    %98 = vector.extract_strided_slice %0 {offsets = [0, 3], sizes = [8, 1], strides = [1, 1]} : vector<8x12xi32> to vector<8x1xi32>
    %99 = vector.broadcast %98 : vector<8x1xi32> to vector<8x16xi32>
    %100 = arith.cmpi eq, %2, %99 : vector<8x16xi32>
    %101 = arith.extui %100 : vector<8x16xi1> to vector<8x16xi32>
    %102 = arith.sitofp %101 : vector<8x16xi32> to vector<8x16xf32>
    %103 = arith.truncf %102 : vector<8x16xf32> to vector<8x16xbf16>
    %104 = vector.extract_strided_slice %0 {offsets = [0, 4], sizes = [8, 1], strides = [1, 1]} : vector<8x12xi32> to vector<8x1xi32>
    %105 = vector.broadcast %104 : vector<8x1xi32> to vector<8x16xi32>
    %106 = arith.cmpi eq, %2, %105 : vector<8x16xi32>
    %107 = arith.extui %106 : vector<8x16xi1> to vector<8x16xi32>
    %108 = arith.sitofp %107 : vector<8x16xi32> to vector<8x16xf32>
    %109 = arith.truncf %108 : vector<8x16xf32> to vector<8x16xbf16>
    %110 = vector.extract_strided_slice %0 {offsets = [0, 5], sizes = [8, 1], strides = [1, 1]} : vector<8x12xi32> to vector<8x1xi32>
    %111 = vector.broadcast %110 : vector<8x1xi32> to vector<8x16xi32>
    %112 = arith.cmpi eq, %2, %111 : vector<8x16xi32>
    %113 = arith.extui %112 : vector<8x16xi1> to vector<8x16xi32>
    %114 = arith.sitofp %113 : vector<8x16xi32> to vector<8x16xf32>
    %115 = arith.truncf %114 : vector<8x16xf32> to vector<8x16xbf16>
    %116 = vector.extract_strided_slice %0 {offsets = [0, 6], sizes = [8, 1], strides = [1, 1]} : vector<8x12xi32> to vector<8x1xi32>
    %117 = vector.broadcast %116 : vector<8x1xi32> to vector<8x16xi32>
    %118 = arith.cmpi eq, %2, %117 : vector<8x16xi32>
    %119 = arith.extui %118 : vector<8x16xi1> to vector<8x16xi32>
    %120 = arith.sitofp %119 : vector<8x16xi32> to vector<8x16xf32>
    %121 = arith.truncf %120 : vector<8x16xf32> to vector<8x16xbf16>
    %122 = vector.extract_strided_slice %0 {offsets = [0, 7], sizes = [8, 1], strides = [1, 1]} : vector<8x12xi32> to vector<8x1xi32>
    %123 = vector.broadcast %122 : vector<8x1xi32> to vector<8x16xi32>
    %124 = arith.cmpi eq, %2, %123 : vector<8x16xi32>
    %125 = arith.extui %124 : vector<8x16xi1> to vector<8x16xi32>
    %126 = arith.sitofp %125 : vector<8x16xi32> to vector<8x16xf32>
    %127 = arith.truncf %126 : vector<8x16xf32> to vector<8x16xbf16>
    %128 = vector.extract_strided_slice %0 {offsets = [0, 8], sizes = [8, 1], strides = [1, 1]} : vector<8x12xi32> to vector<8x1xi32>
    %129 = vector.broadcast %128 : vector<8x1xi32> to vector<8x16xi32>
    %130 = arith.cmpi eq, %2, %129 : vector<8x16xi32>
    %131 = arith.extui %130 : vector<8x16xi1> to vector<8x16xi32>
    %132 = arith.sitofp %131 : vector<8x16xi32> to vector<8x16xf32>
    %133 = arith.truncf %132 : vector<8x16xf32> to vector<8x16xbf16>
    %134 = vector.extract_strided_slice %0 {offsets = [0, 9], sizes = [8, 1], strides = [1, 1]} : vector<8x12xi32> to vector<8x1xi32>
    %135 = vector.broadcast %134 : vector<8x1xi32> to vector<8x16xi32>
    %136 = arith.cmpi eq, %2, %135 : vector<8x16xi32>
    %137 = arith.extui %136 : vector<8x16xi1> to vector<8x16xi32>
    %138 = arith.sitofp %137 : vector<8x16xi32> to vector<8x16xf32>
    %139 = arith.truncf %138 : vector<8x16xf32> to vector<8x16xbf16>
    %140 = vector.extract_strided_slice %0 {offsets = [0, 11], sizes = [8, 1], strides = [1, 1]} : vector<8x12xi32> to vector<8x1xi32>
    %141 = vector.broadcast %140 : vector<8x1xi32> to vector<8x16xi32>
    %142 = arith.cmpi eq, %2, %141 : vector<8x16xi32>
    %143 = arith.extui %142 : vector<8x16xi1> to vector<8x16xi32>
    %144 = arith.sitofp %143 : vector<8x16xi32> to vector<8x16xf32>
    %145 = arith.truncf %144 : vector<8x16xf32> to vector<8x16xbf16>
    %146 = vector.extract_strided_slice %0 {offsets = [0, 11], sizes = [8, 1], strides = [1, 1]} : vector<8x12xi32> to vector<8x1xi32>
    %147 = vector.broadcast %146 : vector<8x1xi32> to vector<8x16xi32>
    %148 = arith.cmpi eq, %2, %147 : vector<8x16xi32>
    %149 = arith.extui %148 : vector<8x16xi1> to vector<8x16xi32>
    %150 = arith.sitofp %149 : vector<8x16xi32> to vector<8x16xf32>
    %151 = arith.truncf %150 : vector<8x16xf32> to vector<8x16xbf16>
    %152 = tpu.concatenate %97, %103, %109, %115, %121, %127, %133, %139, %145, %151 in 0 : vector<8x16xbf16>, vector<8x16xbf16>, vector<8x16xbf16>, vector<8x16xbf16>, vector<8x16xbf16>, vector<8x16xbf16>, vector<8x16xbf16>, vector<8x16xbf16>, vector<8x16xbf16>, vector<8x16xbf16> -> vector<80x16xbf16>
    %c48 = arith.constant 48 : index
    %c0_8 = arith.constant 0 : index
    %153 = vector.load %arg3[%c48, %c0_8] : memref<272x128xbf16, #tpu.memory_space<vmem>>, vector<16x128xbf16>
    %cst_9 = arith.constant dense<0.000000e+00> : vector<80x128xf32>
    %154 = tpu.matmul %152, %153, %cst_9 {dimension_numbers = #tpu.dot_dimension_numbers<[1], [0], [0], [1], [0, 0, 1, 1], [], []>} : vector<80x16xbf16>, vector<16x128xbf16>, vector<80x128xf32> -> vector<80x128xf32>
    %c8 = arith.constant 8 : index
    %c0_10 = arith.constant 0 : index
    %155 = vector.load %arg4[%c8, %c0_10] : memref<80x128xf32, #tpu.memory_space<vmem>>, vector<1x128xf32>
    %156 = vector.broadcast %155 : vector<1x128xf32> to vector<80x128xf32>
    %157 = arith.addf %154, %156 : vector<80x128xf32>
    %c16_11 = arith.constant 16 : index
    %c0_12 = arith.constant 0 : index
    %158 = vector.load %arg4[%c16_11, %c0_12] : memref<80x128xf32, #tpu.memory_space<vmem>>, vector<1x128xf32>
    %c24 = arith.constant 24 : index
    %c0_13 = arith.constant 0 : index
    %159 = vector.load %arg4[%c24, %c0_13] : memref<80x128xf32, #tpu.memory_space<vmem>>, vector<1x128xf32>
    %c32 = arith.constant 32 : index
    %c0_14 = arith.constant 0 : index
    %160 = vector.load %arg4[%c32, %c0_14] : memref<80x128xf32, #tpu.memory_space<vmem>>, vector<12x64xf32>
    %161 = vector.extract_strided_slice %160 {offsets = [0, 0], sizes = [1, 64], strides = [1, 1]} : vector<12x64xf32> to vector<1x64xf32>
    %162 = vector.shape_cast %161 : vector<1x64xf32> to vector<1x64xf32>
    %163 = vector.broadcast %162 : vector<1x64xf32> to vector<8x64xf32>
    %164 = vector.extract_strided_slice %160 {offsets = [1, 0], sizes = [1, 64], strides = [1, 1]} : vector<12x64xf32> to vector<1x64xf32>
    %165 = vector.shape_cast %164 : vector<1x64xf32> to vector<1x64xf32>
    %166 = vector.broadcast %165 : vector<1x64xf32> to vector<8x64xf32>
    %167 = vector.extract_strided_slice %160 {offsets = [2, 0], sizes = [1, 64], strides = [1, 1]} : vector<12x64xf32> to vector<1x64xf32>
    %168 = vector.shape_cast %167 : vector<1x64xf32> to vector<1x64xf32>
    %169 = vector.broadcast %168 : vector<1x64xf32> to vector<8x64xf32>
    %170 = vector.extract_strided_slice %160 {offsets = [3, 0], sizes = [1, 64], strides = [1, 1]} : vector<12x64xf32> to vector<1x64xf32>
    %171 = vector.shape_cast %170 : vector<1x64xf32> to vector<1x64xf32>
    %172 = vector.broadcast %171 : vector<1x64xf32> to vector<8x64xf32>
    %173 = vector.extract_strided_slice %160 {offsets = [4, 0], sizes = [1, 64], strides = [1, 1]} : vector<12x64xf32> to vector<1x64xf32>
    %174 = vector.shape_cast %173 : vector<1x64xf32> to vector<1x64xf32>
    %175 = vector.broadcast %174 : vector<1x64xf32> to vector<8x64xf32>
    %176 = vector.extract_strided_slice %160 {offsets = [5, 0], sizes = [1, 64], strides = [1, 1]} : vector<12x64xf32> to vector<1x64xf32>
    %177 = vector.shape_cast %176 : vector<1x64xf32> to vector<1x64xf32>
    %178 = vector.broadcast %177 : vector<1x64xf32> to vector<8x64xf32>
    %179 = vector.extract_strided_slice %160 {offsets = [6, 0], sizes = [1, 64], strides = [1, 1]} : vector<12x64xf32> to vector<1x64xf32>
    %180 = vector.shape_cast %179 : vector<1x64xf32> to vector<1x64xf32>
    %181 = vector.broadcast %180 : vector<1x64xf32> to vector<8x64xf32>
    %182 = vector.extract_strided_slice %160 {offsets = [7, 0], sizes = [1, 64], strides = [1, 1]} : vector<12x64xf32> to vector<1x64xf32>
    %183 = vector.shape_cast %182 : vector<1x64xf32> to vector<1x64xf32>
    %184 = vector.broadcast %183 : vector<1x64xf32> to vector<8x64xf32>
    %185 = vector.extract_strided_slice %160 {offsets = [8, 0], sizes = [1, 64], strides = [1, 1]} : vector<12x64xf32> to vector<1x64xf32>
    %186 = vector.shape_cast %185 : vector<1x64xf32> to vector<1x64xf32>
    %187 = vector.broadcast %186 : vector<1x64xf32> to vector<8x64xf32>
    %188 = vector.extract_strided_slice %160 {offsets = [9, 0], sizes = [1, 64], strides = [1, 1]} : vector<12x64xf32> to vector<1x64xf32>
    %189 = vector.shape_cast %188 : vector<1x64xf32> to vector<1x64xf32>
    %190 = vector.broadcast %189 : vector<1x64xf32> to vector<8x64xf32>
    %191 = vector.extract_strided_slice %160 {offsets = [10, 0], sizes = [1, 64], strides = [1, 1]} : vector<12x64xf32> to vector<1x64xf32>
    %192 = vector.shape_cast %191 : vector<1x64xf32> to vector<1x64xf32>
    %193 = vector.broadcast %192 : vector<1x64xf32> to vector<8x64xf32>
    %cst_15 = arith.constant 0.000000e+00 : f32
    %194 = vector.broadcast %cst_15 : f32 to vector<8x32xf32>
    %195 = vector.extract_strided_slice %91 {offsets = [0, 0], sizes = [8, 128], strides = [1, 1]} : vector<96x128xf32> to vector<8x128xf32>
    %196 = arith.truncf %194 : vector<8x32xf32> to vector<8x32xbf16>
    %cst_16 = arith.constant dense<0.000000e+00> : vector<8x128xf32>
    %197 = tpu.matmul %196, %11, %cst_16 {dimension_numbers = #tpu.dot_dimension_numbers<[1], [0], [0], [1], [0, 0, 1, 1], [], []>} : vector<8x32xbf16>, vector<32x128xbf16>, vector<8x128xf32> -> vector<8x128xf32>
    %198 = arith.addf %195, %197 : vector<8x128xf32>
    %199 = arith.negf %198 : vector<8x128xf32>
    %200 = math.exp %199 : vector<8x128xf32>
    %cst_17 = arith.constant 1.000000e+00 : f32
    %201 = vector.broadcast %cst_17 : f32 to vector<8x128xf32>
    %202 = arith.addf %201, %200 : vector<8x128xf32>
    %203 = arith.divf %201, %202 : vector<8x128xf32>
    %204 = vector.extract_strided_slice %203 {offsets = [0, 0], sizes = [8, 32], strides = [1, 1]} : vector<8x128xf32> to vector<8x32xf32>
    %205 = vector.extract_strided_slice %203 {offsets = [0, 32], sizes = [8, 32], strides = [1, 1]} : vector<8x128xf32> to vector<8x32xf32>
    %206 = vector.extract_strided_slice %198 {offsets = [0, 64], sizes = [8, 32], strides = [1, 1]} : vector<8x128xf32> to vector<8x32xf32>
    %207 = vector.extract_strided_slice %198 {offsets = [0, 96], sizes = [8, 32], strides = [1, 1]} : vector<8x128xf32> to vector<8x32xf32>
    %208 = arith.mulf %204, %207 : vector<8x32xf32>
    %209 = arith.addf %206, %208 : vector<8x32xf32>
    %210 = math.tanh %209 : vector<8x32xf32>
    %cst_18 = arith.constant 1.000000e+00 : f32
    %211 = vector.broadcast %cst_18 : f32 to vector<8x32xf32>
    %212 = arith.subf %211, %205 : vector<8x32xf32>
    %213 = arith.mulf %212, %210 : vector<8x32xf32>
    %214 = arith.mulf %205, %194 : vector<8x32xf32>
    %215 = arith.addf %213, %214 : vector<8x32xf32>
    %216 = arith.truncf %215 : vector<8x32xf32> to vector<8x32xbf16>
    %cst_19 = arith.constant dense<0.000000e+00> : vector<8x64xf32>
    %217 = tpu.matmul %216, %13, %cst_19 {dimension_numbers = #tpu.dot_dimension_numbers<[1], [0], [0], [1], [0, 0, 1, 1], [], []>} : vector<8x32xbf16>, vector<32x64xbf16>, vector<8x64xf32> -> vector<8x64xf32>
    %218 = arith.addf %217, %163 : vector<8x64xf32>
    %219 = vector.extract_strided_slice %218 {offsets = [0, 0], sizes = [8, 32], strides = [1, 1]} : vector<8x64xf32> to vector<8x32xf32>
    %220 = arith.negf %219 : vector<8x32xf32>
    %221 = math.exp %220 : vector<8x32xf32>
    %cst_20 = arith.constant 1.000000e+00 : f32
    %222 = vector.broadcast %cst_20 : f32 to vector<8x32xf32>
    %223 = arith.addf %222, %221 : vector<8x32xf32>
    %224 = arith.divf %222, %223 : vector<8x32xf32>
    %225 = vector.extract_strided_slice %218 {offsets = [0, 32], sizes = [8, 32], strides = [1, 1]} : vector<8x64xf32> to vector<8x32xf32>
    %226 = arith.mulf %224, %225 : vector<8x32xf32>
    %227 = vector.extract_strided_slice %91 {offsets = [8, 0], sizes = [8, 128], strides = [1, 1]} : vector<96x128xf32> to vector<8x128xf32>
    %228 = arith.truncf %226 : vector<8x32xf32> to vector<8x32xbf16>
    %cst_21 = arith.constant dense<0.000000e+00> : vector<8x128xf32>
    %229 = tpu.matmul %228, %11, %cst_21 {dimension_numbers = #tpu.dot_dimension_numbers<[1], [0], [0], [1], [0, 0, 1, 1], [], []>} : vector<8x32xbf16>, vector<32x128xbf16>, vector<8x128xf32> -> vector<8x128xf32>
    %230 = arith.addf %227, %229 : vector<8x128xf32>
    %231 = arith.negf %230 : vector<8x128xf32>
    %232 = math.exp %231 : vector<8x128xf32>
    %cst_22 = arith.constant 1.000000e+00 : f32
    %233 = vector.broadcast %cst_22 : f32 to vector<8x128xf32>
    %234 = arith.addf %233, %232 : vector<8x128xf32>
    %235 = arith.divf %233, %234 : vector<8x128xf32>
    %236 = vector.extract_strided_slice %235 {offsets = [0, 0], sizes = [8, 32], strides = [1, 1]} : vector<8x128xf32> to vector<8x32xf32>
    %237 = vector.extract_strided_slice %235 {offsets = [0, 32], sizes = [8, 32], strides = [1, 1]} : vector<8x128xf32> to vector<8x32xf32>
    %238 = vector.extract_strided_slice %230 {offsets = [0, 64], sizes = [8, 32], strides = [1, 1]} : vector<8x128xf32> to vector<8x32xf32>
    %239 = vector.extract_strided_slice %230 {offsets = [0, 96], sizes = [8, 32], strides = [1, 1]} : vector<8x128xf32> to vector<8x32xf32>
    %240 = arith.mulf %236, %239 : vector<8x32xf32>
    %241 = arith.addf %238, %240 : vector<8x32xf32>
    %242 = math.tanh %241 : vector<8x32xf32>
    %cst_23 = arith.constant 1.000000e+00 : f32
    %243 = vector.broadcast %cst_23 : f32 to vector<8x32xf32>
    %244 = arith.subf %243, %237 : vector<8x32xf32>
    %245 = arith.mulf %244, %242 : vector<8x32xf32>
    %246 = arith.mulf %237, %226 : vector<8x32xf32>
    %247 = arith.addf %245, %246 : vector<8x32xf32>
    %248 = arith.truncf %247 : vector<8x32xf32> to vector<8x32xbf16>
    %cst_24 = arith.constant dense<0.000000e+00> : vector<8x64xf32>
    %249 = tpu.matmul %248, %13, %cst_24 {dimension_numbers = #tpu.dot_dimension_numbers<[1], [0], [0], [1], [0, 0, 1, 1], [], []>} : vector<8x32xbf16>, vector<32x64xbf16>, vector<8x64xf32> -> vector<8x64xf32>
    %250 = arith.addf %249, %166 : vector<8x64xf32>
    %251 = vector.extract_strided_slice %250 {offsets = [0, 0], sizes = [8, 32], strides = [1, 1]} : vector<8x64xf32> to vector<8x32xf32>
    %252 = arith.negf %251 : vector<8x32xf32>
    %253 = math.exp %252 : vector<8x32xf32>
    %cst_25 = arith.constant 1.000000e+00 : f32
    %254 = vector.broadcast %cst_25 : f32 to vector<8x32xf32>
    %255 = arith.addf %254, %253 : vector<8x32xf32>
    %256 = arith.divf %254, %255 : vector<8x32xf32>
    %257 = vector.extract_strided_slice %250 {offsets = [0, 32], sizes = [8, 32], strides = [1, 1]} : vector<8x64xf32> to vector<8x32xf32>
    %258 = arith.mulf %256, %257 : vector<8x32xf32>
    %259 = vector.extract_strided_slice %91 {offsets = [16, 0], sizes = [8, 128], strides = [1, 1]} : vector<96x128xf32> to vector<8x128xf32>
    %260 = arith.truncf %258 : vector<8x32xf32> to vector<8x32xbf16>
    %cst_26 = arith.constant dense<0.000000e+00> : vector<8x128xf32>
    %261 = tpu.matmul %260, %11, %cst_26 {dimension_numbers = #tpu.dot_dimension_numbers<[1], [0], [0], [1], [0, 0, 1, 1], [], []>} : vector<8x32xbf16>, vector<32x128xbf16>, vector<8x128xf32> -> vector<8x128xf32>
    %262 = arith.addf %259, %261 : vector<8x128xf32>
    %263 = arith.negf %262 : vector<8x128xf32>
    %264 = math.exp %263 : vector<8x128xf32>
    %cst_27 = arith.constant 1.000000e+00 : f32
    %265 = vector.broadcast %cst_27 : f32 to vector<8x128xf32>
    %266 = arith.addf %265, %264 : vector<8x128xf32>
    %267 = arith.divf %265, %266 : vector<8x128xf32>
    %268 = vector.extract_strided_slice %267 {offsets = [0, 0], sizes = [8, 32], strides = [1, 1]} : vector<8x128xf32> to vector<8x32xf32>
    %269 = vector.extract_strided_slice %267 {offsets = [0, 32], sizes = [8, 32], strides = [1, 1]} : vector<8x128xf32> to vector<8x32xf32>
    %270 = vector.extract_strided_slice %262 {offsets = [0, 64], sizes = [8, 32], strides = [1, 1]} : vector<8x128xf32> to vector<8x32xf32>
    %271 = vector.extract_strided_slice %262 {offsets = [0, 96], sizes = [8, 32], strides = [1, 1]} : vector<8x128xf32> to vector<8x32xf32>
    %272 = arith.mulf %268, %271 : vector<8x32xf32>
    %273 = arith.addf %270, %272 : vector<8x32xf32>
    %274 = math.tanh %273 : vector<8x32xf32>
    %cst_28 = arith.constant 1.000000e+00 : f32
    %275 = vector.broadcast %cst_28 : f32 to vector<8x32xf32>
    %276 = arith.subf %275, %269 : vector<8x32xf32>
    %277 = arith.mulf %276, %274 : vector<8x32xf32>
    %278 = arith.mulf %269, %258 : vector<8x32xf32>
    %279 = arith.addf %277, %278 : vector<8x32xf32>
    %280 = arith.truncf %279 : vector<8x32xf32> to vector<8x32xbf16>
    %cst_29 = arith.constant dense<0.000000e+00> : vector<8x64xf32>
    %281 = tpu.matmul %280, %13, %cst_29 {dimension_numbers = #tpu.dot_dimension_numbers<[1], [0], [0], [1], [0, 0, 1, 1], [], []>} : vector<8x32xbf16>, vector<32x64xbf16>, vector<8x64xf32> -> vector<8x64xf32>
    %282 = arith.addf %281, %169 : vector<8x64xf32>
    %283 = vector.extract_strided_slice %282 {offsets = [0, 0], sizes = [8, 32], strides = [1, 1]} : vector<8x64xf32> to vector<8x32xf32>
    %284 = arith.negf %283 : vector<8x32xf32>
    %285 = math.exp %284 : vector<8x32xf32>
    %cst_30 = arith.constant 1.000000e+00 : f32
    %286 = vector.broadcast %cst_30 : f32 to vector<8x32xf32>
    %287 = arith.addf %286, %285 : vector<8x32xf32>
    %288 = arith.divf %286, %287 : vector<8x32xf32>
    %289 = vector.extract_strided_slice %282 {offsets = [0, 32], sizes = [8, 32], strides = [1, 1]} : vector<8x64xf32> to vector<8x32xf32>
    %290 = arith.mulf %288, %289 : vector<8x32xf32>
    %291 = vector.extract_strided_slice %91 {offsets = [24, 0], sizes = [8, 128], strides = [1, 1]} : vector<96x128xf32> to vector<8x128xf32>
    %292 = arith.truncf %290 : vector<8x32xf32> to vector<8x32xbf16>
    %cst_31 = arith.constant dense<0.000000e+00> : vector<8x128xf32>
    %293 = tpu.matmul %292, %11, %cst_31 {dimension_numbers = #tpu.dot_dimension_numbers<[1], [0], [0], [1], [0, 0, 1, 1], [], []>} : vector<8x32xbf16>, vector<32x128xbf16>, vector<8x128xf32> -> vector<8x128xf32>
    %294 = arith.addf %291, %293 : vector<8x128xf32>
    %295 = arith.negf %294 : vector<8x128xf32>
    %296 = math.exp %295 : vector<8x128xf32>
    %cst_32 = arith.constant 1.000000e+00 : f32
    %297 = vector.broadcast %cst_32 : f32 to vector<8x128xf32>
    %298 = arith.addf %297, %296 : vector<8x128xf32>
    %299 = arith.divf %297, %298 : vector<8x128xf32>
    %300 = vector.extract_strided_slice %299 {offsets = [0, 0], sizes = [8, 32], strides = [1, 1]} : vector<8x128xf32> to vector<8x32xf32>
    %301 = vector.extract_strided_slice %299 {offsets = [0, 32], sizes = [8, 32], strides = [1, 1]} : vector<8x128xf32> to vector<8x32xf32>
    %302 = vector.extract_strided_slice %294 {offsets = [0, 64], sizes = [8, 32], strides = [1, 1]} : vector<8x128xf32> to vector<8x32xf32>
    %303 = vector.extract_strided_slice %294 {offsets = [0, 96], sizes = [8, 32], strides = [1, 1]} : vector<8x128xf32> to vector<8x32xf32>
    %304 = arith.mulf %300, %303 : vector<8x32xf32>
    %305 = arith.addf %302, %304 : vector<8x32xf32>
    %306 = math.tanh %305 : vector<8x32xf32>
    %cst_33 = arith.constant 1.000000e+00 : f32
    %307 = vector.broadcast %cst_33 : f32 to vector<8x32xf32>
    %308 = arith.subf %307, %301 : vector<8x32xf32>
    %309 = arith.mulf %308, %306 : vector<8x32xf32>
    %310 = arith.mulf %301, %290 : vector<8x32xf32>
    %311 = arith.addf %309, %310 : vector<8x32xf32>
    %312 = arith.truncf %247 : vector<8x32xf32> to vector<8x32xbf16>
    %cst_34 = arith.constant dense<0.000000e+00> : vector<8x64xf32>
    %313 = tpu.matmul %312, %13, %cst_34 {dimension_numbers = #tpu.dot_dimension_numbers<[1], [0], [0], [1], [0, 0, 1, 1], [], []>} : vector<8x32xbf16>, vector<32x64xbf16>, vector<8x64xf32> -> vector<8x64xf32>
    %314 = arith.addf %313, %166 : vector<8x64xf32>
    %315 = vector.extract_strided_slice %314 {offsets = [0, 0], sizes = [8, 32], strides = [1, 1]} : vector<8x64xf32> to vector<8x32xf32>
    %316 = arith.negf %315 : vector<8x32xf32>
    %317 = math.exp %316 : vector<8x32xf32>
    %cst_35 = arith.constant 1.000000e+00 : f32
    %318 = vector.broadcast %cst_35 : f32 to vector<8x32xf32>
    %319 = arith.addf %318, %317 : vector<8x32xf32>
    %320 = arith.divf %318, %319 : vector<8x32xf32>
    %321 = vector.extract_strided_slice %314 {offsets = [0, 32], sizes = [8, 32], strides = [1, 1]} : vector<8x64xf32> to vector<8x32xf32>
    %322 = arith.mulf %320, %321 : vector<8x32xf32>
    %323 = vector.extract_strided_slice %91 {offsets = [32, 0], sizes = [8, 128], strides = [1, 1]} : vector<96x128xf32> to vector<8x128xf32>
    %324 = arith.truncf %322 : vector<8x32xf32> to vector<8x32xbf16>
    %cst_36 = arith.constant dense<0.000000e+00> : vector<8x128xf32>
    %325 = tpu.matmul %324, %11, %cst_36 {dimension_numbers = #tpu.dot_dimension_numbers<[1], [0], [0], [1], [0, 0, 1, 1], [], []>} : vector<8x32xbf16>, vector<32x128xbf16>, vector<8x128xf32> -> vector<8x128xf32>
    %326 = arith.addf %323, %325 : vector<8x128xf32>
    %327 = arith.negf %326 : vector<8x128xf32>
    %328 = math.exp %327 : vector<8x128xf32>
    %cst_37 = arith.constant 1.000000e+00 : f32
    %329 = vector.broadcast %cst_37 : f32 to vector<8x128xf32>
    %330 = arith.addf %329, %328 : vector<8x128xf32>
    %331 = arith.divf %329, %330 : vector<8x128xf32>
    %332 = vector.extract_strided_slice %331 {offsets = [0, 0], sizes = [8, 32], strides = [1, 1]} : vector<8x128xf32> to vector<8x32xf32>
    %333 = vector.extract_strided_slice %331 {offsets = [0, 32], sizes = [8, 32], strides = [1, 1]} : vector<8x128xf32> to vector<8x32xf32>
    %334 = vector.extract_strided_slice %326 {offsets = [0, 64], sizes = [8, 32], strides = [1, 1]} : vector<8x128xf32> to vector<8x32xf32>
    %335 = vector.extract_strided_slice %326 {offsets = [0, 96], sizes = [8, 32], strides = [1, 1]} : vector<8x128xf32> to vector<8x32xf32>
    %336 = arith.mulf %332, %335 : vector<8x32xf32>
    %337 = arith.addf %334, %336 : vector<8x32xf32>
    %338 = math.tanh %337 : vector<8x32xf32>
    %cst_38 = arith.constant 1.000000e+00 : f32
    %339 = vector.broadcast %cst_38 : f32 to vector<8x32xf32>
    %340 = arith.subf %339, %333 : vector<8x32xf32>
    %341 = arith.mulf %340, %338 : vector<8x32xf32>
    %342 = arith.mulf %333, %322 : vector<8x32xf32>
    %343 = arith.addf %341, %342 : vector<8x32xf32>
    %344 = arith.truncf %311 : vector<8x32xf32> to vector<8x32xbf16>
    %cst_39 = arith.constant dense<0.000000e+00> : vector<8x64xf32>
    %345 = tpu.matmul %344, %13, %cst_39 {dimension_numbers = #tpu.dot_dimension_numbers<[1], [0], [0], [1], [0, 0, 1, 1], [], []>} : vector<8x32xbf16>, vector<32x64xbf16>, vector<8x64xf32> -> vector<8x64xf32>
    %346 = arith.addf %345, %172 : vector<8x64xf32>
    %347 = vector.extract_strided_slice %346 {offsets = [0, 0], sizes = [8, 32], strides = [1, 1]} : vector<8x64xf32> to vector<8x32xf32>
    %348 = arith.negf %347 : vector<8x32xf32>
    %349 = math.exp %348 : vector<8x32xf32>
    %cst_40 = arith.constant 1.000000e+00 : f32
    %350 = vector.broadcast %cst_40 : f32 to vector<8x32xf32>
    %351 = arith.addf %350, %349 : vector<8x32xf32>
    %352 = arith.divf %350, %351 : vector<8x32xf32>
    %353 = vector.extract_strided_slice %346 {offsets = [0, 32], sizes = [8, 32], strides = [1, 1]} : vector<8x64xf32> to vector<8x32xf32>
    %354 = arith.mulf %352, %353 : vector<8x32xf32>
    %355 = vector.extract_strided_slice %91 {offsets = [40, 0], sizes = [8, 128], strides = [1, 1]} : vector<96x128xf32> to vector<8x128xf32>
    %356 = arith.truncf %354 : vector<8x32xf32> to vector<8x32xbf16>
    %cst_41 = arith.constant dense<0.000000e+00> : vector<8x128xf32>
    %357 = tpu.matmul %356, %11, %cst_41 {dimension_numbers = #tpu.dot_dimension_numbers<[1], [0], [0], [1], [0, 0, 1, 1], [], []>} : vector<8x32xbf16>, vector<32x128xbf16>, vector<8x128xf32> -> vector<8x128xf32>
    %358 = arith.addf %355, %357 : vector<8x128xf32>
    %359 = arith.negf %358 : vector<8x128xf32>
    %360 = math.exp %359 : vector<8x128xf32>
    %cst_42 = arith.constant 1.000000e+00 : f32
    %361 = vector.broadcast %cst_42 : f32 to vector<8x128xf32>
    %362 = arith.addf %361, %360 : vector<8x128xf32>
    %363 = arith.divf %361, %362 : vector<8x128xf32>
    %364 = vector.extract_strided_slice %363 {offsets = [0, 0], sizes = [8, 32], strides = [1, 1]} : vector<8x128xf32> to vector<8x32xf32>
    %365 = vector.extract_strided_slice %363 {offsets = [0, 32], sizes = [8, 32], strides = [1, 1]} : vector<8x128xf32> to vector<8x32xf32>
    %366 = vector.extract_strided_slice %358 {offsets = [0, 64], sizes = [8, 32], strides = [1, 1]} : vector<8x128xf32> to vector<8x32xf32>
    %367 = vector.extract_strided_slice %358 {offsets = [0, 96], sizes = [8, 32], strides = [1, 1]} : vector<8x128xf32> to vector<8x32xf32>
    %368 = arith.mulf %364, %367 : vector<8x32xf32>
    %369 = arith.addf %366, %368 : vector<8x32xf32>
    %370 = math.tanh %369 : vector<8x32xf32>
    %cst_43 = arith.constant 1.000000e+00 : f32
    %371 = vector.broadcast %cst_43 : f32 to vector<8x32xf32>
    %372 = arith.subf %371, %365 : vector<8x32xf32>
    %373 = arith.mulf %372, %370 : vector<8x32xf32>
    %374 = arith.mulf %365, %354 : vector<8x32xf32>
    %375 = arith.addf %373, %374 : vector<8x32xf32>
    %376 = arith.truncf %343 : vector<8x32xf32> to vector<8x32xbf16>
    %cst_44 = arith.constant dense<0.000000e+00> : vector<8x64xf32>
    %377 = tpu.matmul %376, %13, %cst_44 {dimension_numbers = #tpu.dot_dimension_numbers<[1], [0], [0], [1], [0, 0, 1, 1], [], []>} : vector<8x32xbf16>, vector<32x64xbf16>, vector<8x64xf32> -> vector<8x64xf32>
    %378 = arith.addf %377, %175 : vector<8x64xf32>
    %379 = vector.extract_strided_slice %378 {offsets = [0, 0], sizes = [8, 32], strides = [1, 1]} : vector<8x64xf32> to vector<8x32xf32>
    %380 = arith.negf %379 : vector<8x32xf32>
    %381 = math.exp %380 : vector<8x32xf32>
    %cst_45 = arith.constant 1.000000e+00 : f32
    %382 = vector.broadcast %cst_45 : f32 to vector<8x32xf32>
    %383 = arith.addf %382, %381 : vector<8x32xf32>
    %384 = arith.divf %382, %383 : vector<8x32xf32>
    %385 = vector.extract_strided_slice %378 {offsets = [0, 32], sizes = [8, 32], strides = [1, 1]} : vector<8x64xf32> to vector<8x32xf32>
    %386 = arith.mulf %384, %385 : vector<8x32xf32>
    %387 = arith.truncf %375 : vector<8x32xf32> to vector<8x32xbf16>
    %cst_46 = arith.constant dense<0.000000e+00> : vector<8x64xf32>
    %388 = tpu.matmul %387, %13, %cst_46 {dimension_numbers = #tpu.dot_dimension_numbers<[1], [0], [0], [1], [0, 0, 1, 1], [], []>} : vector<8x32xbf16>, vector<32x64xbf16>, vector<8x64xf32> -> vector<8x64xf32>
    %389 = arith.addf %388, %178 : vector<8x64xf32>
    %390 = vector.extract_strided_slice %389 {offsets = [0, 0], sizes = [8, 32], strides = [1, 1]} : vector<8x64xf32> to vector<8x32xf32>
    %391 = arith.negf %390 : vector<8x32xf32>
    %392 = math.exp %391 : vector<8x32xf32>
    %cst_47 = arith.constant 1.000000e+00 : f32
    %393 = vector.broadcast %cst_47 : f32 to vector<8x32xf32>
    %394 = arith.addf %393, %392 : vector<8x32xf32>
    %395 = arith.divf %393, %394 : vector<8x32xf32>
    %396 = vector.extract_strided_slice %389 {offsets = [0, 32], sizes = [8, 32], strides = [1, 1]} : vector<8x64xf32> to vector<8x32xf32>
    %397 = arith.mulf %395, %396 : vector<8x32xf32>
    %398 = arith.addf %386, %397 : vector<8x32xf32>
    %399 = vector.extract_strided_slice %91 {offsets = [48, 0], sizes = [8, 128], strides = [1, 1]} : vector<96x128xf32> to vector<8x128xf32>
    %400 = arith.truncf %398 : vector<8x32xf32> to vector<8x32xbf16>
    %cst_48 = arith.constant dense<0.000000e+00> : vector<8x128xf32>
    %401 = tpu.matmul %400, %11, %cst_48 {dimension_numbers = #tpu.dot_dimension_numbers<[1], [0], [0], [1], [0, 0, 1, 1], [], []>} : vector<8x32xbf16>, vector<32x128xbf16>, vector<8x128xf32> -> vector<8x128xf32>
    %402 = arith.addf %399, %401 : vector<8x128xf32>
    %403 = arith.negf %402 : vector<8x128xf32>
    %404 = math.exp %403 : vector<8x128xf32>
    %cst_49 = arith.constant 1.000000e+00 : f32
    %405 = vector.broadcast %cst_49 : f32 to vector<8x128xf32>
    %406 = arith.addf %405, %404 : vector<8x128xf32>
    %407 = arith.divf %405, %406 : vector<8x128xf32>
    %408 = vector.extract_strided_slice %407 {offsets = [0, 0], sizes = [8, 32], strides = [1, 1]} : vector<8x128xf32> to vector<8x32xf32>
    %409 = vector.extract_strided_slice %407 {offsets = [0, 32], sizes = [8, 32], strides = [1, 1]} : vector<8x128xf32> to vector<8x32xf32>
    %410 = vector.extract_strided_slice %402 {offsets = [0, 64], sizes = [8, 32], strides = [1, 1]} : vector<8x128xf32> to vector<8x32xf32>
    %411 = vector.extract_strided_slice %402 {offsets = [0, 96], sizes = [8, 32], strides = [1, 1]} : vector<8x128xf32> to vector<8x32xf32>
    %412 = arith.mulf %408, %411 : vector<8x32xf32>
    %413 = arith.addf %410, %412 : vector<8x32xf32>
    %414 = math.tanh %413 : vector<8x32xf32>
    %cst_50 = arith.constant 1.000000e+00 : f32
    %415 = vector.broadcast %cst_50 : f32 to vector<8x32xf32>
    %416 = arith.subf %415, %409 : vector<8x32xf32>
    %417 = arith.mulf %416, %414 : vector<8x32xf32>
    %418 = arith.mulf %409, %398 : vector<8x32xf32>
    %419 = arith.addf %417, %418 : vector<8x32xf32>
    %420 = arith.truncf %247 : vector<8x32xf32> to vector<8x32xbf16>
    %cst_51 = arith.constant dense<0.000000e+00> : vector<8x64xf32>
    %421 = tpu.matmul %420, %13, %cst_51 {dimension_numbers = #tpu.dot_dimension_numbers<[1], [0], [0], [1], [0, 0, 1, 1], [], []>} : vector<8x32xbf16>, vector<32x64xbf16>, vector<8x64xf32> -> vector<8x64xf32>
    %422 = arith.addf %421, %166 : vector<8x64xf32>
    %423 = vector.extract_strided_slice %422 {offsets = [0, 0], sizes = [8, 32], strides = [1, 1]} : vector<8x64xf32> to vector<8x32xf32>
    %424 = arith.negf %423 : vector<8x32xf32>
    %425 = math.exp %424 : vector<8x32xf32>
    %cst_52 = arith.constant 1.000000e+00 : f32
    %426 = vector.broadcast %cst_52 : f32 to vector<8x32xf32>
    %427 = arith.addf %426, %425 : vector<8x32xf32>
    %428 = arith.divf %426, %427 : vector<8x32xf32>
    %429 = vector.extract_strided_slice %422 {offsets = [0, 32], sizes = [8, 32], strides = [1, 1]} : vector<8x64xf32> to vector<8x32xf32>
    %430 = arith.mulf %428, %429 : vector<8x32xf32>
    %431 = vector.extract_strided_slice %91 {offsets = [56, 0], sizes = [8, 128], strides = [1, 1]} : vector<96x128xf32> to vector<8x128xf32>
    %432 = arith.truncf %430 : vector<8x32xf32> to vector<8x32xbf16>
    %cst_53 = arith.constant dense<0.000000e+00> : vector<8x128xf32>
    %433 = tpu.matmul %432, %11, %cst_53 {dimension_numbers = #tpu.dot_dimension_numbers<[1], [0], [0], [1], [0, 0, 1, 1], [], []>} : vector<8x32xbf16>, vector<32x128xbf16>, vector<8x128xf32> -> vector<8x128xf32>
    %434 = arith.addf %431, %433 : vector<8x128xf32>
    %435 = arith.negf %434 : vector<8x128xf32>
    %436 = math.exp %435 : vector<8x128xf32>
    %cst_54 = arith.constant 1.000000e+00 : f32
    %437 = vector.broadcast %cst_54 : f32 to vector<8x128xf32>
    %438 = arith.addf %437, %436 : vector<8x128xf32>
    %439 = arith.divf %437, %438 : vector<8x128xf32>
    %440 = vector.extract_strided_slice %439 {offsets = [0, 0], sizes = [8, 32], strides = [1, 1]} : vector<8x128xf32> to vector<8x32xf32>
    %441 = vector.extract_strided_slice %439 {offsets = [0, 32], sizes = [8, 32], strides = [1, 1]} : vector<8x128xf32> to vector<8x32xf32>
    %442 = vector.extract_strided_slice %434 {offsets = [0, 64], sizes = [8, 32], strides = [1, 1]} : vector<8x128xf32> to vector<8x32xf32>
    %443 = vector.extract_strided_slice %434 {offsets = [0, 96], sizes = [8, 32], strides = [1, 1]} : vector<8x128xf32> to vector<8x32xf32>
    %444 = arith.mulf %440, %443 : vector<8x32xf32>
    %445 = arith.addf %442, %444 : vector<8x32xf32>
    %446 = math.tanh %445 : vector<8x32xf32>
    %cst_55 = arith.constant 1.000000e+00 : f32
    %447 = vector.broadcast %cst_55 : f32 to vector<8x32xf32>
    %448 = arith.subf %447, %441 : vector<8x32xf32>
    %449 = arith.mulf %448, %446 : vector<8x32xf32>
    %450 = arith.mulf %441, %430 : vector<8x32xf32>
    %451 = arith.addf %449, %450 : vector<8x32xf32>
    %452 = arith.truncf %311 : vector<8x32xf32> to vector<8x32xbf16>
    %cst_56 = arith.constant dense<0.000000e+00> : vector<8x64xf32>
    %453 = tpu.matmul %452, %13, %cst_56 {dimension_numbers = #tpu.dot_dimension_numbers<[1], [0], [0], [1], [0, 0, 1, 1], [], []>} : vector<8x32xbf16>, vector<32x64xbf16>, vector<8x64xf32> -> vector<8x64xf32>
    %454 = arith.addf %453, %172 : vector<8x64xf32>
    %455 = vector.extract_strided_slice %454 {offsets = [0, 0], sizes = [8, 32], strides = [1, 1]} : vector<8x64xf32> to vector<8x32xf32>
    %456 = arith.negf %455 : vector<8x32xf32>
    %457 = math.exp %456 : vector<8x32xf32>
    %cst_57 = arith.constant 1.000000e+00 : f32
    %458 = vector.broadcast %cst_57 : f32 to vector<8x32xf32>
    %459 = arith.addf %458, %457 : vector<8x32xf32>
    %460 = arith.divf %458, %459 : vector<8x32xf32>
    %461 = vector.extract_strided_slice %454 {offsets = [0, 32], sizes = [8, 32], strides = [1, 1]} : vector<8x64xf32> to vector<8x32xf32>
    %462 = arith.mulf %460, %461 : vector<8x32xf32>
    %463 = vector.extract_strided_slice %91 {offsets = [64, 0], sizes = [8, 128], strides = [1, 1]} : vector<96x128xf32> to vector<8x128xf32>
    %464 = arith.truncf %462 : vector<8x32xf32> to vector<8x32xbf16>
    %cst_58 = arith.constant dense<0.000000e+00> : vector<8x128xf32>
    %465 = tpu.matmul %464, %11, %cst_58 {dimension_numbers = #tpu.dot_dimension_numbers<[1], [0], [0], [1], [0, 0, 1, 1], [], []>} : vector<8x32xbf16>, vector<32x128xbf16>, vector<8x128xf32> -> vector<8x128xf32>
    %466 = arith.addf %463, %465 : vector<8x128xf32>
    %467 = arith.negf %466 : vector<8x128xf32>
    %468 = math.exp %467 : vector<8x128xf32>
    %cst_59 = arith.constant 1.000000e+00 : f32
    %469 = vector.broadcast %cst_59 : f32 to vector<8x128xf32>
    %470 = arith.addf %469, %468 : vector<8x128xf32>
    %471 = arith.divf %469, %470 : vector<8x128xf32>
    %472 = vector.extract_strided_slice %471 {offsets = [0, 0], sizes = [8, 32], strides = [1, 1]} : vector<8x128xf32> to vector<8x32xf32>
    %473 = vector.extract_strided_slice %471 {offsets = [0, 32], sizes = [8, 32], strides = [1, 1]} : vector<8x128xf32> to vector<8x32xf32>
    %474 = vector.extract_strided_slice %466 {offsets = [0, 64], sizes = [8, 32], strides = [1, 1]} : vector<8x128xf32> to vector<8x32xf32>
    %475 = vector.extract_strided_slice %466 {offsets = [0, 96], sizes = [8, 32], strides = [1, 1]} : vector<8x128xf32> to vector<8x32xf32>
    %476 = arith.mulf %472, %475 : vector<8x32xf32>
    %477 = arith.addf %474, %476 : vector<8x32xf32>
    %478 = math.tanh %477 : vector<8x32xf32>
    %cst_60 = arith.constant 1.000000e+00 : f32
    %479 = vector.broadcast %cst_60 : f32 to vector<8x32xf32>
    %480 = arith.subf %479, %473 : vector<8x32xf32>
    %481 = arith.mulf %480, %478 : vector<8x32xf32>
    %482 = arith.mulf %473, %462 : vector<8x32xf32>
    %483 = arith.addf %481, %482 : vector<8x32xf32>
    %484 = arith.truncf %419 : vector<8x32xf32> to vector<8x32xbf16>
    %cst_61 = arith.constant dense<0.000000e+00> : vector<8x64xf32>
    %485 = tpu.matmul %484, %13, %cst_61 {dimension_numbers = #tpu.dot_dimension_numbers<[1], [0], [0], [1], [0, 0, 1, 1], [], []>} : vector<8x32xbf16>, vector<32x64xbf16>, vector<8x64xf32> -> vector<8x64xf32>
    %486 = arith.addf %485, %181 : vector<8x64xf32>
    %487 = vector.extract_strided_slice %486 {offsets = [0, 0], sizes = [8, 32], strides = [1, 1]} : vector<8x64xf32> to vector<8x32xf32>
    %488 = arith.negf %487 : vector<8x32xf32>
    %489 = math.exp %488 : vector<8x32xf32>
    %cst_62 = arith.constant 1.000000e+00 : f32
    %490 = vector.broadcast %cst_62 : f32 to vector<8x32xf32>
    %491 = arith.addf %490, %489 : vector<8x32xf32>
    %492 = arith.divf %490, %491 : vector<8x32xf32>
    %493 = vector.extract_strided_slice %486 {offsets = [0, 32], sizes = [8, 32], strides = [1, 1]} : vector<8x64xf32> to vector<8x32xf32>
    %494 = arith.mulf %492, %493 : vector<8x32xf32>
    %495 = vector.extract_strided_slice %91 {offsets = [72, 0], sizes = [8, 128], strides = [1, 1]} : vector<96x128xf32> to vector<8x128xf32>
    %496 = arith.truncf %494 : vector<8x32xf32> to vector<8x32xbf16>
    %cst_63 = arith.constant dense<0.000000e+00> : vector<8x128xf32>
    %497 = tpu.matmul %496, %11, %cst_63 {dimension_numbers = #tpu.dot_dimension_numbers<[1], [0], [0], [1], [0, 0, 1, 1], [], []>} : vector<8x32xbf16>, vector<32x128xbf16>, vector<8x128xf32> -> vector<8x128xf32>
    %498 = arith.addf %495, %497 : vector<8x128xf32>
    %499 = arith.negf %498 : vector<8x128xf32>
    %500 = math.exp %499 : vector<8x128xf32>
    %cst_64 = arith.constant 1.000000e+00 : f32
    %501 = vector.broadcast %cst_64 : f32 to vector<8x128xf32>
    %502 = arith.addf %501, %500 : vector<8x128xf32>
    %503 = arith.divf %501, %502 : vector<8x128xf32>
    %504 = vector.extract_strided_slice %503 {offsets = [0, 0], sizes = [8, 32], strides = [1, 1]} : vector<8x128xf32> to vector<8x32xf32>
    %505 = vector.extract_strided_slice %503 {offsets = [0, 32], sizes = [8, 32], strides = [1, 1]} : vector<8x128xf32> to vector<8x32xf32>
    %506 = vector.extract_strided_slice %498 {offsets = [0, 64], sizes = [8, 32], strides = [1, 1]} : vector<8x128xf32> to vector<8x32xf32>
    %507 = vector.extract_strided_slice %498 {offsets = [0, 96], sizes = [8, 32], strides = [1, 1]} : vector<8x128xf32> to vector<8x32xf32>
    %508 = arith.mulf %504, %507 : vector<8x32xf32>
    %509 = arith.addf %506, %508 : vector<8x32xf32>
    %510 = math.tanh %509 : vector<8x32xf32>
    %cst_65 = arith.constant 1.000000e+00 : f32
    %511 = vector.broadcast %cst_65 : f32 to vector<8x32xf32>
    %512 = arith.subf %511, %505 : vector<8x32xf32>
    %513 = arith.mulf %512, %510 : vector<8x32xf32>
    %514 = arith.mulf %505, %494 : vector<8x32xf32>
    %515 = arith.addf %513, %514 : vector<8x32xf32>
    %516 = arith.truncf %451 : vector<8x32xf32> to vector<8x32xbf16>
    %cst_66 = arith.constant dense<0.000000e+00> : vector<8x64xf32>
    %517 = tpu.matmul %516, %13, %cst_66 {dimension_numbers = #tpu.dot_dimension_numbers<[1], [0], [0], [1], [0, 0, 1, 1], [], []>} : vector<8x32xbf16>, vector<32x64xbf16>, vector<8x64xf32> -> vector<8x64xf32>
    %518 = arith.addf %517, %184 : vector<8x64xf32>
    %519 = vector.extract_strided_slice %518 {offsets = [0, 0], sizes = [8, 32], strides = [1, 1]} : vector<8x64xf32> to vector<8x32xf32>
    %520 = arith.negf %519 : vector<8x32xf32>
    %521 = math.exp %520 : vector<8x32xf32>
    %cst_67 = arith.constant 1.000000e+00 : f32
    %522 = vector.broadcast %cst_67 : f32 to vector<8x32xf32>
    %523 = arith.addf %522, %521 : vector<8x32xf32>
    %524 = arith.divf %522, %523 : vector<8x32xf32>
    %525 = vector.extract_strided_slice %518 {offsets = [0, 32], sizes = [8, 32], strides = [1, 1]} : vector<8x64xf32> to vector<8x32xf32>
    %526 = arith.mulf %524, %525 : vector<8x32xf32>
    %527 = arith.truncf %483 : vector<8x32xf32> to vector<8x32xbf16>
    %cst_68 = arith.constant dense<0.000000e+00> : vector<8x64xf32>
    %528 = tpu.matmul %527, %13, %cst_68 {dimension_numbers = #tpu.dot_dimension_numbers<[1], [0], [0], [1], [0, 0, 1, 1], [], []>} : vector<8x32xbf16>, vector<32x64xbf16>, vector<8x64xf32> -> vector<8x64xf32>
    %529 = arith.addf %528, %187 : vector<8x64xf32>
    %530 = vector.extract_strided_slice %529 {offsets = [0, 0], sizes = [8, 32], strides = [1, 1]} : vector<8x64xf32> to vector<8x32xf32>
    %531 = arith.negf %530 : vector<8x32xf32>
    %532 = math.exp %531 : vector<8x32xf32>
    %cst_69 = arith.constant 1.000000e+00 : f32
    %533 = vector.broadcast %cst_69 : f32 to vector<8x32xf32>
    %534 = arith.addf %533, %532 : vector<8x32xf32>
    %535 = arith.divf %533, %534 : vector<8x32xf32>
    %536 = vector.extract_strided_slice %529 {offsets = [0, 32], sizes = [8, 32], strides = [1, 1]} : vector<8x64xf32> to vector<8x32xf32>
    %537 = arith.mulf %535, %536 : vector<8x32xf32>
    %538 = arith.addf %526, %537 : vector<8x32xf32>
    %539 = arith.truncf %515 : vector<8x32xf32> to vector<8x32xbf16>
    %cst_70 = arith.constant dense<0.000000e+00> : vector<8x64xf32>
    %540 = tpu.matmul %539, %13, %cst_70 {dimension_numbers = #tpu.dot_dimension_numbers<[1], [0], [0], [1], [0, 0, 1, 1], [], []>} : vector<8x32xbf16>, vector<32x64xbf16>, vector<8x64xf32> -> vector<8x64xf32>
    %541 = arith.addf %540, %190 : vector<8x64xf32>
    %542 = vector.extract_strided_slice %541 {offsets = [0, 0], sizes = [8, 32], strides = [1, 1]} : vector<8x64xf32> to vector<8x32xf32>
    %543 = arith.negf %542 : vector<8x32xf32>
    %544 = math.exp %543 : vector<8x32xf32>
    %cst_71 = arith.constant 1.000000e+00 : f32
    %545 = vector.broadcast %cst_71 : f32 to vector<8x32xf32>
    %546 = arith.addf %545, %544 : vector<8x32xf32>
    %547 = arith.divf %545, %546 : vector<8x32xf32>
    %548 = vector.extract_strided_slice %541 {offsets = [0, 32], sizes = [8, 32], strides = [1, 1]} : vector<8x64xf32> to vector<8x32xf32>
    %549 = arith.mulf %547, %548 : vector<8x32xf32>
    %550 = arith.addf %538, %549 : vector<8x32xf32>
    %551 = vector.extract_strided_slice %91 {offsets = [80, 0], sizes = [8, 128], strides = [1, 1]} : vector<96x128xf32> to vector<8x128xf32>
    %552 = arith.truncf %550 : vector<8x32xf32> to vector<8x32xbf16>
    %cst_72 = arith.constant dense<0.000000e+00> : vector<8x128xf32>
    %553 = tpu.matmul %552, %11, %cst_72 {dimension_numbers = #tpu.dot_dimension_numbers<[1], [0], [0], [1], [0, 0, 1, 1], [], []>} : vector<8x32xbf16>, vector<32x128xbf16>, vector<8x128xf32> -> vector<8x128xf32>
    %554 = arith.addf %551, %553 : vector<8x128xf32>
    %555 = arith.negf %554 : vector<8x128xf32>
    %556 = math.exp %555 : vector<8x128xf32>
    %cst_73 = arith.constant 1.000000e+00 : f32
    %557 = vector.broadcast %cst_73 : f32 to vector<8x128xf32>
    %558 = arith.addf %557, %556 : vector<8x128xf32>
    %559 = arith.divf %557, %558 : vector<8x128xf32>
    %560 = vector.extract_strided_slice %559 {offsets = [0, 0], sizes = [8, 32], strides = [1, 1]} : vector<8x128xf32> to vector<8x32xf32>
    %561 = vector.extract_strided_slice %559 {offsets = [0, 32], sizes = [8, 32], strides = [1, 1]} : vector<8x128xf32> to vector<8x32xf32>
    %562 = vector.extract_strided_slice %554 {offsets = [0, 64], sizes = [8, 32], strides = [1, 1]} : vector<8x128xf32> to vector<8x32xf32>
    %563 = vector.extract_strided_slice %554 {offsets = [0, 96], sizes = [8, 32], strides = [1, 1]} : vector<8x128xf32> to vector<8x32xf32>
    %564 = arith.mulf %560, %563 : vector<8x32xf32>
    %565 = arith.addf %562, %564 : vector<8x32xf32>
    %566 = math.tanh %565 : vector<8x32xf32>
    %cst_74 = arith.constant 1.000000e+00 : f32
    %567 = vector.broadcast %cst_74 : f32 to vector<8x32xf32>
    %568 = arith.subf %567, %561 : vector<8x32xf32>
    %569 = arith.mulf %568, %566 : vector<8x32xf32>
    %570 = arith.mulf %561, %550 : vector<8x32xf32>
    %571 = arith.addf %569, %570 : vector<8x32xf32>
    %572 = arith.truncf %571 : vector<8x32xf32> to vector<8x32xbf16>
    %cst_75 = arith.constant dense<0.000000e+00> : vector<8x64xf32>
    %573 = tpu.matmul %572, %13, %cst_75 {dimension_numbers = #tpu.dot_dimension_numbers<[1], [0], [0], [1], [0, 0, 1, 1], [], []>} : vector<8x32xbf16>, vector<32x64xbf16>, vector<8x64xf32> -> vector<8x64xf32>
    %574 = arith.addf %573, %193 : vector<8x64xf32>
    %575 = vector.extract_strided_slice %574 {offsets = [0, 0], sizes = [8, 32], strides = [1, 1]} : vector<8x64xf32> to vector<8x32xf32>
    %576 = arith.negf %575 : vector<8x32xf32>
    %577 = math.exp %576 : vector<8x32xf32>
    %cst_76 = arith.constant 1.000000e+00 : f32
    %578 = vector.broadcast %cst_76 : f32 to vector<8x32xf32>
    %579 = arith.addf %578, %577 : vector<8x32xf32>
    %580 = arith.divf %578, %579 : vector<8x32xf32>
    %581 = vector.extract_strided_slice %574 {offsets = [0, 32], sizes = [8, 32], strides = [1, 1]} : vector<8x64xf32> to vector<8x32xf32>
    %582 = arith.mulf %580, %581 : vector<8x32xf32>
    %583 = vector.extract_strided_slice %91 {offsets = [88, 0], sizes = [8, 128], strides = [1, 1]} : vector<96x128xf32> to vector<8x128xf32>
    %584 = arith.truncf %582 : vector<8x32xf32> to vector<8x32xbf16>
    %cst_77 = arith.constant dense<0.000000e+00> : vector<8x128xf32>
    %585 = tpu.matmul %584, %11, %cst_77 {dimension_numbers = #tpu.dot_dimension_numbers<[1], [0], [0], [1], [0, 0, 1, 1], [], []>} : vector<8x32xbf16>, vector<32x128xbf16>, vector<8x128xf32> -> vector<8x128xf32>
    %586 = arith.addf %583, %585 : vector<8x128xf32>
    %587 = arith.negf %586 : vector<8x128xf32>
    %588 = math.exp %587 : vector<8x128xf32>
    %cst_78 = arith.constant 1.000000e+00 : f32
    %589 = vector.broadcast %cst_78 : f32 to vector<8x128xf32>
    %590 = arith.addf %589, %588 : vector<8x128xf32>
    %591 = arith.divf %589, %590 : vector<8x128xf32>
    %592 = vector.extract_strided_slice %591 {offsets = [0, 0], sizes = [8, 32], strides = [1, 1]} : vector<8x128xf32> to vector<8x32xf32>
    %593 = vector.extract_strided_slice %591 {offsets = [0, 32], sizes = [8, 32], strides = [1, 1]} : vector<8x128xf32> to vector<8x32xf32>
    %594 = vector.extract_strided_slice %586 {offsets = [0, 64], sizes = [8, 32], strides = [1, 1]} : vector<8x128xf32> to vector<8x32xf32>
    %595 = vector.extract_strided_slice %586 {offsets = [0, 96], sizes = [8, 32], strides = [1, 1]} : vector<8x128xf32> to vector<8x32xf32>
    %596 = arith.mulf %592, %595 : vector<8x32xf32>
    %597 = arith.addf %594, %596 : vector<8x32xf32>
    %598 = math.tanh %597 : vector<8x32xf32>
    %cst_79 = arith.constant 1.000000e+00 : f32
    %599 = vector.broadcast %cst_79 : f32 to vector<8x32xf32>
    %600 = arith.subf %599, %593 : vector<8x32xf32>
    %601 = arith.mulf %600, %598 : vector<8x32xf32>
    %602 = arith.mulf %593, %582 : vector<8x32xf32>
    %603 = arith.addf %601, %602 : vector<8x32xf32>
    %604 = arith.truncf %603 : vector<8x32xf32> to vector<8x32xbf16>
    %c128 = arith.constant 128 : index
    %c0_80 = arith.constant 0 : index
    %605 = vector.load %arg3[%c128, %c0_80] : memref<272x128xbf16, #tpu.memory_space<vmem>>, vector<32x32xbf16>
    %cst_81 = arith.constant dense<0.000000e+00> : vector<8x32xf32>
    %606 = tpu.matmul %604, %605, %cst_81 {dimension_numbers = #tpu.dot_dimension_numbers<[1], [0], [0], [1], [0, 0, 1, 1], [], []>} : vector<8x32xbf16>, vector<32x32xbf16>, vector<8x32xf32> -> vector<8x32xf32>
    %c48_82 = arith.constant 48 : index
    %c0_83 = arith.constant 0 : index
    %607 = vector.load %arg4[%c48_82, %c0_83] : memref<80x128xf32, #tpu.memory_space<vmem>>, vector<1x32xf32>
    %608 = vector.broadcast %607 : vector<1x32xf32> to vector<8x32xf32>
    %609 = arith.addf %606, %608 : vector<8x32xf32>
    %610 = vector.extract_strided_slice %609 {offsets = [0, 0], sizes = [8, 16], strides = [1, 1]} : vector<8x32xf32> to vector<8x16xf32>
    %611 = vector.extract_strided_slice %609 {offsets = [0, 16], sizes = [8, 16], strides = [1, 1]} : vector<8x32xf32> to vector<8x16xf32>
    %c0_84 = arith.constant 0 : index
    %c0_85 = arith.constant 0 : index
    %612 = vector.load %arg2[%c0_84, %c0_85] : memref<8x16xf32, #tpu.memory_space<vmem>>, vector<8x16xf32>
    %cst_86 = arith.constant 0.00999999977 : f32
    %613 = vector.broadcast %cst_86 : f32 to vector<8x16xf32>
    %614 = arith.mulf %613, %612 : vector<8x16xf32>
    %cst_87 = arith.constant 5.000000e-01 : f32
    %615 = vector.broadcast %cst_87 : f32 to vector<8x16xf32>
    %616 = arith.mulf %615, %611 : vector<8x16xf32>
    %617 = math.exp %616 : vector<8x16xf32>
    %618 = arith.mulf %614, %617 : vector<8x16xf32>
    %619 = arith.addf %618, %610 : vector<8x16xf32>
    %620 = arith.truncf %619 : vector<8x16xf32> to vector<8x16xbf16>
    %c160 = arith.constant 160 : index
    %c0_88 = arith.constant 0 : index
    %621 = vector.load %arg3[%c160, %c0_88] : memref<272x128xbf16, #tpu.memory_space<vmem>>, vector<16x32xbf16>
    %cst_89 = arith.constant dense<0.000000e+00> : vector<8x32xf32>
    %622 = tpu.matmul %620, %621, %cst_89 {dimension_numbers = #tpu.dot_dimension_numbers<[1], [0], [0], [1], [0, 0, 1, 1], [], []>} : vector<8x16xbf16>, vector<16x32xbf16>, vector<8x32xf32> -> vector<8x32xf32>
    %c56 = arith.constant 56 : index
    %c0_90 = arith.constant 0 : index
    %623 = vector.load %arg4[%c56, %c0_90] : memref<80x128xf32, #tpu.memory_space<vmem>>, vector<1x32xf32>
    %624 = vector.broadcast %623 : vector<1x32xf32> to vector<8x32xf32>
    %625 = arith.addf %622, %624 : vector<8x32xf32>
    %626 = math.tanh %625 : vector<8x32xf32>
    %627 = arith.truncf %626 : vector<8x32xf32> to vector<8x32xbf16>
    %cst_91 = arith.constant dense<0.000000e+00> : vector<8x128xf32>
    %628 = tpu.matmul %627, %12, %cst_91 {dimension_numbers = #tpu.dot_dimension_numbers<[1], [0], [0], [1], [0, 0, 1, 1], [], []>} : vector<8x32xbf16>, vector<32x128xbf16>, vector<8x128xf32> -> vector<8x128xf32>
    %629 = vector.broadcast %158 : vector<1x128xf32> to vector<8x128xf32>
    %630 = arith.addf %629, %628 : vector<8x128xf32>
    %631 = arith.negf %630 : vector<8x128xf32>
    %632 = math.exp %631 : vector<8x128xf32>
    %cst_92 = arith.constant 1.000000e+00 : f32
    %633 = vector.broadcast %cst_92 : f32 to vector<8x128xf32>
    %634 = arith.addf %633, %632 : vector<8x128xf32>
    %635 = arith.divf %633, %634 : vector<8x128xf32>
    %636 = vector.extract_strided_slice %635 {offsets = [0, 0], sizes = [8, 32], strides = [1, 1]} : vector<8x128xf32> to vector<8x32xf32>
    %637 = vector.extract_strided_slice %635 {offsets = [0, 32], sizes = [8, 32], strides = [1, 1]} : vector<8x128xf32> to vector<8x32xf32>
    %638 = vector.extract_strided_slice %630 {offsets = [0, 64], sizes = [8, 32], strides = [1, 1]} : vector<8x128xf32> to vector<8x32xf32>
    %639 = vector.extract_strided_slice %630 {offsets = [0, 96], sizes = [8, 32], strides = [1, 1]} : vector<8x128xf32> to vector<8x32xf32>
    %640 = arith.mulf %636, %639 : vector<8x32xf32>
    %641 = arith.addf %638, %640 : vector<8x32xf32>
    %642 = math.tanh %641 : vector<8x32xf32>
    %cst_93 = arith.constant 1.000000e+00 : f32
    %643 = vector.broadcast %cst_93 : f32 to vector<8x32xf32>
    %644 = arith.subf %643, %637 : vector<8x32xf32>
    %645 = arith.mulf %644, %642 : vector<8x32xf32>
    %646 = arith.mulf %637, %626 : vector<8x32xf32>
    %647 = arith.addf %645, %646 : vector<8x32xf32>
    %648 = arith.truncf %647 : vector<8x32xf32> to vector<8x32xbf16>
    %cst_94 = arith.constant dense<0.000000e+00> : vector<8x64xf32>
    %649 = tpu.matmul %648, %13, %cst_94 {dimension_numbers = #tpu.dot_dimension_numbers<[1], [0], [0], [1], [0, 0, 1, 1], [], []>} : vector<8x32xbf16>, vector<32x64xbf16>, vector<8x64xf32> -> vector<8x64xf32>
    %650 = arith.addf %649, %163 : vector<8x64xf32>
    %651 = vector.extract_strided_slice %650 {offsets = [0, 0], sizes = [8, 32], strides = [1, 1]} : vector<8x64xf32> to vector<8x32xf32>
    %652 = arith.negf %651 : vector<8x32xf32>
    %653 = math.exp %652 : vector<8x32xf32>
    %cst_95 = arith.constant 1.000000e+00 : f32
    %654 = vector.broadcast %cst_95 : f32 to vector<8x32xf32>
    %655 = arith.addf %654, %653 : vector<8x32xf32>
    %656 = arith.divf %654, %655 : vector<8x32xf32>
    %657 = vector.extract_strided_slice %650 {offsets = [0, 32], sizes = [8, 32], strides = [1, 1]} : vector<8x64xf32> to vector<8x32xf32>
    %658 = arith.mulf %656, %657 : vector<8x32xf32>
    %659 = arith.truncf %658 : vector<8x32xf32> to vector<8x32xbf16>
    %cst_96 = arith.constant dense<0.000000e+00> : vector<8x128xf32>
    %660 = tpu.matmul %659, %12, %cst_96 {dimension_numbers = #tpu.dot_dimension_numbers<[1], [0], [0], [1], [0, 0, 1, 1], [], []>} : vector<8x32xbf16>, vector<32x128xbf16>, vector<8x128xf32> -> vector<8x128xf32>
    %661 = vector.broadcast %159 : vector<1x128xf32> to vector<8x128xf32>
    %662 = arith.addf %661, %660 : vector<8x128xf32>
    %663 = arith.negf %662 : vector<8x128xf32>
    %664 = math.exp %663 : vector<8x128xf32>
    %cst_97 = arith.constant 1.000000e+00 : f32
    %665 = vector.broadcast %cst_97 : f32 to vector<8x128xf32>
    %666 = arith.addf %665, %664 : vector<8x128xf32>
    %667 = arith.divf %665, %666 : vector<8x128xf32>
    %668 = vector.extract_strided_slice %667 {offsets = [0, 0], sizes = [8, 32], strides = [1, 1]} : vector<8x128xf32> to vector<8x32xf32>
    %669 = vector.extract_strided_slice %667 {offsets = [0, 32], sizes = [8, 32], strides = [1, 1]} : vector<8x128xf32> to vector<8x32xf32>
    %670 = vector.extract_strided_slice %662 {offsets = [0, 64], sizes = [8, 32], strides = [1, 1]} : vector<8x128xf32> to vector<8x32xf32>
    %671 = vector.extract_strided_slice %662 {offsets = [0, 96], sizes = [8, 32], strides = [1, 1]} : vector<8x128xf32> to vector<8x32xf32>
    %672 = arith.mulf %668, %671 : vector<8x32xf32>
    %673 = arith.addf %670, %672 : vector<8x32xf32>
    %674 = math.tanh %673 : vector<8x32xf32>
    %cst_98 = arith.constant 1.000000e+00 : f32
    %675 = vector.broadcast %cst_98 : f32 to vector<8x32xf32>
    %676 = arith.subf %675, %669 : vector<8x32xf32>
    %677 = arith.mulf %676, %674 : vector<8x32xf32>
    %678 = arith.mulf %669, %658 : vector<8x32xf32>
    %679 = arith.addf %677, %678 : vector<8x32xf32>
    %680 = vector.extract_strided_slice %157 {offsets = [0, 0], sizes = [8, 128], strides = [1, 1]} : vector<80x128xf32> to vector<8x128xf32>
    %681 = arith.truncf %679 : vector<8x32xf32> to vector<8x32xbf16>
    %cst_99 = arith.constant dense<0.000000e+00> : vector<8x64xf32>
    %682 = tpu.matmul %681, %13, %cst_99 {dimension_numbers = #tpu.dot_dimension_numbers<[1], [0], [0], [1], [0, 0, 1, 1], [], []>} : vector<8x32xbf16>, vector<32x64xbf16>, vector<8x64xf32> -> vector<8x64xf32>
    %683 = arith.addf %682, %166 : vector<8x64xf32>
    %684 = vector.extract_strided_slice %683 {offsets = [0, 0], sizes = [8, 32], strides = [1, 1]} : vector<8x64xf32> to vector<8x32xf32>
    %685 = arith.negf %684 : vector<8x32xf32>
    %686 = math.exp %685 : vector<8x32xf32>
    %cst_100 = arith.constant 1.000000e+00 : f32
    %687 = vector.broadcast %cst_100 : f32 to vector<8x32xf32>
    %688 = arith.addf %687, %686 : vector<8x32xf32>
    %689 = arith.divf %687, %688 : vector<8x32xf32>
    %690 = vector.extract_strided_slice %683 {offsets = [0, 32], sizes = [8, 32], strides = [1, 1]} : vector<8x64xf32> to vector<8x32xf32>
    %691 = arith.mulf %689, %690 : vector<8x32xf32>
    %692 = arith.truncf %691 : vector<8x32xf32> to vector<8x32xbf16>
    %cst_101 = arith.constant dense<0.000000e+00> : vector<8x128xf32>
    %693 = tpu.matmul %692, %12, %cst_101 {dimension_numbers = #tpu.dot_dimension_numbers<[1], [0], [0], [1], [0, 0, 1, 1], [], []>} : vector<8x32xbf16>, vector<32x128xbf16>, vector<8x128xf32> -> vector<8x128xf32>
    %694 = arith.addf %680, %693 : vector<8x128xf32>
    %695 = arith.negf %694 : vector<8x128xf32>
    %696 = math.exp %695 : vector<8x128xf32>
    %cst_102 = arith.constant 1.000000e+00 : f32
    %697 = vector.broadcast %cst_102 : f32 to vector<8x128xf32>
    %698 = arith.addf %697, %696 : vector<8x128xf32>
    %699 = arith.divf %697, %698 : vector<8x128xf32>
    %700 = vector.extract_strided_slice %699 {offsets = [0, 0], sizes = [8, 32], strides = [1, 1]} : vector<8x128xf32> to vector<8x32xf32>
    %701 = vector.extract_strided_slice %699 {offsets = [0, 32], sizes = [8, 32], strides = [1, 1]} : vector<8x128xf32> to vector<8x32xf32>
    %702 = vector.extract_strided_slice %694 {offsets = [0, 64], sizes = [8, 32], strides = [1, 1]} : vector<8x128xf32> to vector<8x32xf32>
    %703 = vector.extract_strided_slice %694 {offsets = [0, 96], sizes = [8, 32], strides = [1, 1]} : vector<8x128xf32> to vector<8x32xf32>
    %704 = arith.mulf %700, %703 : vector<8x32xf32>
    %705 = arith.addf %702, %704 : vector<8x32xf32>
    %706 = math.tanh %705 : vector<8x32xf32>
    %cst_103 = arith.constant 1.000000e+00 : f32
    %707 = vector.broadcast %cst_103 : f32 to vector<8x32xf32>
    %708 = arith.subf %707, %701 : vector<8x32xf32>
    %709 = arith.mulf %708, %706 : vector<8x32xf32>
    %710 = arith.mulf %701, %691 : vector<8x32xf32>
    %711 = arith.addf %709, %710 : vector<8x32xf32>
    %712 = vector.extract_strided_slice %157 {offsets = [8, 0], sizes = [8, 128], strides = [1, 1]} : vector<80x128xf32> to vector<8x128xf32>
    %713 = arith.truncf %711 : vector<8x32xf32> to vector<8x32xbf16>
    %cst_104 = arith.constant dense<0.000000e+00> : vector<8x64xf32>
    %714 = tpu.matmul %713, %13, %cst_104 {dimension_numbers = #tpu.dot_dimension_numbers<[1], [0], [0], [1], [0, 0, 1, 1], [], []>} : vector<8x32xbf16>, vector<32x64xbf16>, vector<8x64xf32> -> vector<8x64xf32>
    %715 = arith.addf %714, %169 : vector<8x64xf32>
    %716 = vector.extract_strided_slice %715 {offsets = [0, 0], sizes = [8, 32], strides = [1, 1]} : vector<8x64xf32> to vector<8x32xf32>
    %717 = arith.negf %716 : vector<8x32xf32>
    %718 = math.exp %717 : vector<8x32xf32>
    %cst_105 = arith.constant 1.000000e+00 : f32
    %719 = vector.broadcast %cst_105 : f32 to vector<8x32xf32>
    %720 = arith.addf %719, %718 : vector<8x32xf32>
    %721 = arith.divf %719, %720 : vector<8x32xf32>
    %722 = vector.extract_strided_slice %715 {offsets = [0, 32], sizes = [8, 32], strides = [1, 1]} : vector<8x64xf32> to vector<8x32xf32>
    %723 = arith.mulf %721, %722 : vector<8x32xf32>
    %724 = arith.truncf %723 : vector<8x32xf32> to vector<8x32xbf16>
    %cst_106 = arith.constant dense<0.000000e+00> : vector<8x128xf32>
    %725 = tpu.matmul %724, %12, %cst_106 {dimension_numbers = #tpu.dot_dimension_numbers<[1], [0], [0], [1], [0, 0, 1, 1], [], []>} : vector<8x32xbf16>, vector<32x128xbf16>, vector<8x128xf32> -> vector<8x128xf32>
    %726 = arith.addf %712, %725 : vector<8x128xf32>
    %727 = arith.negf %726 : vector<8x128xf32>
    %728 = math.exp %727 : vector<8x128xf32>
    %cst_107 = arith.constant 1.000000e+00 : f32
    %729 = vector.broadcast %cst_107 : f32 to vector<8x128xf32>
    %730 = arith.addf %729, %728 : vector<8x128xf32>
    %731 = arith.divf %729, %730 : vector<8x128xf32>
    %732 = vector.extract_strided_slice %731 {offsets = [0, 0], sizes = [8, 32], strides = [1, 1]} : vector<8x128xf32> to vector<8x32xf32>
    %733 = vector.extract_strided_slice %731 {offsets = [0, 32], sizes = [8, 32], strides = [1, 1]} : vector<8x128xf32> to vector<8x32xf32>
    %734 = vector.extract_strided_slice %726 {offsets = [0, 64], sizes = [8, 32], strides = [1, 1]} : vector<8x128xf32> to vector<8x32xf32>
    %735 = vector.extract_strided_slice %726 {offsets = [0, 96], sizes = [8, 32], strides = [1, 1]} : vector<8x128xf32> to vector<8x32xf32>
    %736 = arith.mulf %732, %735 : vector<8x32xf32>
    %737 = arith.addf %734, %736 : vector<8x32xf32>
    %738 = math.tanh %737 : vector<8x32xf32>
    %cst_108 = arith.constant 1.000000e+00 : f32
    %739 = vector.broadcast %cst_108 : f32 to vector<8x32xf32>
    %740 = arith.subf %739, %733 : vector<8x32xf32>
    %741 = arith.mulf %740, %738 : vector<8x32xf32>
    %742 = arith.mulf %733, %723 : vector<8x32xf32>
    %743 = arith.addf %741, %742 : vector<8x32xf32>
    %744 = vector.extract_strided_slice %157 {offsets = [16, 0], sizes = [8, 128], strides = [1, 1]} : vector<80x128xf32> to vector<8x128xf32>
    %745 = arith.truncf %679 : vector<8x32xf32> to vector<8x32xbf16>
    %cst_109 = arith.constant dense<0.000000e+00> : vector<8x64xf32>
    %746 = tpu.matmul %745, %13, %cst_109 {dimension_numbers = #tpu.dot_dimension_numbers<[1], [0], [0], [1], [0, 0, 1, 1], [], []>} : vector<8x32xbf16>, vector<32x64xbf16>, vector<8x64xf32> -> vector<8x64xf32>
    %747 = arith.addf %746, %166 : vector<8x64xf32>
    %748 = vector.extract_strided_slice %747 {offsets = [0, 0], sizes = [8, 32], strides = [1, 1]} : vector<8x64xf32> to vector<8x32xf32>
    %749 = arith.negf %748 : vector<8x32xf32>
    %750 = math.exp %749 : vector<8x32xf32>
    %cst_110 = arith.constant 1.000000e+00 : f32
    %751 = vector.broadcast %cst_110 : f32 to vector<8x32xf32>
    %752 = arith.addf %751, %750 : vector<8x32xf32>
    %753 = arith.divf %751, %752 : vector<8x32xf32>
    %754 = vector.extract_strided_slice %747 {offsets = [0, 32], sizes = [8, 32], strides = [1, 1]} : vector<8x64xf32> to vector<8x32xf32>
    %755 = arith.mulf %753, %754 : vector<8x32xf32>
    %756 = arith.truncf %755 : vector<8x32xf32> to vector<8x32xbf16>
    %cst_111 = arith.constant dense<0.000000e+00> : vector<8x128xf32>
    %757 = tpu.matmul %756, %12, %cst_111 {dimension_numbers = #tpu.dot_dimension_numbers<[1], [0], [0], [1], [0, 0, 1, 1], [], []>} : vector<8x32xbf16>, vector<32x128xbf16>, vector<8x128xf32> -> vector<8x128xf32>
    %758 = arith.addf %744, %757 : vector<8x128xf32>
    %759 = arith.negf %758 : vector<8x128xf32>
    %760 = math.exp %759 : vector<8x128xf32>
    %cst_112 = arith.constant 1.000000e+00 : f32
    %761 = vector.broadcast %cst_112 : f32 to vector<8x128xf32>
    %762 = arith.addf %761, %760 : vector<8x128xf32>
    %763 = arith.divf %761, %762 : vector<8x128xf32>
    %764 = vector.extract_strided_slice %763 {offsets = [0, 0], sizes = [8, 32], strides = [1, 1]} : vector<8x128xf32> to vector<8x32xf32>
    %765 = vector.extract_strided_slice %763 {offsets = [0, 32], sizes = [8, 32], strides = [1, 1]} : vector<8x128xf32> to vector<8x32xf32>
    %766 = vector.extract_strided_slice %758 {offsets = [0, 64], sizes = [8, 32], strides = [1, 1]} : vector<8x128xf32> to vector<8x32xf32>
    %767 = vector.extract_strided_slice %758 {offsets = [0, 96], sizes = [8, 32], strides = [1, 1]} : vector<8x128xf32> to vector<8x32xf32>
    %768 = arith.mulf %764, %767 : vector<8x32xf32>
    %769 = arith.addf %766, %768 : vector<8x32xf32>
    %770 = math.tanh %769 : vector<8x32xf32>
    %cst_113 = arith.constant 1.000000e+00 : f32
    %771 = vector.broadcast %cst_113 : f32 to vector<8x32xf32>
    %772 = arith.subf %771, %765 : vector<8x32xf32>
    %773 = arith.mulf %772, %770 : vector<8x32xf32>
    %774 = arith.mulf %765, %755 : vector<8x32xf32>
    %775 = arith.addf %773, %774 : vector<8x32xf32>
    %776 = vector.extract_strided_slice %157 {offsets = [24, 0], sizes = [8, 128], strides = [1, 1]} : vector<80x128xf32> to vector<8x128xf32>
    %777 = arith.truncf %743 : vector<8x32xf32> to vector<8x32xbf16>
    %cst_114 = arith.constant dense<0.000000e+00> : vector<8x64xf32>
    %778 = tpu.matmul %777, %13, %cst_114 {dimension_numbers = #tpu.dot_dimension_numbers<[1], [0], [0], [1], [0, 0, 1, 1], [], []>} : vector<8x32xbf16>, vector<32x64xbf16>, vector<8x64xf32> -> vector<8x64xf32>
    %779 = arith.addf %778, %172 : vector<8x64xf32>
    %780 = vector.extract_strided_slice %779 {offsets = [0, 0], sizes = [8, 32], strides = [1, 1]} : vector<8x64xf32> to vector<8x32xf32>
    %781 = arith.negf %780 : vector<8x32xf32>
    %782 = math.exp %781 : vector<8x32xf32>
    %cst_115 = arith.constant 1.000000e+00 : f32
    %783 = vector.broadcast %cst_115 : f32 to vector<8x32xf32>
    %784 = arith.addf %783, %782 : vector<8x32xf32>
    %785 = arith.divf %783, %784 : vector<8x32xf32>
    %786 = vector.extract_strided_slice %779 {offsets = [0, 32], sizes = [8, 32], strides = [1, 1]} : vector<8x64xf32> to vector<8x32xf32>
    %787 = arith.mulf %785, %786 : vector<8x32xf32>
    %788 = arith.truncf %787 : vector<8x32xf32> to vector<8x32xbf16>
    %cst_116 = arith.constant dense<0.000000e+00> : vector<8x128xf32>
    %789 = tpu.matmul %788, %12, %cst_116 {dimension_numbers = #tpu.dot_dimension_numbers<[1], [0], [0], [1], [0, 0, 1, 1], [], []>} : vector<8x32xbf16>, vector<32x128xbf16>, vector<8x128xf32> -> vector<8x128xf32>
    %790 = arith.addf %776, %789 : vector<8x128xf32>
    %791 = arith.negf %790 : vector<8x128xf32>
    %792 = math.exp %791 : vector<8x128xf32>
    %cst_117 = arith.constant 1.000000e+00 : f32
    %793 = vector.broadcast %cst_117 : f32 to vector<8x128xf32>
    %794 = arith.addf %793, %792 : vector<8x128xf32>
    %795 = arith.divf %793, %794 : vector<8x128xf32>
    %796 = vector.extract_strided_slice %795 {offsets = [0, 0], sizes = [8, 32], strides = [1, 1]} : vector<8x128xf32> to vector<8x32xf32>
    %797 = vector.extract_strided_slice %795 {offsets = [0, 32], sizes = [8, 32], strides = [1, 1]} : vector<8x128xf32> to vector<8x32xf32>
    %798 = vector.extract_strided_slice %790 {offsets = [0, 64], sizes = [8, 32], strides = [1, 1]} : vector<8x128xf32> to vector<8x32xf32>
    %799 = vector.extract_strided_slice %790 {offsets = [0, 96], sizes = [8, 32], strides = [1, 1]} : vector<8x128xf32> to vector<8x32xf32>
    %800 = arith.mulf %796, %799 : vector<8x32xf32>
    %801 = arith.addf %798, %800 : vector<8x32xf32>
    %802 = math.tanh %801 : vector<8x32xf32>
    %cst_118 = arith.constant 1.000000e+00 : f32
    %803 = vector.broadcast %cst_118 : f32 to vector<8x32xf32>
    %804 = arith.subf %803, %797 : vector<8x32xf32>
    %805 = arith.mulf %804, %802 : vector<8x32xf32>
    %806 = arith.mulf %797, %787 : vector<8x32xf32>
    %807 = arith.addf %805, %806 : vector<8x32xf32>
    %808 = vector.extract_strided_slice %157 {offsets = [32, 0], sizes = [8, 128], strides = [1, 1]} : vector<80x128xf32> to vector<8x128xf32>
    %809 = arith.truncf %775 : vector<8x32xf32> to vector<8x32xbf16>
    %cst_119 = arith.constant dense<0.000000e+00> : vector<8x64xf32>
    %810 = tpu.matmul %809, %13, %cst_119 {dimension_numbers = #tpu.dot_dimension_numbers<[1], [0], [0], [1], [0, 0, 1, 1], [], []>} : vector<8x32xbf16>, vector<32x64xbf16>, vector<8x64xf32> -> vector<8x64xf32>
    %811 = arith.addf %810, %175 : vector<8x64xf32>
    %812 = vector.extract_strided_slice %811 {offsets = [0, 0], sizes = [8, 32], strides = [1, 1]} : vector<8x64xf32> to vector<8x32xf32>
    %813 = arith.negf %812 : vector<8x32xf32>
    %814 = math.exp %813 : vector<8x32xf32>
    %cst_120 = arith.constant 1.000000e+00 : f32
    %815 = vector.broadcast %cst_120 : f32 to vector<8x32xf32>
    %816 = arith.addf %815, %814 : vector<8x32xf32>
    %817 = arith.divf %815, %816 : vector<8x32xf32>
    %818 = vector.extract_strided_slice %811 {offsets = [0, 32], sizes = [8, 32], strides = [1, 1]} : vector<8x64xf32> to vector<8x32xf32>
    %819 = arith.mulf %817, %818 : vector<8x32xf32>
    %820 = arith.truncf %807 : vector<8x32xf32> to vector<8x32xbf16>
    %cst_121 = arith.constant dense<0.000000e+00> : vector<8x64xf32>
    %821 = tpu.matmul %820, %13, %cst_121 {dimension_numbers = #tpu.dot_dimension_numbers<[1], [0], [0], [1], [0, 0, 1, 1], [], []>} : vector<8x32xbf16>, vector<32x64xbf16>, vector<8x64xf32> -> vector<8x64xf32>
    %822 = arith.addf %821, %178 : vector<8x64xf32>
    %823 = vector.extract_strided_slice %822 {offsets = [0, 0], sizes = [8, 32], strides = [1, 1]} : vector<8x64xf32> to vector<8x32xf32>
    %824 = arith.negf %823 : vector<8x32xf32>
    %825 = math.exp %824 : vector<8x32xf32>
    %cst_122 = arith.constant 1.000000e+00 : f32
    %826 = vector.broadcast %cst_122 : f32 to vector<8x32xf32>
    %827 = arith.addf %826, %825 : vector<8x32xf32>
    %828 = arith.divf %826, %827 : vector<8x32xf32>
    %829 = vector.extract_strided_slice %822 {offsets = [0, 32], sizes = [8, 32], strides = [1, 1]} : vector<8x64xf32> to vector<8x32xf32>
    %830 = arith.mulf %828, %829 : vector<8x32xf32>
    %831 = arith.addf %819, %830 : vector<8x32xf32>
    %832 = arith.truncf %831 : vector<8x32xf32> to vector<8x32xbf16>
    %cst_123 = arith.constant dense<0.000000e+00> : vector<8x128xf32>
    %833 = tpu.matmul %832, %12, %cst_123 {dimension_numbers = #tpu.dot_dimension_numbers<[1], [0], [0], [1], [0, 0, 1, 1], [], []>} : vector<8x32xbf16>, vector<32x128xbf16>, vector<8x128xf32> -> vector<8x128xf32>
    %834 = arith.addf %808, %833 : vector<8x128xf32>
    %835 = arith.negf %834 : vector<8x128xf32>
    %836 = math.exp %835 : vector<8x128xf32>
    %cst_124 = arith.constant 1.000000e+00 : f32
    %837 = vector.broadcast %cst_124 : f32 to vector<8x128xf32>
    %838 = arith.addf %837, %836 : vector<8x128xf32>
    %839 = arith.divf %837, %838 : vector<8x128xf32>
    %840 = vector.extract_strided_slice %839 {offsets = [0, 0], sizes = [8, 32], strides = [1, 1]} : vector<8x128xf32> to vector<8x32xf32>
    %841 = vector.extract_strided_slice %839 {offsets = [0, 32], sizes = [8, 32], strides = [1, 1]} : vector<8x128xf32> to vector<8x32xf32>
    %842 = vector.extract_strided_slice %834 {offsets = [0, 64], sizes = [8, 32], strides = [1, 1]} : vector<8x128xf32> to vector<8x32xf32>
    %843 = vector.extract_strided_slice %834 {offsets = [0, 96], sizes = [8, 32], strides = [1, 1]} : vector<8x128xf32> to vector<8x32xf32>
    %844 = arith.mulf %840, %843 : vector<8x32xf32>
    %845 = arith.addf %842, %844 : vector<8x32xf32>
    %846 = math.tanh %845 : vector<8x32xf32>
    %cst_125 = arith.constant 1.000000e+00 : f32
    %847 = vector.broadcast %cst_125 : f32 to vector<8x32xf32>
    %848 = arith.subf %847, %841 : vector<8x32xf32>
    %849 = arith.mulf %848, %846 : vector<8x32xf32>
    %850 = arith.mulf %841, %831 : vector<8x32xf32>
    %851 = arith.addf %849, %850 : vector<8x32xf32>
    %852 = vector.extract_strided_slice %157 {offsets = [40, 0], sizes = [8, 128], strides = [1, 1]} : vector<80x128xf32> to vector<8x128xf32>
    %853 = arith.truncf %679 : vector<8x32xf32> to vector<8x32xbf16>
    %cst_126 = arith.constant dense<0.000000e+00> : vector<8x64xf32>
    %854 = tpu.matmul %853, %13, %cst_126 {dimension_numbers = #tpu.dot_dimension_numbers<[1], [0], [0], [1], [0, 0, 1, 1], [], []>} : vector<8x32xbf16>, vector<32x64xbf16>, vector<8x64xf32> -> vector<8x64xf32>
    %855 = arith.addf %854, %166 : vector<8x64xf32>
    %856 = vector.extract_strided_slice %855 {offsets = [0, 0], sizes = [8, 32], strides = [1, 1]} : vector<8x64xf32> to vector<8x32xf32>
    %857 = arith.negf %856 : vector<8x32xf32>
    %858 = math.exp %857 : vector<8x32xf32>
    %cst_127 = arith.constant 1.000000e+00 : f32
    %859 = vector.broadcast %cst_127 : f32 to vector<8x32xf32>
    %860 = arith.addf %859, %858 : vector<8x32xf32>
    %861 = arith.divf %859, %860 : vector<8x32xf32>
    %862 = vector.extract_strided_slice %855 {offsets = [0, 32], sizes = [8, 32], strides = [1, 1]} : vector<8x64xf32> to vector<8x32xf32>
    %863 = arith.mulf %861, %862 : vector<8x32xf32>
    %864 = arith.truncf %863 : vector<8x32xf32> to vector<8x32xbf16>
    %cst_128 = arith.constant dense<0.000000e+00> : vector<8x128xf32>
    %865 = tpu.matmul %864, %12, %cst_128 {dimension_numbers = #tpu.dot_dimension_numbers<[1], [0], [0], [1], [0, 0, 1, 1], [], []>} : vector<8x32xbf16>, vector<32x128xbf16>, vector<8x128xf32> -> vector<8x128xf32>
    %866 = arith.addf %852, %865 : vector<8x128xf32>
    %867 = arith.negf %866 : vector<8x128xf32>
    %868 = math.exp %867 : vector<8x128xf32>
    %cst_129 = arith.constant 1.000000e+00 : f32
    %869 = vector.broadcast %cst_129 : f32 to vector<8x128xf32>
    %870 = arith.addf %869, %868 : vector<8x128xf32>
    %871 = arith.divf %869, %870 : vector<8x128xf32>
    %872 = vector.extract_strided_slice %871 {offsets = [0, 0], sizes = [8, 32], strides = [1, 1]} : vector<8x128xf32> to vector<8x32xf32>
    %873 = vector.extract_strided_slice %871 {offsets = [0, 32], sizes = [8, 32], strides = [1, 1]} : vector<8x128xf32> to vector<8x32xf32>
    %874 = vector.extract_strided_slice %866 {offsets = [0, 64], sizes = [8, 32], strides = [1, 1]} : vector<8x128xf32> to vector<8x32xf32>
    %875 = vector.extract_strided_slice %866 {offsets = [0, 96], sizes = [8, 32], strides = [1, 1]} : vector<8x128xf32> to vector<8x32xf32>
    %876 = arith.mulf %872, %875 : vector<8x32xf32>
    %877 = arith.addf %874, %876 : vector<8x32xf32>
    %878 = math.tanh %877 : vector<8x32xf32>
    %cst_130 = arith.constant 1.000000e+00 : f32
    %879 = vector.broadcast %cst_130 : f32 to vector<8x32xf32>
    %880 = arith.subf %879, %873 : vector<8x32xf32>
    %881 = arith.mulf %880, %878 : vector<8x32xf32>
    %882 = arith.mulf %873, %863 : vector<8x32xf32>
    %883 = arith.addf %881, %882 : vector<8x32xf32>
    %884 = vector.extract_strided_slice %157 {offsets = [48, 0], sizes = [8, 128], strides = [1, 1]} : vector<80x128xf32> to vector<8x128xf32>
    %885 = arith.truncf %743 : vector<8x32xf32> to vector<8x32xbf16>
    %cst_131 = arith.constant dense<0.000000e+00> : vector<8x64xf32>
    %886 = tpu.matmul %885, %13, %cst_131 {dimension_numbers = #tpu.dot_dimension_numbers<[1], [0], [0], [1], [0, 0, 1, 1], [], []>} : vector<8x32xbf16>, vector<32x64xbf16>, vector<8x64xf32> -> vector<8x64xf32>
    %887 = arith.addf %886, %172 : vector<8x64xf32>
    %888 = vector.extract_strided_slice %887 {offsets = [0, 0], sizes = [8, 32], strides = [1, 1]} : vector<8x64xf32> to vector<8x32xf32>
    %889 = arith.negf %888 : vector<8x32xf32>
    %890 = math.exp %889 : vector<8x32xf32>
    %cst_132 = arith.constant 1.000000e+00 : f32
    %891 = vector.broadcast %cst_132 : f32 to vector<8x32xf32>
    %892 = arith.addf %891, %890 : vector<8x32xf32>
    %893 = arith.divf %891, %892 : vector<8x32xf32>
    %894 = vector.extract_strided_slice %887 {offsets = [0, 32], sizes = [8, 32], strides = [1, 1]} : vector<8x64xf32> to vector<8x32xf32>
    %895 = arith.mulf %893, %894 : vector<8x32xf32>
    %896 = arith.truncf %895 : vector<8x32xf32> to vector<8x32xbf16>
    %cst_133 = arith.constant dense<0.000000e+00> : vector<8x128xf32>
    %897 = tpu.matmul %896, %12, %cst_133 {dimension_numbers = #tpu.dot_dimension_numbers<[1], [0], [0], [1], [0, 0, 1, 1], [], []>} : vector<8x32xbf16>, vector<32x128xbf16>, vector<8x128xf32> -> vector<8x128xf32>
    %898 = arith.addf %884, %897 : vector<8x128xf32>
    %899 = arith.negf %898 : vector<8x128xf32>
    %900 = math.exp %899 : vector<8x128xf32>
    %cst_134 = arith.constant 1.000000e+00 : f32
    %901 = vector.broadcast %cst_134 : f32 to vector<8x128xf32>
    %902 = arith.addf %901, %900 : vector<8x128xf32>
    %903 = arith.divf %901, %902 : vector<8x128xf32>
    %904 = vector.extract_strided_slice %903 {offsets = [0, 0], sizes = [8, 32], strides = [1, 1]} : vector<8x128xf32> to vector<8x32xf32>
    %905 = vector.extract_strided_slice %903 {offsets = [0, 32], sizes = [8, 32], strides = [1, 1]} : vector<8x128xf32> to vector<8x32xf32>
    %906 = vector.extract_strided_slice %898 {offsets = [0, 64], sizes = [8, 32], strides = [1, 1]} : vector<8x128xf32> to vector<8x32xf32>
    %907 = vector.extract_strided_slice %898 {offsets = [0, 96], sizes = [8, 32], strides = [1, 1]} : vector<8x128xf32> to vector<8x32xf32>
    %908 = arith.mulf %904, %907 : vector<8x32xf32>
    %909 = arith.addf %906, %908 : vector<8x32xf32>
    %910 = math.tanh %909 : vector<8x32xf32>
    %cst_135 = arith.constant 1.000000e+00 : f32
    %911 = vector.broadcast %cst_135 : f32 to vector<8x32xf32>
    %912 = arith.subf %911, %905 : vector<8x32xf32>
    %913 = arith.mulf %912, %910 : vector<8x32xf32>
    %914 = arith.mulf %905, %895 : vector<8x32xf32>
    %915 = arith.addf %913, %914 : vector<8x32xf32>
    %916 = tpu.concatenate %679, %743, %775, %851, %883, %915 in 0 : vector<8x32xf32>, vector<8x32xf32>, vector<8x32xf32>, vector<8x32xf32>, vector<8x32xf32>, vector<8x32xf32> -> vector<48x32xf32>
    %917 = arith.truncf %916 : vector<48x32xf32> to vector<48x32xbf16>
    %c176 = arith.constant 176 : index
    %c0_136 = arith.constant 0 : index
    %918 = vector.load %arg3[%c176, %c0_136] : memref<272x128xbf16, #tpu.memory_space<vmem>>, vector<32x64xbf16>
    %cst_137 = arith.constant dense<0.000000e+00> : vector<48x64xf32>
    %919 = tpu.matmul %917, %918, %cst_137 {dimension_numbers = #tpu.dot_dimension_numbers<[1], [0], [0], [1], [0, 0, 1, 1], [], []>} : vector<48x32xbf16>, vector<32x64xbf16>, vector<48x64xf32> -> vector<48x64xf32>
    %c64_138 = arith.constant 64 : index
    %c0_139 = arith.constant 0 : index
    %920 = vector.load %arg4[%c64_138, %c0_139] : memref<80x128xf32, #tpu.memory_space<vmem>>, vector<1x64xf32>
    %921 = vector.broadcast %920 : vector<1x64xf32> to vector<48x64xf32>
    %922 = arith.addf %919, %921 : vector<48x64xf32>
    %cst_140 = arith.constant 0.000000e+00 : f32
    %923 = vector.broadcast %cst_140 : f32 to vector<48x64xf32>
    %924 = arith.maximumf %922, %923 : vector<48x64xf32>
    %925 = arith.truncf %924 : vector<48x64xf32> to vector<48x64xbf16>
    %c208 = arith.constant 208 : index
    %c0_141 = arith.constant 0 : index
    %926 = vector.load %arg3[%c208, %c0_141] : memref<272x128xbf16, #tpu.memory_space<vmem>>, vector<64x8xbf16>
    %cst_142 = arith.constant dense<0.000000e+00> : vector<48x8xf32>
    %927 = tpu.matmul %925, %926, %cst_142 {dimension_numbers = #tpu.dot_dimension_numbers<[1], [0], [0], [1], [0, 0, 1, 1], [], []>} : vector<48x64xbf16>, vector<64x8xbf16>, vector<48x8xf32> -> vector<48x8xf32>
    %c72 = arith.constant 72 : index
    %c0_143 = arith.constant 0 : index
    %928 = vector.load %arg4[%c72, %c0_143] : memref<80x128xf32, #tpu.memory_space<vmem>>, vector<1x8xf32>
    %929 = vector.broadcast %928 : vector<1x8xf32> to vector<48x8xf32>
    %930 = arith.addf %927, %929 : vector<48x8xf32>
    %931 = vector.extract_strided_slice %0 {offsets = [0, 2], sizes = [8, 1], strides = [1, 1]} : vector<8x12xi32> to vector<8x1xi32>
    %932 = vector.broadcast %931 : vector<8x1xi32> to vector<8x8xi32>
    %933 = arith.cmpi eq, %1, %932 : vector<8x8xi32>
    %934 = arith.extui %933 : vector<8x8xi1> to vector<8x8xi32>
    %935 = arith.sitofp %934 : vector<8x8xi32> to vector<8x8xf32>
    %936 = vector.broadcast %10 : vector<8x1xf32> to vector<8x8xf32>
    %937 = arith.mulf %935, %936 : vector<8x8xf32>
    %938 = vector.extract_strided_slice %0 {offsets = [0, 4], sizes = [8, 1], strides = [1, 1]} : vector<8x12xi32> to vector<8x1xi32>
    %939 = vector.broadcast %938 : vector<8x1xi32> to vector<8x8xi32>
    %940 = arith.cmpi eq, %1, %939 : vector<8x8xi32>
    %941 = arith.extui %940 : vector<8x8xi1> to vector<8x8xi32>
    %942 = arith.sitofp %941 : vector<8x8xi32> to vector<8x8xf32>
    %943 = vector.broadcast %10 : vector<8x1xf32> to vector<8x8xf32>
    %944 = arith.mulf %942, %943 : vector<8x8xf32>
    %945 = vector.extract_strided_slice %0 {offsets = [0, 5], sizes = [8, 1], strides = [1, 1]} : vector<8x12xi32> to vector<8x1xi32>
    %946 = vector.broadcast %945 : vector<8x1xi32> to vector<8x8xi32>
    %947 = arith.cmpi eq, %1, %946 : vector<8x8xi32>
    %948 = arith.extui %947 : vector<8x8xi1> to vector<8x8xi32>
    %949 = arith.sitofp %948 : vector<8x8xi32> to vector<8x8xf32>
    %950 = vector.broadcast %10 : vector<8x1xf32> to vector<8x8xf32>
    %951 = arith.mulf %949, %950 : vector<8x8xf32>
    %952 = vector.extract_strided_slice %0 {offsets = [0, 7], sizes = [8, 1], strides = [1, 1]} : vector<8x12xi32> to vector<8x1xi32>
    %953 = vector.broadcast %952 : vector<8x1xi32> to vector<8x8xi32>
    %954 = arith.cmpi eq, %1, %953 : vector<8x8xi32>
    %955 = arith.extui %954 : vector<8x8xi1> to vector<8x8xi32>
    %956 = arith.sitofp %955 : vector<8x8xi32> to vector<8x8xf32>
    %957 = vector.broadcast %10 : vector<8x1xf32> to vector<8x8xf32>
    %958 = arith.mulf %956, %957 : vector<8x8xf32>
    %959 = vector.extract_strided_slice %0 {offsets = [0, 8], sizes = [8, 1], strides = [1, 1]} : vector<8x12xi32> to vector<8x1xi32>
    %960 = vector.broadcast %959 : vector<8x1xi32> to vector<8x8xi32>
    %961 = arith.cmpi eq, %1, %960 : vector<8x8xi32>
    %962 = arith.extui %961 : vector<8x8xi1> to vector<8x8xi32>
    %963 = arith.sitofp %962 : vector<8x8xi32> to vector<8x8xf32>
    %964 = vector.broadcast %10 : vector<8x1xf32> to vector<8x8xf32>
    %965 = arith.mulf %963, %964 : vector<8x8xf32>
    %966 = vector.extract_strided_slice %0 {offsets = [0, 9], sizes = [8, 1], strides = [1, 1]} : vector<8x12xi32> to vector<8x1xi32>
    %967 = vector.broadcast %966 : vector<8x1xi32> to vector<8x8xi32>
    %968 = arith.cmpi eq, %1, %967 : vector<8x8xi32>
    %969 = arith.extui %968 : vector<8x8xi1> to vector<8x8xi32>
    %970 = arith.sitofp %969 : vector<8x8xi32> to vector<8x8xf32>
    %971 = vector.broadcast %10 : vector<8x1xf32> to vector<8x8xf32>
    %972 = arith.mulf %970, %971 : vector<8x8xf32>
    %973 = tpu.concatenate %937, %944, %951, %958, %965, %972 in 0 : vector<8x8xf32>, vector<8x8xf32>, vector<8x8xf32>, vector<8x8xf32>, vector<8x8xf32>, vector<8x8xf32> -> vector<48x8xf32>
    %cst_144 = arith.constant dense<0xFF800000> : vector<48xf32>
    %974 = vector.multi_reduction <maximumf>, %930, %cst_144 [1] : vector<48x8xf32> to vector<48xf32>
    %975 = vector.shape_cast %974 : vector<48xf32> to vector<48x1xf32>
    %976 = vector.broadcast %975 : vector<48x1xf32> to vector<48x8xf32>
    %977 = arith.subf %930, %976 : vector<48x8xf32>
    %978 = math.exp %977 : vector<48x8xf32>
    %cst_145 = arith.constant dense<0.000000e+00> : vector<48xf32>
    %979 = vector.multi_reduction <add>, %978, %cst_145 [1] : vector<48x8xf32> to vector<48xf32>
    %980 = vector.shape_cast %979 : vector<48xf32> to vector<48x1xf32>
    %981 = math.log %980 : vector<48x1xf32>
    %982 = arith.addf %975, %981 : vector<48x1xf32>
    %983 = vector.broadcast %982 : vector<48x1xf32> to vector<48x8xf32>
    %984 = arith.subf %930, %983 : vector<48x8xf32>
    %985 = arith.mulf %984, %973 : vector<48x8xf32>
    %986 = vector.shape_cast %985 : vector<48x8xf32> to vector<1x48x8xf32>
    %cst_146 = arith.constant dense<0.000000e+00> : vector<1xf32>
    %987 = vector.multi_reduction <add>, %986, %cst_146 [1, 2] : vector<1x48x8xf32> to vector<1xf32>
    %988 = vector.shape_cast %987 : vector<1xf32> to vector<1x1x1xf32>
    %989 = vector.extract %988[0, 0, 0] : f32 from vector<1x1x1xf32>
    %cst_147 = arith.constant 1.000000e+00 : f32
    %990 = vector.broadcast %cst_147 : f32 to vector<8x16xf32>
    %991 = arith.addf %990, %611 : vector<8x16xf32>
    %992 = arith.mulf %610, %610 : vector<8x16xf32>
    %993 = arith.subf %991, %992 : vector<8x16xf32>
    %994 = math.exp %611 : vector<8x16xf32>
    %995 = arith.subf %993, %994 : vector<8x16xf32>
    %996 = vector.broadcast %10 : vector<8x1xf32> to vector<8x16xf32>
    %997 = arith.mulf %996, %995 : vector<8x16xf32>
    %998 = vector.shape_cast %997 : vector<8x16xf32> to vector<1x8x16xf32>
    %cst_148 = arith.constant dense<0.000000e+00> : vector<1xf32>
    %999 = vector.multi_reduction <add>, %998, %cst_148 [1, 2] : vector<1x8x16xf32> to vector<1xf32>
    %1000 = vector.shape_cast %999 : vector<1xf32> to vector<1x1x1xf32>
    %1001 = vector.extract %1000[0, 0, 0] : f32 from vector<1x1x1xf32>
    %cst_149 = arith.constant -5.000000e-01 : f32
    %1002 = arith.mulf %cst_149, %1001 : f32
    %cst_150 = arith.constant 0.000000e+00 : f32
    %1003 = arith.subf %cst_150, %989 : f32
    %cst_151 = arith.constant 5.000000e-03 : f32
    %1004 = arith.mulf %cst_151, %1002 : f32
    %1005 = arith.addf %1003, %1004 : f32
    %1006 = vector.broadcast %1005 : f32 to vector<1x8x128xf32>
    %c0_152 = arith.constant 0 : index
    %c0_153 = arith.constant 0 : index
    %c0_154 = arith.constant 0 : index
    %1007 = vector.load %arg5[%c0_152, %c0_153, %c0_154] : memref<1x8x128xf32, #tpu.memory_space<vmem>>, vector<1x8x128xf32>
    tpu.vector_store %arg5[%c0_152, %c0_153, %c0_154], %1006 {strides = array<i32>} : memref<1x8x128xf32, #tpu.memory_space<vmem>>, vector<1x8x128xf32>,
    return
  }
  func.func @transform_0(%arg0: i32) -> (i32, i32) {
    %c0_i32 = arith.constant 0 : i32
    %c0_i32_0 = arith.constant 0 : i32
    return %arg0, %c0_i32 : i32, i32
  }
  func.func @transform_1(%arg0: i32) -> (i32, i32) {
    %c0_i32 = arith.constant 0 : i32
    %c0_i32_0 = arith.constant 0 : i32
    return %arg0, %c0_i32 : i32, i32
  }
  func.func @transform_2(%arg0: i32) -> (i32, i32) {
    %c0_i32 = arith.constant 0 : i32
    %c0_i32_0 = arith.constant 0 : i32
    %c0_i32_1 = arith.constant 0 : i32
    return %c0_i32, %c0_i32_0 : i32, i32
  }
  func.func @transform_3(%arg0: i32) -> (i32, i32) {
    %c0_i32 = arith.constant 0 : i32
    %c0_i32_0 = arith.constant 0 : i32
    %c0_i32_1 = arith.constant 0 : i32
    return %c0_i32, %c0_i32_0 : i32, i32
  }
  func.func @transform_4(%arg0: i32) -> (i32, i32, i32) {
    %c0_i32 = arith.constant 0 : i32
    %c0_i32_0 = arith.constant 0 : i32
    %c0_i32_1 = arith.constant 0 : i32
    return %arg0, %c0_i32, %c0_i32_0 : i32, i32, i32
  }
}

</mosaic_0001>

<llo_original>
// kernel: dvae_forward.1
$region0: #{dvae_forward.1}
  #allocation0 [shape = 'u32[]', space=smem, size = 0x4, offset = 0x4, fixed_abs, tag = 'smem constant byte address 0x4 - core index']
  #allocation1 [shape = 'u32[144,128]{1,0:T(1,128)}', space=vmem, size = 0x12000, scoped, tag = 'internal scratch']
  %s0 = inlined_call_operand.vmem [shape: s32[8,12], index: 0, kind: input, shape index: {}]
  %s1 = inlined_call_operand.vmem [shape: f32[8,16], index: 1, kind: input, shape index: {}]
  %s2 = inlined_call_operand.hbm [shape: bf16[272,128], index: 2, kind: input, shape index: {}]
  %s3 = inlined_call_operand.hbm [shape: f32[80,128], index: 3, kind: input, shape index: {}]
  %s4 = inlined_call_operand.vmem [shape: f32[1,8,128], index: 4, kind: output, shape index: {}]
  %s5 = sld [smem:[#allocation0]]
  $region34: #{dvae_forward.1} parent=0
    _
  %s7 = ssub.s32 1, %s5
  %s8 = scalar_select 0, %s7, %s5
  $region1: #{dvae_forward.1} parent=0
    #allocation2 [shape = 'u8[69632]{0}', space=vmem, size = 0x11000, scoped, tag = 'input window, operand 2, single buffered']
    #allocation3 [shape = 's32[1]{0}', space=sflag, size = 0x4, scoped, tag = 'scoped memory for dvae_forward.1']
    #allocation4 [shape = 'u8[40960]{0}', space=vmem, size = 0xa000, scoped, tag = 'input window, operand 3, single buffered']
    #allocation5 [shape = 's32[1]{0}', space=sflag, size = 0x4, scoped, tag = 'scoped memory for dvae_forward.1']
    %9 = vsyncpa [#allocation3], 0
    %10 = vsyncpa [#allocation5], 0
    // Predicated region
    $region2: #{dvae_forward.1} parent=1 // pred_check
      _
    $region3: #{dvae_forward.1} parent=1 // pred_check_branch
      %12 = sbr.rel (0) target = $region5
    $region4: #{dvae_forward.1} parent=1 // pred_region
      _
    $region5: #{dvae_forward.1} parent=1 // pred_fallthru
      _
    // Predicated region
    $region6: #{dvae_forward.1} parent=1 // pred_check
      _
    $region7: #{dvae_forward.1} parent=1 // pred_check_branch
      %14 = sbr.rel (0) target = $region9
    $region8: #{dvae_forward.1} parent=1 // pred_region
      _
    $region9: #{dvae_forward.1} parent=1 // pred_fallthru
      _
    // Predicated region
    $region10: #{dvae_forward.1} parent=1 // pred_check
      _
    $region11: #{dvae_forward.1} parent=1 // pred_check_branch
      %16 = sbr.rel (0) target = $region13
    $region12: #{dvae_forward.1} parent=1 // pred_region
      %s18 = ssub.s32 2176, 2176
      %19 = vsyncadd [#allocation3], %s18
      %s20 = sshll.u32 [#allocation2], 4
      %s21 = int_to_ptr.vmem [resolvable:$true] %s20
      %26 = dma.hbm_to_vmem [thread:$0]  %s2, 2176, %s21, [#allocation3], 64, 64, 4
    $region13: #{dvae_forward.1} parent=1 // pred_fallthru
      _
    // Predicated region
    $region14: #{dvae_forward.1} parent=1 // pred_check
      _
    $region15: #{dvae_forward.1} parent=1 // pred_check_branch
      %28 = sbr.rel (0) target = $region17
    $region16: #{dvae_forward.1} parent=1 // pred_region
      %s30 = ssub.s32 1280, 1280
      %31 = vsyncadd [#allocation5], %s30
      %s32 = sshll.u32 [#allocation4], 4
      %s33 = int_to_ptr.vmem [resolvable:$true] %s32
      %38 = dma.hbm_to_vmem [thread:$0]  %s3, 1280, %s33, [#allocation5], 128, 128, 8
    $region17: #{dvae_forward.1} parent=1 // pred_fallthru
      _
    // Predicated region
    $region18: #{dvae_forward.1} parent=1 // pred_check
      _
    $region19: #{dvae_forward.1} parent=1 // pred_check_branch
      %40 = sbr.rel (0) target = $region21
    $region20: #{dvae_forward.1} parent=1 // pred_region
      %41 = dma.done [#allocation3], 2176
    $region21: #{dvae_forward.1} parent=1 // pred_fallthru
      _
    // Predicated region
    $region22: #{dvae_forward.1} parent=1 // pred_check
      _
    $region23: #{dvae_forward.1} parent=1 // pred_check_branch
      %43 = sbr.rel (0) target = $region25
    $region24: #{dvae_forward.1} parent=1 // pred_region
      %44 = dma.done [#allocation5], 1280
    $region25: #{dvae_forward.1} parent=1 // pred_fallthru
      _
    %v46 = vld [vmem:[%s0] sm:$0xff]
    %v47 = vlaneseq
    %v48 = vand.u32 %v47, 127
    %s49 = smul.u32 0, 8
    %v50 = vlaneseq
    %v51 = vshrl.u32 %v50, 7
    %v52 = vstv %s49
    %v53 = vadd.s32 %v52, %v51
    %vm54 = vcmp.lt.s32.totalorder %v53, 2
    %v55 = vsel %vm54, 1, 0
    %v56 = vcvt.s32.f32 %v55
    %v57 = vld [vmem:[#allocation2 + $0x8] sm:$0xf]
    %v58 = vld [vmem:[#allocation2 + $0xc] sm:$0xf]
    %v59 = vld [vmem:[#allocation2 + $0x10] sm:$0xf]
    %v60 = vld [vmem:[#allocation2 + $0x14] sm:$0xf]
    %v61 = vld [vmem:[#allocation2 + $0x20] sm:$0xf]
    %v62 = vld [vmem:[#allocation2 + $0x24] sm:$0xf]
    %v63 = vld [vmem:[#allocation2 + $0x28] sm:$0xf]
    %v64 = vld [vmem:[#allocation2 + $0x2c] sm:$0xf]
    %v65 = vld [vmem:[#allocation2 + $0x30] sm:$0xf]
    %v66 = vld [vmem:[#allocation2 + $0x34] sm:$0xf]
    %v67 = vld [vmem:[#allocation2 + $0x38] sm:$0xf]
    %v68 = vld [vmem:[#allocation2 + $0x3c] sm:$0xf]
    %69 = vset.pattern.permute.xlu0 0
    %70 = vperm.xlu0 %69, %v46
    %v71 = vpop.permute.xlu0 %70
    %vm72 = vcmp.eq.s32.totalorder %v48, %v71
    %v73 = vsel %vm72, 1, 0
    %v74 = vcvt.s32.f32 %v73
    %v75 = vpack.c.bf16 %v74, %v74
    %76 = vset.pattern.permute.xlu0 1
    %77 = vperm.xlu0 %76, %v46
    %v78 = vpop.permute.xlu0 %77
    %vm79 = vcmp.eq.s32.totalorder %v48, %v78
    %v80 = vsel %vm79, 1, 0
    %v81 = vcvt.s32.f32 %v80
    %v82 = vpack.c.bf16 %v81, %v81
    %83 = vset.pattern.permute.xlu0 2
    %84 = vperm.xlu0 %83, %v46
    %v85 = vpop.permute.xlu0 %84
    %vm86 = vcmp.eq.s32.totalorder %v48, %v85
    %v87 = vsel %vm86, 1, 0
    %v88 = vcvt.s32.f32 %v87
    %v89 = vpack.c.bf16 %v88, %v88
    %90 = vset.pattern.permute.xlu0 3
    %91 = vperm.xlu0 %90, %v46
    %v92 = vpop.permute.xlu0 %91
    %vm93 = vcmp.eq.s32.totalorder %v48, %v92
    %v94 = vsel %vm93, 1, 0
    %v95 = vcvt.s32.f32 %v94
    %v96 = vpack.c.bf16 %v95, %v95
    %97 = vset.pattern.permute.xlu0 4
    %98 = vperm.xlu0 %97, %v46
    %v99 = vpop.permute.xlu0 %98
    %vm100 = vcmp.eq.s32.totalorder %v48, %v99
    %v101 = vsel %vm100, 1, 0
    %v102 = vcvt.s32.f32 %v101
    %v103 = vpack.c.bf16 %v102, %v102
    %104 = vset.pattern.permute.xlu0 5
    %105 = vperm.xlu0 %104, %v46
    %v106 = vpop.permute.xlu0 %105
    %vm107 = vcmp.eq.s32.totalorder %v48, %v106
    %v108 = vsel %vm107, 1, 0
    %v109 = vcvt.s32.f32 %v108
    %v110 = vpack.c.bf16 %v109, %v109
    %111 = vset.pattern.permute.xlu0 6
    %112 = vperm.xlu0 %111, %v46
    %v113 = vpop.permute.xlu0 %112
    %vm114 = vcmp.eq.s32.totalorder %v48, %v113
    %v115 = vsel %vm114, 1, 0
    %v116 = vcvt.s32.f32 %v115
    %v117 = vpack.c.bf16 %v116, %v116
    %118 = vset.pattern.permute.xlu0 7
    %119 = vperm.xlu0 %118, %v46
    %v120 = vpop.permute.xlu0 %119
    %vm121 = vcmp.eq.s32.totalorder %v48, %v120
    %v122 = vsel %vm121, 1, 0
    %v123 = vcvt.s32.f32 %v122
    %v124 = vpack.c.bf16 %v123, %v123
    %125 = vset.pattern.permute.xlu0 8
    %126 = vperm.xlu0 %125, %v46
    %v127 = vpop.permute.xlu0 %126
    %vm128 = vcmp.eq.s32.totalorder %v48, %v127
    %v129 = vsel %vm128, 1, 0
    %v130 = vcvt.s32.f32 %v129
    %v131 = vpack.c.bf16 %v130, %v130
    %132 = vset.pattern.permute.xlu0 9
    %133 = vperm.xlu0 %132, %v46
    %v134 = vpop.permute.xlu0 %133
    %vm135 = vcmp.eq.s32.totalorder %v48, %v134
    %v136 = vsel %vm135, 1, 0
    %v137 = vcvt.s32.f32 %v136
    %v138 = vpack.c.bf16 %v137, %v137
    %139 = vset.pattern.permute.xlu0 10
    %140 = vperm.xlu0 %139, %v46
    %v141 = vpop.permute.xlu0 %140
    %vm142 = vcmp.eq.s32.totalorder %v48, %v141
    %v143 = vsel %vm142, 1, 0
    %v144 = vcvt.s32.f32 %v143
    %v145 = vpack.c.bf16 %v144, %v144
    %146 = vset.pattern.permute.xlu0 11
    %147 = vperm.xlu0 %146, %v46
    %v148 = vpop.permute.xlu0 %147
    %vm149 = vcmp.eq.s32.totalorder %v48, %v148
    %v150 = vsel %vm149, 1, 0
    %v151 = vcvt.s32.f32 %v150
    %v152 = vpack.c.bf16 %v151, %v151
    %v154 = vrot.slane %v82, 4
    %v156 = vrot.slane %v96, 4
    %v158 = vrot.slane %v110, 4
    %v160 = vrot.slane %v124, 4
    %v162 = vrot.slane %v138, 4
    %v164 = vrot.slane %v152, 4
    %vm165 = vcmask 1043456
    %v168 = vsel %vm165, %v75, %v154
    %v171 = vsel %vm165, %v89, %v156
    %v174 = vsel %vm165, %v103, %v158
    %v177 = vsel %vm165, %v117, %v160
    %v180 = vsel %vm165, %v131, %v162
    %v183 = vsel %vm165, %v145, %v164
    %v184 = vld [vmem:[#allocation2] sm:$0xf]
    %v185 = vld [vmem:[#allocation2 + $0x4] sm:$0xf]
    %v186 = vld [vmem:[#allocation4] sm:$0x1]
    %v187 = vlaneseq
    %v188 = vshrl.u32 %v187, 7
    %v189 = vsub.s32 0, %v188
    %v190 = vrot.slane %v186, %v189
    %v193 = vunpack.c.l.b16 %v184
    %v194 = vunpack.c.l.b16 %v185
    %v195 = vpack.c.b16 %v194, %v193
    %vm197 = vcmask 130048
    %v198 = vsel %vm197, %v168, 0
    %v200 = vsel %vm197, %v171, 0
    %v202 = vsel %vm197, %v174, 0
    %v204 = vsel %vm197, %v177, 0
    %v206 = vsel %vm197, %v180, 0
    %v208 = vsel %vm197, %v183, 0
    %210 = vmatprep.subr.bf16.mxu0 0
    %211 = vmatpush1.bf16.msra.mxu0 %v195
    %212 = vmatprep.subr.bf16.mxu0 0
    %213 = vmatpush1.bf16.msra.mxu0 0
    %214 = vmatprep.subr.bf16.mxu0 0
    %215 = vmatpush1.bf16.msra.mxu0 0
    %216 = vmatprep.subr.bf16.mxu0 0
    %217 = vmatpush1.bf16.msra.mxu0 0
    %218 = vmatprep.subr.bf16.mxu0 0
    %219 = vmatpush1.bf16.msra.mxu0 0
    %220 = vmatprep.subr.bf16.mxu0 0
    %221 = vmatpush1.bf16.msra.mxu0 0
    %222 = vmatprep.subr.bf16.mxu0 0
    %223 = vmatpush1.bf16.msra.mxu0 0
    %224 = vmatprep.subr.bf16.mxu0 0
    %225 = vmatpush1.bf16.msra.mxu0 0
    %226 = vmatprep.subr.bf16.mxu0 0
    %227 = vmatpush1.bf16.msra.mxu0 0
    %228 = vmatprep.subr.bf16.mxu0 0
    %229 = vmatpush1.bf16.msra.mxu0 0
    %230 = vmatprep.subr.bf16.mxu0 0
    %231 = vmatpush1.bf16.msra.mxu0 0
    %232 = vmatprep.subr.bf16.mxu0 0
    %233 = vmatpush1.bf16.msra.mxu0 0
    %234 = vmatprep.subr.bf16.mxu0 0
    %235 = vmatpush1.bf16.msra.mxu0 0
    %236 = vmatprep.subr.bf16.mxu0 0
    %237 = vmatpush1.bf16.msra.mxu0 0
    %238 = vmatprep.subr.bf16.mxu0 0
    %239 = vmatpush1.bf16.msra.mxu0 0
    %240 = vmatprep.subr.bf16.mxu0 0
    %241 = vmatpush1.bf16.msra.mxu0 0
    %242 = vmatprep.mubr.bf16.mxu0 0
    %243 = vmatmul.mubr.bf16.gmra.mrb[0].mxu0 %v198
    %v244 = vpop.f32.mrb[0].mxu0
    %v245 = vadd.f32 %v190, %v244
    %v246 = vpop.f32.mrb[0].mxu0
    %v247 = vpop.f32.mrb[0].mxu0
    %v248 = vadd.f32 %v190, %v247
    %v249 = vpop.f32.mrb[0].mxu0
    %250 = vmatprep.mubr.bf16.mxu0 0
    %251 = vmatmul.mubr.bf16.gmra.mrb[0].mxu0 %v200
    %v252 = vpop.f32.mrb[0].mxu0
    %v253 = vadd.f32 %v190, %v252
    %v254 = vpop.f32.mrb[0].mxu0
    %v255 = vpop.f32.mrb[0].mxu0
    %v256 = vadd.f32 %v190, %v255
    %v257 = vpop.f32.mrb[0].mxu0
    %258 = vmatprep.mubr.bf16.mxu0 0
    %259 = vmatmul.mubr.bf16.gmra.mrb[0].mxu0 %v202
    %v260 = vpop.f32.mrb[0].mxu0
    %v261 = vadd.f32 %v190, %v260
    %v262 = vpop.f32.mrb[0].mxu0
    %v263 = vpop.f32.mrb[0].mxu0
    %v264 = vadd.f32 %v190, %v263
    %v265 = vpop.f32.mrb[0].mxu0
    %266 = vmatprep.mubr.bf16.mxu0 0
    %267 = vmatmul.mubr.bf16.gmra.mrb[0].mxu0 %v204
    %v268 = vpop.f32.mrb[0].mxu0
    %v269 = vadd.f32 %v190, %v268
    %v270 = vpop.f32.mrb[0].mxu0
    %v271 = vpop.f32.mrb[0].mxu0
    %v272 = vadd.f32 %v190, %v271
    %v273 = vpop.f32.mrb[0].mxu0
    %274 = vmatprep.mubr.bf16.mxu0 0
    %275 = vmatmul.mubr.bf16.gmra.mrb[0].mxu0 %v206
    %v276 = vpop.f32.mrb[0].mxu0
    %v277 = vadd.f32 %v190, %v276
    %v278 = vpop.f32.mrb[0].mxu0
    %v279 = vpop.f32.mrb[0].mxu0
    %v280 = vadd.f32 %v190, %v279
    %v281 = vpop.f32.mrb[0].mxu0
    %282 = vmatprep.mubr.bf16.mxu0 0
    %283 = vmatmul.mubr.bf16.gmra.mrb[0].mxu0 %v208
    %v284 = vpop.f32.mrb[0].mxu0
    %v285 = vadd.f32 %v190, %v284
    %v286 = vpop.f32.mrb[0].mxu0
    %v287 = vpop.f32.mrb[0].mxu0
    %v288 = vadd.f32 %v190, %v287
    %v289 = vpop.f32.mrb[0].mxu0
    %290 = vdwg.mxu0
    %v292 = vsel %vm165, %v152, %v164
    %v293 = vld [vmem:[#allocation2 + $0x18] sm:$0xf]
    %v294 = vld [vmem:[#allocation2 + $0x1c] sm:$0xf]
    %v295 = vld [vmem:[#allocation4 + $0x8] sm:$0x1]
    %v296 = vlaneseq
    %v297 = vshrl.u32 %v296, 7
    %v298 = vsub.s32 0, %v297
    %v299 = vrot.slane %v295, %v298
    %v302 = vunpack.c.l.b16 %v293
    %v303 = vunpack.c.l.b16 %v294
    %v304 = vpack.c.b16 %v303, %v302
    %v306 = vsel %vm197, %v292, 0
    %308 = vmatprep.subr.bf16.mxu0 0
    %309 = vmatpush1.bf16.msra.mxu0 %v304
    %310 = vmatprep.subr.bf16.mxu0 0
    %311 = vmatpush1.bf16.msra.mxu0 0
    %312 = vmatprep.subr.bf16.mxu0 0
    %313 = vmatpush1.bf16.msra.mxu0 0
    %314 = vmatprep.subr.bf16.mxu0 0
    %315 = vmatpush1.bf16.msra.mxu0 0
    %316 = vmatprep.subr.bf16.mxu0 0
    %317 = vmatpush1.bf16.msra.mxu0 0
    %318 = vmatprep.subr.bf16.mxu0 0
    %319 = vmatpush1.bf16.msra.mxu0 0
    %320 = vmatprep.subr.bf16.mxu0 0
    %321 = vmatpush1.bf16.msra.mxu0 0
    %322 = vmatprep.subr.bf16.mxu0 0
    %323 = vmatpush1.bf16.msra.mxu0 0
    %324 = vmatprep.subr.bf16.mxu0 0
    %325 = vmatpush1.bf16.msra.mxu0 0
    %326 = vmatprep.subr.bf16.mxu0 0
    %327 = vmatpush1.bf16.msra.mxu0 0
    %328 = vmatprep.subr.bf16.mxu0 0
    %329 = vmatpush1.bf16.msra.mxu0 0
    %330 = vmatprep.subr.bf16.mxu0 0
    %331 = vmatpush1.bf16.msra.mxu0 0
    %332 = vmatprep.subr.bf16.mxu0 0
    %333 = vmatpush1.bf16.msra.mxu0 0
    %334 = vmatprep.subr.bf16.mxu0 0
    %335 = vmatpush1.bf16.msra.mxu0 0
    %336 = vmatprep.subr.bf16.mxu0 0
    %337 = vmatpush1.bf16.msra.mxu0 0
    %338 = vmatprep.subr.bf16.mxu0 0
    %339 = vmatpush1.bf16.msra.mxu0 0
    %340 = vmatprep.mubr.bf16.mxu0 0
    %341 = vmatmul.mubr.bf16.gmra.mrb[0].mxu0 %v200
    %v342 = vpop.f32.mrb[0].mxu0
    %v343 = vadd.f32 %v299, %v342
    %v344 = vpop.f32.mrb[0].mxu0
    %v345 = vpop.f32.mrb[0].mxu0
    %v346 = vadd.f32 %v299, %v345
    %v347 = vpop.f32.mrb[0].mxu0
    %348 = vmatprep.mubr.bf16.mxu0 0
    %349 = vmatmul.mubr.bf16.gmra.mrb[0].mxu0 %v202
    %v350 = vpop.f32.mrb[0].mxu0
    %v351 = vadd.f32 %v299, %v350
    %v352 = vpop.f32.mrb[0].mxu0
    %v353 = vpop.f32.mrb[0].mxu0
    %v354 = vadd.f32 %v299, %v353
    %v355 = vpop.f32.mrb[0].mxu0
    %356 = vmatprep.mubr.bf16.mxu0 0
    %357 = vmatmul.mubr.bf16.gmra.mrb[0].mxu0 %v204
    %v358 = vpop.f32.mrb[0].mxu0
    %v359 = vadd.f32 %v299, %v358
    %v360 = vpop.f32.mrb[0].mxu0
    %v361 = vpop.f32.mrb[0].mxu0
    %v362 = vadd.f32 %v299, %v361
    %v363 = vpop.f32.mrb[0].mxu0
    %364 = vmatprep.mubr.bf16.mxu0 0
    %365 = vmatmul.mubr.bf16.gmra.mrb[0].mxu0 %v206
    %v366 = vpop.f32.mrb[0].mxu0
    %v367 = vadd.f32 %v299, %v366
    %v368 = vpop.f32.mrb[0].mxu0
    %v369 = vpop.f32.mrb[0].mxu0
    %v370 = vpop.f32.mrb[0].mxu0
    %371 = vmatprep.mubr.bf16.mxu0 0
    %372 = vmatmul.mubr.bf16.gmra.mrb[0].mxu0 %v306
    %v373 = vpop.f32.mrb[0].mxu0
    %v374 = vpop.f32.mrb[0].mxu0
    %v375 = vpop.f32.mrb[0].mxu0
    %v376 = vpop.f32.mrb[0].mxu0
    %377 = vdwg.mxu0
    %v378 = vld [vmem:[#allocation4 + $0x10] sm:$0x1]
    %v379 = vld [vmem:[#allocation4 + $0x18] sm:$0x1]
    %v380 = vld [vmem:[#allocation4 + $0x20] sm:$0xff]
    %v381 = vld [vmem:[#allocation4 + $0x28] sm:$0xf]
    %v382 = vlaneseq
    %v383 = vshrl.u32 %v382, 7
    %v384 = vsub.s32 0, %v383
    %v385 = vrot.slane %v380, %v384
    %v386 = vlaneseq
    %v387 = vshrl.u32 %v386, 7
    %v388 = vsub.s32 1, %v387
    %v389 = vrot.slane %v380, %v388
    %v390 = vlaneseq
    %v391 = vshrl.u32 %v390, 7
    %v392 = vsub.s32 2, %v391
    %v393 = vrot.slane %v380, %v392
    %v394 = vlaneseq
    %v395 = vshrl.u32 %v394, 7
    %v396 = vsub.s32 3, %v395
    %v397 = vrot.slane %v380, %v396
    %v398 = vlaneseq
    %v399 = vshrl.u32 %v398, 7
    %v400 = vsub.s32 4, %v399
    %v401 = vrot.slane %v380, %v400
    %v402 = vlaneseq
    %v403 = vshrl.u32 %v402, 7
    %v404 = vsub.s32 5, %v403
    %v405 = vrot.slane %v380, %v404
    %v406 = vlaneseq
    %v407 = vshrl.u32 %v406, 7
    %v408 = vsub.s32 6, %v407
    %v409 = vrot.slane %v380, %v408
    %v410 = vlaneseq
    %v411 = vshrl.u32 %v410, 7
    %v412 = vsub.s32 7, %v411
    %v413 = vrot.slane %v380, %v412
    %v414 = vlaneseq
    %v415 = vshrl.u32 %v414, 7
    %v416 = vsub.s32 0, %v415
    %v417 = vrot.slane %v381, %v416
    %v418 = vlaneseq
    %v419 = vshrl.u32 %v418, 7
    %v420 = vsub.s32 1, %v419
    %v421 = vrot.slane %v381, %v420
    %v422 = vlaneseq
    %v423 = vshrl.u32 %v422, 7
    %v424 = vsub.s32 2, %v423
    %v425 = vrot.slane %v381, %v424
    %v430 = vunpack.c.l.b16 %v57
    %v431 = vunpack.c.l.b16 %v58
    %v432 = vunpack.c.l.b16 %v59
    %v433 = vunpack.c.l.b16 %v60
    %v434 = vpack.c.b16 %v431, %v430
    %v435 = vpack.c.b16 %v433, %v432
    %vm438 = vcmask 261120
    %v440 = vsel %vm438, 0, 0
    %442 = vmatprep.subr.bf16.mxu0 0
    %443 = vmatpush1.bf16.msra.mxu0 %v434
    %444 = vmatprep.subr.bf16.mxu0 0
    %445 = vmatpush1.bf16.msra.mxu0 %v435
    %446 = vmatprep.subr.bf16.mxu0 0
    %447 = vmatpush1.bf16.msra.mxu0 0
    %448 = vmatprep.subr.bf16.mxu0 0
    %449 = vmatpush1.bf16.msra.mxu0 0
    %450 = vmatprep.subr.bf16.mxu0 0
    %451 = vmatpush1.bf16.msra.mxu0 0
    %452 = vmatprep.subr.bf16.mxu0 0
    %453 = vmatpush1.bf16.msra.mxu0 0
    %454 = vmatprep.subr.bf16.mxu0 0
    %455 = vmatpush1.bf16.msra.mxu0 0
    %456 = vmatprep.subr.bf16.mxu0 0
    %457 = vmatpush1.bf16.msra.mxu0 0
    %458 = vmatprep.subr.bf16.mxu0 0
    %459 = vmatpush1.bf16.msra.mxu0 0
    %460 = vmatprep.subr.bf16.mxu0 0
    %461 = vmatpush1.bf16.msra.mxu0 0
    %462 = vmatprep.subr.bf16.mxu0 0
    %463 = vmatpush1.bf16.msra.mxu0 0
    %464 = vmatprep.subr.bf16.mxu0 0
    %465 = vmatpush1.bf16.msra.mxu0 0
    %466 = vmatprep.subr.bf16.mxu0 0
    %467 = vmatpush1.bf16.msra.mxu0 0
    %468 = vmatprep.subr.bf16.mxu0 0
    %469 = vmatpush1.bf16.msra.mxu0 0
    %470 = vmatprep.subr.bf16.mxu0 0
    %471 = vmatpush1.bf16.msra.mxu0 0
    %472 = vmatprep.subr.bf16.mxu0 0
    %473 = vmatpush1.bf16.msra.mxu0 0
    %474 = vmatprep.mubr.bf16.mxu0 0
    %475 = vmatmul.mubr.bf16.gmra.mrb[0].mxu0 %v440
    %v476 = vpop.f32.mrb[0].mxu0
    %v477 = vadd.f32 0.0, %v476
    %v478 = vpop.f32.mrb[0].mxu0
    %v479 = vpop.f32.mrb[0].mxu0
    %v480 = vpop.f32.mrb[0].mxu0
    %481 = vdwg.mxu0
    %v482 = vadd.f32 %v245, %v477
    %v483 = vxor.u32 %v482, 2147483648
    %v484 = vmul.f32 %v483, 1.442695
    %v485 = vpow.pop %v484
    %v486 = vadd.f32 %v485, 1.0
    %v487 = vrcp.pop %v486
    %v488 = vmul.f32 1.0, %v487
    %490 = vrot.lane.b32.xlu0 %v482, 32
    %v491 = vpop.permute.xlu0 %490
    %v493 = vmul.f32 %v488, %v491
    %495 = vrot.lane.b32.xlu0 %v493, 64
    %v496 = vpop.permute.xlu0 %495
    %v498 = vadd.f32 %v482, %v496
    %v499 = vtanh.pop %v498
    %v500 = vsub.f32 1.0, %v488
    %502 = vrot.lane.b32.xlu0 %v499, 96
    %v503 = vpop.permute.xlu0 %502
    %v505 = vmul.f32 %v500, %v503
    %v506 = vmul.f32 %v488, 0.0
    %v507 = vadd.f32 %v505, %v506
    %v508 = vpack.c.bf16 %v507, %v507
    %510 = vrot.lane.b32.xlu0 %v508, 96
    %v511 = vpop.permute.xlu0 %510
    %v516 = vunpack.c.l.b16 %v65
    %v517 = vunpack.c.l.b16 %v66
    %v518 = vunpack.c.l.b16 %v67
    %v519 = vunpack.c.l.b16 %v68
    %v520 = vpack.c.b16 %v517, %v516
    %v521 = vpack.c.b16 %v519, %v518
    %v525 = vsel %vm438, %v511, 0
    %527 = vmatprep.subr.bf16.mxu0 0
    %528 = vmatpush1.bf16.msra.mxu0 %v520
    %529 = vmatprep.subr.bf16.mxu0 0
    %530 = vmatpush1.bf16.msra.mxu0 %v521
    %531 = vmatprep.subr.bf16.mxu0 0
    %532 = vmatpush1.bf16.msra.mxu0 0
    %533 = vmatprep.subr.bf16.mxu0 0
    %534 = vmatpush1.bf16.msra.mxu0 0
    %535 = vmatprep.subr.bf16.mxu0 0
    %536 = vmatpush1.bf16.msra.mxu0 0
    %537 = vmatprep.subr.bf16.mxu0 0
    %538 = vmatpush1.bf16.msra.mxu0 0
    %539 = vmatprep.subr.bf16.mxu0 0
    %540 = vmatpush1.bf16.msra.mxu0 0
    %541 = vmatprep.subr.bf16.mxu0 0
    %542 = vmatpush1.bf16.msra.mxu0 0
    %543 = vmatprep.subr.bf16.mxu0 0
    %544 = vmatpush1.bf16.msra.mxu0 0
    %545 = vmatprep.subr.bf16.mxu0 0
    %546 = vmatpush1.bf16.msra.mxu0 0
    %547 = vmatprep.subr.bf16.mxu0 0
    %548 = vmatpush1.bf16.msra.mxu0 0
    %549 = vmatprep.subr.bf16.mxu0 0
    %550 = vmatpush1.bf16.msra.mxu0 0
    %551 = vmatprep.subr.bf16.mxu0 0
    %552 = vmatpush1.bf16.msra.mxu0 0
    %553 = vmatprep.subr.bf16.mxu0 0
    %554 = vmatpush1.bf16.msra.mxu0 0
    %555 = vmatprep.subr.bf16.mxu0 0
    %556 = vmatpush1.bf16.msra.mxu0 0
    %557 = vmatprep.subr.bf16.mxu0 0
    %558 = vmatpush1.bf16.msra.mxu0 0
    %559 = vmatprep.mubr.bf16.mxu0 0
    %560 = vmatmul.mubr.bf16.gmra.mrb[0].mxu0 %v525
    %v561 = vpop.f32.mrb[0].mxu0
    %v562 = vadd.f32 %v385, %v561
    %v563 = vpop.f32.mrb[0].mxu0
    %v564 = vpop.f32.mrb[0].mxu0
    %v565 = vpop.f32.mrb[0].mxu0
    %566 = vdwg.mxu0
    %v567 = vxor.u32 %v562, 2147483648
    %v568 = vmul.f32 %v567, 1.442695
    %v569 = vpow.pop %v568
    %v570 = vadd.f32 %v569, 1.0
    %v571 = vrcp.pop %v570
    %v572 = vmul.f32 1.0, %v571
    %574 = vrot.lane.b32.xlu0 %v562, 96
    %v575 = vpop.permute.xlu0 %574
    %v577 = vmul.f32 %v572, %v575
    %v578 = vpack.c.bf16 %v577, %v577
    %v580 = vsel %vm438, %v578, 0
    %582 = vmatprep.subr.bf16.mxu0 0
    %583 = vmatpush1.bf16.msra.mxu0 %v434
    %584 = vmatprep.subr.bf16.mxu0 0
    %585 = vmatpush1.bf16.msra.mxu0 %v435
    %586 = vmatprep.subr.bf16.mxu0 0
    %587 = vmatpush1.bf16.msra.mxu0 0
    %588 = vmatprep.subr.bf16.mxu0 0
    %589 = vmatpush1.bf16.msra.mxu0 0
    %590 = vmatprep.subr.bf16.mxu0 0
    %591 = vmatpush1.bf16.msra.mxu0 0
    %592 = vmatprep.subr.bf16.mxu0 0
    %593 = vmatpush1.bf16.msra.mxu0 0
    %594 = vmatprep.subr.bf16.mxu0 0
    %595 = vmatpush1.bf16.msra.mxu0 0
    %596 = vmatprep.subr.bf16.mxu0 0
    %597 = vmatpush1.bf16.msra.mxu0 0
    %598 = vmatprep.subr.bf16.mxu0 0
    %599 = vmatpush1.bf16.msra.mxu0 0
    %600 = vmatprep.subr.bf16.mxu0 0
    %601 = vmatpush1.bf16.msra.mxu0 0
    %602 = vmatprep.subr.bf16.mxu0 0
    %603 = vmatpush1.bf16.msra.mxu0 0
    %604 = vmatprep.subr.bf16.mxu0 0
    %605 = vmatpush1.bf16.msra.mxu0 0
    %606 = vmatprep.subr.bf16.mxu0 0
    %607 = vmatpush1.bf16.msra.mxu0 0
    %608 = vmatprep.subr.bf16.mxu0 0
    %609 = vmatpush1.bf16.msra.mxu0 0
    %610 = vmatprep.subr.bf16.mxu0 0
    %611 = vmatpush1.bf16.msra.mxu0 0
    %612 = vmatprep.subr.bf16.mxu0 0
    %613 = vmatpush1.bf16.msra.mxu0 0
    %614 = vmatprep.mubr.bf16.mxu0 0
    %615 = vmatmul.mubr.bf16.gmra.mrb[0].mxu0 %v580
    %v616 = vpop.f32.mrb[0].mxu0
    %v617 = vadd.f32 0.0, %v616
    %v618 = vpop.f32.mrb[0].mxu0
    %v619 = vpop.f32.mrb[0].mxu0
    %v620 = vpop.f32.mrb[0].mxu0
    %621 = vdwg.mxu0
    %v622 = vadd.f32 %v248, %v617
    %v623 = vxor.u32 %v622, 2147483648
    %v624 = vmul.f32 %v623, 1.442695
    %v625 = vpow.pop %v624
    %v626 = vadd.f32 %v625, 1.0
    %v627 = vrcp.pop %v626
    %v628 = vmul.f32 1.0, %v627
    %630 = vrot.lane.b32.xlu0 %v622, 32
    %v631 = vpop.permute.xlu0 %630
    %v633 = vmul.f32 %v628, %v631
    %635 = vrot.lane.b32.xlu0 %v633, 64
    %v636 = vpop.permute.xlu0 %635
    %v638 = vadd.f32 %v622, %v636
    %v639 = vtanh.pop %v638
    %v640 = vsub.f32 1.0, %v628
    %642 = vrot.lane.b32.xlu0 %v639, 96
    %v643 = vpop.permute.xlu0 %642
    %v645 = vmul.f32 %v640, %v643
    %647 = vrot.lane.b32.xlu0 %v577, 32
    %v648 = vpop.permute.xlu0 %647
    %v650 = vmul.f32 %v628, %v648
    %v651 = vadd.f32 %v645, %v650
    %v652 = vpack.c.bf16 %v651, %v651
    %654 = vrot.lane.b32.xlu0 %v652, 96
    %v655 = vpop.permute.xlu0 %654
    %v657 = vsel %vm438, %v655, 0
    %659 = vmatprep.subr.bf16.mxu0 0
    %660 = vmatpush1.bf16.msra.mxu0 %v520
    %661 = vmatprep.subr.bf16.mxu0 0
    %662 = vmatpush1.bf16.msra.mxu0 %v521
    %663 = vmatprep.subr.bf16.mxu0 0
    %664 = vmatpush1.bf16.msra.mxu0 0
    %665 = vmatprep.subr.bf16.mxu0 0
    %666 = vmatpush1.bf16.msra.mxu0 0
    %667 = vmatprep.subr.bf16.mxu0 0
    %668 = vmatpush1.bf16.msra.mxu0 0
    %669 = vmatprep.subr.bf16.mxu0 0
    %670 = vmatpush1.bf16.msra.mxu0 0
    %671 = vmatprep.subr.bf16.mxu0 0
    %672 = vmatpush1.bf16.msra.mxu0 0
    %673 = vmatprep.subr.bf16.mxu0 0
    %674 = vmatpush1.bf16.msra.mxu0 0
    %675 = vmatprep.subr.bf16.mxu0 0
    %676 = vmatpush1.bf16.msra.mxu0 0
    %677 = vmatprep.subr.bf16.mxu0 0
    %678 = vmatpush1.bf16.msra.mxu0 0
    %679 = vmatprep.subr.bf16.mxu0 0
    %680 = vmatpush1.bf16.msra.mxu0 0
    %681 = vmatprep.subr.bf16.mxu0 0
    %682 = vmatpush1.bf16.msra.mxu0 0
    %683 = vmatprep.subr.bf16.mxu0 0
    %684 = vmatpush1.bf16.msra.mxu0 0
    %685 = vmatprep.subr.bf16.mxu0 0
    %686 = vmatpush1.bf16.msra.mxu0 0
    %687 = vmatprep.subr.bf16.mxu0 0
    %688 = vmatpush1.bf16.msra.mxu0 0
    %689 = vmatprep.subr.bf16.mxu0 0
    %690 = vmatpush1.bf16.msra.mxu0 0
    %691 = vmatprep.mubr.bf16.mxu0 0
    %692 = vmatmul.mubr.bf16.gmra.mrb[0].mxu0 %v657
    %v693 = vpop.f32.mrb[0].mxu0
    %v694 = vadd.f32 %v389, %v693
    %v695 = vpop.f32.mrb[0].mxu0
    %v696 = vpop.f32.mrb[0].mxu0
    %v697 = vpop.f32.mrb[0].mxu0
    %698 = vdwg.mxu0
    %v699 = vxor.u32 %v694, 2147483648
    %v700 = vmul.f32 %v699, 1.442695
    %v701 = vpow.pop %v700
    %v702 = vadd.f32 %v701, 1.0
    %v703 = vrcp.pop %v702
    %v704 = vmul.f32 1.0, %v703
    %706 = vrot.lane.b32.xlu0 %v694, 96
    %v707 = vpop.permute.xlu0 %706
    %v709 = vmul.f32 %v704, %v707
    %v710 = vpack.c.bf16 %v709, %v709
    %v712 = vsel %vm438, %v710, 0
    %714 = vmatprep.subr.bf16.mxu0 0
    %715 = vmatpush1.bf16.msra.mxu0 %v434
    %716 = vmatprep.subr.bf16.mxu0 0
    %717 = vmatpush1.bf16.msra.mxu0 %v435
    %718 = vmatprep.subr.bf16.mxu0 0
    %719 = vmatpush1.bf16.msra.mxu0 0
    %720 = vmatprep.subr.bf16.mxu0 0
    %721 = vmatpush1.bf16.msra.mxu0 0
    %722 = vmatprep.subr.bf16.mxu0 0
    %723 = vmatpush1.bf16.msra.mxu0 0
    %724 = vmatprep.subr.bf16.mxu0 0
    %725 = vmatpush1.bf16.msra.mxu0 0
    %726 = vmatprep.subr.bf16.mxu0 0
    %727 = vmatpush1.bf16.msra.mxu0 0
    %728 = vmatprep.subr.bf16.mxu0 0
    %729 = vmatpush1.bf16.msra.mxu0 0
    %730 = vmatprep.subr.bf16.mxu0 0
    %731 = vmatpush1.bf16.msra.mxu0 0
    %732 = vmatprep.subr.bf16.mxu0 0
    %733 = vmatpush1.bf16.msra.mxu0 0
    %734 = vmatprep.subr.bf16.mxu0 0
    %735 = vmatpush1.bf16.msra.mxu0 0
    %736 = vmatprep.subr.bf16.mxu0 0
    %737 = vmatpush1.bf16.msra.mxu0 0
    %738 = vmatprep.subr.bf16.mxu0 0
    %739 = vmatpush1.bf16.msra.mxu0 0
    %740 = vmatprep.subr.bf16.mxu0 0
    %741 = vmatpush1.bf16.msra.mxu0 0
    %742 = vmatprep.subr.bf16.mxu0 0
    %743 = vmatpush1.bf16.msra.mxu0 0
    %744 = vmatprep.subr.bf16.mxu0 0
    %745 = vmatpush1.bf16.msra.mxu0 0
    %746 = vmatprep.mubr.bf16.mxu0 0
    %747 = vmatmul.mubr.bf16.gmra.mrb[0].mxu0 %v712
    %v748 = vpop.f32.mrb[0].mxu0
    %v749 = vadd.f32 0.0, %v748
    %v750 = vpop.f32.mrb[0].mxu0
    %v751 = vpop.f32.mrb[0].mxu0
    %v752 = vpop.f32.mrb[0].mxu0
    %753 = vdwg.mxu0
    %v754 = vadd.f32 %v253, %v749
    %v755 = vxor.u32 %v754, 2147483648
    %v756 = vmul.f32 %v755, 1.442695
    %v757 = vpow.pop %v756
    %v758 = vadd.f32 %v757, 1.0
    %v759 = vrcp.pop %v758
    %v760 = vmul.f32 1.0, %v759
    %762 = vrot.lane.b32.xlu0 %v754, 32
    %v763 = vpop.permute.xlu0 %762
    %v765 = vmul.f32 %v760, %v763
    %767 = vrot.lane.b32.xlu0 %v765, 64
    %v768 = vpop.permute.xlu0 %767
    %v770 = vadd.f32 %v754, %v768
    %v771 = vtanh.pop %v770
    %v772 = vsub.f32 1.0, %v760
    %774 = vrot.lane.b32.xlu0 %v771, 96
    %v775 = vpop.permute.xlu0 %774
    %v777 = vmul.f32 %v772, %v775
    %779 = vrot.lane.b32.xlu0 %v709, 32
    %v780 = vpop.permute.xlu0 %779
    %v782 = vmul.f32 %v760, %v780
    %v783 = vadd.f32 %v777, %v782
    %v784 = vpack.c.bf16 %v783, %v783
    %786 = vrot.lane.b32.xlu0 %v784, 96
    %v787 = vpop.permute.xlu0 %786
    %v789 = vsel %vm438, %v787, 0
    %791 = vmatprep.subr.bf16.mxu0 0
    %792 = vmatpush1.bf16.msra.mxu0 %v520
    %793 = vmatprep.subr.bf16.mxu0 0
    %794 = vmatpush1.bf16.msra.mxu0 %v521
    %795 = vmatprep.subr.bf16.mxu0 0
    %796 = vmatpush1.bf16.msra.mxu0 0
    %797 = vmatprep.subr.bf16.mxu0 0
    %798 = vmatpush1.bf16.msra.mxu0 0
    %799 = vmatprep.subr.bf16.mxu0 0
    %800 = vmatpush1.bf16.msra.mxu0 0
    %801 = vmatprep.subr.bf16.mxu0 0
    %802 = vmatpush1.bf16.msra.mxu0 0
    %803 = vmatprep.subr.bf16.mxu0 0
    %804 = vmatpush1.bf16.msra.mxu0 0
    %805 = vmatprep.subr.bf16.mxu0 0
    %806 = vmatpush1.bf16.msra.mxu0 0
    %807 = vmatprep.subr.bf16.mxu0 0
    %808 = vmatpush1.bf16.msra.mxu0 0
    %809 = vmatprep.subr.bf16.mxu0 0
    %810 = vmatpush1.bf16.msra.mxu0 0
    %811 = vmatprep.subr.bf16.mxu0 0
    %812 = vmatpush1.bf16.msra.mxu0 0
    %813 = vmatprep.subr.bf16.mxu0 0
    %814 = vmatpush1.bf16.msra.mxu0 0
    %815 = vmatprep.subr.bf16.mxu0 0
    %816 = vmatpush1.bf16.msra.mxu0 0
    %817 = vmatprep.subr.bf16.mxu0 0
    %818 = vmatpush1.bf16.msra.mxu0 0
    %819 = vmatprep.subr.bf16.mxu0 0
    %820 = vmatpush1.bf16.msra.mxu0 0
    %821 = vmatprep.subr.bf16.mxu0 0
    %822 = vmatpush1.bf16.msra.mxu0 0
    %823 = vmatprep.mubr.bf16.mxu0 0
    %824 = vmatmul.mubr.bf16.gmra.mrb[0].mxu0 %v789
    %v825 = vpop.f32.mrb[0].mxu0
    %v826 = vadd.f32 %v393, %v825
    %v827 = vpop.f32.mrb[0].mxu0
    %v828 = vpop.f32.mrb[0].mxu0
    %v829 = vpop.f32.mrb[0].mxu0
    %830 = vdwg.mxu0
    %v831 = vxor.u32 %v826, 2147483648
    %v832 = vmul.f32 %v831, 1.442695
    %v833 = vpow.pop %v832
    %v834 = vadd.f32 %v833, 1.0
    %v835 = vrcp.pop %v834
    %v836 = vmul.f32 1.0, %v835
    %838 = vrot.lane.b32.xlu0 %v826, 96
    %v839 = vpop.permute.xlu0 %838
    %v841 = vmul.f32 %v836, %v839
    %v842 = vpack.c.bf16 %v841, %v841
    %v844 = vsel %vm438, %v842, 0
    %846 = vmatprep.subr.bf16.mxu0 0
    %847 = vmatpush1.bf16.msra.mxu0 %v434
    %848 = vmatprep.subr.bf16.mxu0 0
    %849 = vmatpush1.bf16.msra.mxu0 %v435
    %850 = vmatprep.subr.bf16.mxu0 0
    %851 = vmatpush1.bf16.msra.mxu0 0
    %852 = vmatprep.subr.bf16.mxu0 0
    %853 = vmatpush1.bf16.msra.mxu0 0
    %854 = vmatprep.subr.bf16.mxu0 0
    %855 = vmatpush1.bf16.msra.mxu0 0
    %856 = vmatprep.subr.bf16.mxu0 0
    %857 = vmatpush1.bf16.msra.mxu0 0
    %858 = vmatprep.subr.bf16.mxu0 0
    %859 = vmatpush1.bf16.msra.mxu0 0
    %860 = vmatprep.subr.bf16.mxu0 0
    %861 = vmatpush1.bf16.msra.mxu0 0
    %862 = vmatprep.subr.bf16.mxu0 0
    %863 = vmatpush1.bf16.msra.mxu0 0
    %864 = vmatprep.subr.bf16.mxu0 0
    %865 = vmatpush1.bf16.msra.mxu0 0
    %866 = vmatprep.subr.bf16.mxu0 0
    %867 = vmatpush1.bf16.msra.mxu0 0
    %868 = vmatprep.subr.bf16.mxu0 0
    %869 = vmatpush1.bf16.msra.mxu0 0
    %870 = vmatprep.subr.bf16.mxu0 0
    %871 = vmatpush1.bf16.msra.mxu0 0
    %872 = vmatprep.subr.bf16.mxu0 0
    %873 = vmatpush1.bf16.msra.mxu0 0
    %874 = vmatprep.subr.bf16.mxu0 0
    %875 = vmatpush1.bf16.msra.mxu0 0
    %876 = vmatprep.subr.bf16.mxu0 0
    %877 = vmatpush1.bf16.msra.mxu0 0
    %878 = vmatprep.mubr.bf16.mxu0 0
    %879 = vmatmul.mubr.bf16.gmra.mrb[0].mxu0 %v844
    %v880 = vpop.f32.mrb[0].mxu0
    %v881 = vadd.f32 0.0, %v880
    %v882 = vpop.f32.mrb[0].mxu0
    %v883 = vpop.f32.mrb[0].mxu0
    %v884 = vpop.f32.mrb[0].mxu0
    %885 = vdwg.mxu0
    %v886 = vadd.f32 %v256, %v881
    %v887 = vxor.u32 %v886, 2147483648
    %v888 = vmul.f32 %v887, 1.442695
    %v889 = vpow.pop %v888
    %v890 = vadd.f32 %v889, 1.0
    %v891 = vrcp.pop %v890
    %v892 = vmul.f32 1.0, %v891
    %894 = vrot.lane.b32.xlu0 %v886, 32
    %v895 = vpop.permute.xlu0 %894
    %v897 = vmul.f32 %v892, %v895
    %899 = vrot.lane.b32.xlu0 %v897, 64
    %v900 = vpop.permute.xlu0 %899
    %v902 = vadd.f32 %v886, %v900
    %v903 = vtanh.pop %v902
    %v904 = vsub.f32 1.0, %v892
    %906 = vrot.lane.b32.xlu0 %v903, 96
    %v907 = vpop.permute.xlu0 %906
    %v909 = vmul.f32 %v904, %v907
    %911 = vrot.lane.b32.xlu0 %v841, 32
    %v912 = vpop.permute.xlu0 %911
    %v914 = vmul.f32 %v892, %v912
    %v915 = vadd.f32 %v909, %v914
    %v916 = vadd.f32 %v261, %v749
    %v917 = vxor.u32 %v916, 2147483648
    %v918 = vmul.f32 %v917, 1.442695
    %v919 = vpow.pop %v918
    %v920 = vadd.f32 %v919, 1.0
    %v921 = vrcp.pop %v920
    %v922 = vmul.f32 1.0, %v921
    %924 = vrot.lane.b32.xlu0 %v916, 32
    %v925 = vpop.permute.xlu0 %924
    %v927 = vmul.f32 %v922, %v925
    %929 = vrot.lane.b32.xlu0 %v927, 64
    %v930 = vpop.permute.xlu0 %929
    %v932 = vadd.f32 %v916, %v930
    %v933 = vtanh.pop %v932
    %v934 = vsub.f32 1.0, %v922
    %936 = vrot.lane.b32.xlu0 %v933, 96
    %v937 = vpop.permute.xlu0 %936
    %v939 = vmul.f32 %v934, %v937
    %v940 = vmul.f32 %v922, %v780
    %v941 = vadd.f32 %v939, %v940
    %v942 = vpack.c.bf16 %v915, %v915
    %944 = vrot.lane.b32.xlu0 %v942, 96
    %v945 = vpop.permute.xlu0 %944
    %v947 = vsel %vm438, %v945, 0
    %949 = vmatprep.subr.bf16.mxu0 0
    %950 = vmatpush1.bf16.msra.mxu0 %v520
    %951 = vmatprep.subr.bf16.mxu0 0
    %952 = vmatpush1.bf16.msra.mxu0 %v521
    %953 = vmatprep.subr.bf16.mxu0 0
    %954 = vmatpush1.bf16.msra.mxu0 0
    %955 = vmatprep.subr.bf16.mxu0 0
    %956 = vmatpush1.bf16.msra.mxu0 0
    %957 = vmatprep.subr.bf16.mxu0 0
    %958 = vmatpush1.bf16.msra.mxu0 0
    %959 = vmatprep.subr.bf16.mxu0 0
    %960 = vmatpush1.bf16.msra.mxu0 0
    %961 = vmatprep.subr.bf16.mxu0 0
    %962 = vmatpush1.bf16.msra.mxu0 0
    %963 = vmatprep.subr.bf16.mxu0 0
    %964 = vmatpush1.bf16.msra.mxu0 0
    %965 = vmatprep.subr.bf16.mxu0 0
    %966 = vmatpush1.bf16.msra.mxu0 0
    %967 = vmatprep.subr.bf16.mxu0 0
    %968 = vmatpush1.bf16.msra.mxu0 0
    %969 = vmatprep.subr.bf16.mxu0 0
    %970 = vmatpush1.bf16.msra.mxu0 0
    %971 = vmatprep.subr.bf16.mxu0 0
    %972 = vmatpush1.bf16.msra.mxu0 0
    %973 = vmatprep.subr.bf16.mxu0 0
    %974 = vmatpush1.bf16.msra.mxu0 0
    %975 = vmatprep.subr.bf16.mxu0 0
    %976 = vmatpush1.bf16.msra.mxu0 0
    %977 = vmatprep.subr.bf16.mxu0 0
    %978 = vmatpush1.bf16.msra.mxu0 0
    %979 = vmatprep.subr.bf16.mxu0 0
    %980 = vmatpush1.bf16.msra.mxu0 0
    %981 = vmatprep.mubr.bf16.mxu0 0
    %982 = vmatmul.mubr.bf16.gmra.mrb[0].mxu0 %v947
    %v983 = vpop.f32.mrb[0].mxu0
    %v984 = vadd.f32 %v397, %v983
    %v985 = vpop.f32.mrb[0].mxu0
    %v986 = vpop.f32.mrb[0].mxu0
    %v987 = vpop.f32.mrb[0].mxu0
    %988 = vdwg.mxu0
    %v989 = vxor.u32 %v984, 2147483648
    %v990 = vmul.f32 %v989, 1.442695
    %v991 = vpow.pop %v990
    %v992 = vadd.f32 %v991, 1.0
    %v993 = vrcp.pop %v992
    %v994 = vmul.f32 1.0, %v993
    %996 = vrot.lane.b32.xlu0 %v984, 96
    %v997 = vpop.permute.xlu0 %996
    %v999 = vmul.f32 %v994, %v997
    %v1000 = vpack.c.bf16 %v999, %v999
    %v1002 = vsel %vm438, %v1000, 0
    %1004 = vmatprep.subr.bf16.mxu0 0
    %1005 = vmatpush1.bf16.msra.mxu0 %v434
    %1006 = vmatprep.subr.bf16.mxu0 0
    %1007 = vmatpush1.bf16.msra.mxu0 %v435
    %1008 = vmatprep.subr.bf16.mxu0 0
    %1009 = vmatpush1.bf16.msra.mxu0 0
    %1010 = vmatprep.subr.bf16.mxu0 0
    %1011 = vmatpush1.bf16.msra.mxu0 0
    %1012 = vmatprep.subr.bf16.mxu0 0
    %1013 = vmatpush1.bf16.msra.mxu0 0
    %1014 = vmatprep.subr.bf16.mxu0 0
    %1015 = vmatpush1.bf16.msra.mxu0 0
    %1016 = vmatprep.subr.bf16.mxu0 0
    %1017 = vmatpush1.bf16.msra.mxu0 0
    %1018 = vmatprep.subr.bf16.mxu0 0
    %1019 = vmatpush1.bf16.msra.mxu0 0
    %1020 = vmatprep.subr.bf16.mxu0 0
    %1021 = vmatpush1.bf16.msra.mxu0 0
    %1022 = vmatprep.subr.bf16.mxu0 0
    %1023 = vmatpush1.bf16.msra.mxu0 0
    %1024 = vmatprep.subr.bf16.mxu0 0
    %1025 = vmatpush1.bf16.msra.mxu0 0
    %1026 = vmatprep.subr.bf16.mxu0 0
    %1027 = vmatpush1.bf16.msra.mxu0 0
    %1028 = vmatprep.subr.bf16.mxu0 0
    %1029 = vmatpush1.bf16.msra.mxu0 0
    %1030 = vmatprep.subr.bf16.mxu0 0
    %1031 = vmatpush1.bf16.msra.mxu0 0
    %1032 = vmatprep.subr.bf16.mxu0 0
    %1033 = vmatpush1.bf16.msra.mxu0 0
    %1034 = vmatprep.subr.bf16.mxu0 0
    %1035 = vmatpush1.bf16.msra.mxu0 0
    %1036 = vmatprep.mubr.bf16.mxu0 0
    %1037 = vmatmul.mubr.bf16.gmra.mrb[0].mxu0 %v1002
    %v1038 = vpop.f32.mrb[0].mxu0
    %v1039 = vadd.f32 0.0, %v1038
    %v1040 = vpop.f32.mrb[0].mxu0
    %v1041 = vpop.f32.mrb[0].mxu0
    %v1042 = vpop.f32.mrb[0].mxu0
    %1043 = vdwg.mxu0
    %v1044 = vadd.f32 %v264, %v1039
    %v1045 = vxor.u32 %v1044, 2147483648
    %v1046 = vmul.f32 %v1045, 1.442695
    %v1047 = vpow.pop %v1046
    %v1048 = vadd.f32 %v1047, 1.0
    %v1049 = vrcp.pop %v1048
    %v1050 = vmul.f32 1.0, %v1049
    %1052 = vrot.lane.b32.xlu0 %v1044, 32
    %v1053 = vpop.permute.xlu0 %1052
    %v1055 = vmul.f32 %v1050, %v1053
    %1057 = vrot.lane.b32.xlu0 %v1055, 64
    %v1058 = vpop.permute.xlu0 %1057
    %v1060 = vadd.f32 %v1044, %v1058
    %v1061 = vtanh.pop %v1060
    %v1062 = vsub.f32 1.0, %v1050
    %1064 = vrot.lane.b32.xlu0 %v1061, 96
    %v1065 = vpop.permute.xlu0 %1064
    %v1067 = vmul.f32 %v1062, %v1065
    %1069 = vrot.lane.b32.xlu0 %v999, 32
    %v1070 = vpop.permute.xlu0 %1069
    %v1072 = vmul.f32 %v1050, %v1070
    %v1073 = vadd.f32 %v1067, %v1072
    %v1074 = vpack.c.bf16 %v941, %v941
    %1076 = vrot.lane.b32.xlu0 %v1074, 96
    %v1077 = vpop.permute.xlu0 %1076
    %v1079 = vsel %vm438, %v1077, 0
    %1081 = vmatprep.subr.bf16.mxu0 0
    %1082 = vmatpush1.bf16.msra.mxu0 %v520
    %1083 = vmatprep.subr.bf16.mxu0 0
    %1084 = vmatpush1.bf16.msra.mxu0 %v521
    %1085 = vmatprep.subr.bf16.mxu0 0
    %1086 = vmatpush1.bf16.msra.mxu0 0
    %1087 = vmatprep.subr.bf16.mxu0 0
    %1088 = vmatpush1.bf16.msra.mxu0 0
    %1089 = vmatprep.subr.bf16.mxu0 0
    %1090 = vmatpush1.bf16.msra.mxu0 0
    %1091 = vmatprep.subr.bf16.mxu0 0
    %1092 = vmatpush1.bf16.msra.mxu0 0
    %1093 = vmatprep.subr.bf16.mxu0 0
    %1094 = vmatpush1.bf16.msra.mxu0 0
    %1095 = vmatprep.subr.bf16.mxu0 0
    %1096 = vmatpush1.bf16.msra.mxu0 0
    %1097 = vmatprep.subr.bf16.mxu0 0
    %1098 = vmatpush1.bf16.msra.mxu0 0
    %1099 = vmatprep.subr.bf16.mxu0 0
    %1100 = vmatpush1.bf16.msra.mxu0 0
    %1101 = vmatprep.subr.bf16.mxu0 0
    %1102 = vmatpush1.bf16.msra.mxu0 0
    %1103 = vmatprep.subr.bf16.mxu0 0
    %1104 = vmatpush1.bf16.msra.mxu0 0
    %1105 = vmatprep.subr.bf16.mxu0 0
    %1106 = vmatpush1.bf16.msra.mxu0 0
    %1107 = vmatprep.subr.bf16.mxu0 0
    %1108 = vmatpush1.bf16.msra.mxu0 0
    %1109 = vmatprep.subr.bf16.mxu0 0
    %1110 = vmatpush1.bf16.msra.mxu0 0
    %1111 = vmatprep.subr.bf16.mxu0 0
    %1112 = vmatpush1.bf16.msra.mxu0 0
    %1113 = vmatprep.mubr.bf16.mxu0 0
    %1114 = vmatmul.mubr.bf16.gmra.mrb[0].mxu0 %v1079
    %v1115 = vpop.f32.mrb[0].mxu0
    %v1116 = vadd.f32 %v401, %v1115
    %v1117 = vpop.f32.mrb[0].mxu0
    %v1118 = vpop.f32.mrb[0].mxu0
    %v1119 = vpop.f32.mrb[0].mxu0
    %1120 = vdwg.mxu0
    %v1121 = vxor.u32 %v1116, 2147483648
    %v1122 = vmul.f32 %v1121, 1.442695
    %v1123 = vpow.pop %v1122
    %v1124 = vadd.f32 %v1123, 1.0
    %v1125 = vrcp.pop %v1124
    %v1126 = vmul.f32 1.0, %v1125
    %1128 = vrot.lane.b32.xlu0 %v1116, 96
    %v1129 = vpop.permute.xlu0 %1128
    %v1131 = vmul.f32 %v1126, %v1129
    %v1132 = vpack.c.bf16 %v1073, %v1073
    %1134 = vrot.lane.b32.xlu0 %v1132, 96
    %v1135 = vpop.permute.xlu0 %1134
    %v1137 = vsel %vm438, %v1135, 0
    %1139 = vmatprep.subr.bf16.mxu0 0
    %1140 = vmatpush1.bf16.msra.mxu0 %v520
    %1141 = vmatprep.subr.bf16.mxu0 0
    %1142 = vmatpush1.bf16.msra.mxu0 %v521
    %1143 = vmatprep.subr.bf16.mxu0 0
    %1144 = vmatpush1.bf16.msra.mxu0 0
    %1145 = vmatprep.subr.bf16.mxu0 0
    %1146 = vmatpush1.bf16.msra.mxu0 0
    %1147 = vmatprep.subr.bf16.mxu0 0
    %1148 = vmatpush1.bf16.msra.mxu0 0
    %1149 = vmatprep.subr.bf16.mxu0 0
    %1150 = vmatpush1.bf16.msra.mxu0 0
    %1151 = vmatprep.subr.bf16.mxu0 0
    %1152 = vmatpush1.bf16.msra.mxu0 0
    %1153 = vmatprep.subr.bf16.mxu0 0
    %1154 = vmatpush1.bf16.msra.mxu0 0
    %1155 = vmatprep.subr.bf16.mxu0 0
    %1156 = vmatpush1.bf16.msra.mxu0 0
    %1157 = vmatprep.subr.bf16.mxu0 0
    %1158 = vmatpush1.bf16.msra.mxu0 0
    %1159 = vmatprep.subr.bf16.mxu0 0
    %1160 = vmatpush1.bf16.msra.mxu0 0
    %1161 = vmatprep.subr.bf16.mxu0 0
    %1162 = vmatpush1.bf16.msra.mxu0 0
    %1163 = vmatprep.subr.bf16.mxu0 0
    %1164 = vmatpush1.bf16.msra.mxu0 0
    %1165 = vmatprep.subr.bf16.mxu0 0
    %1166 = vmatpush1.bf16.msra.mxu0 0
    %1167 = vmatprep.subr.bf16.mxu0 0
    %1168 = vmatpush1.bf16.msra.mxu0 0
    %1169 = vmatprep.subr.bf16.mxu0 0
    %1170 = vmatpush1.bf16.msra.mxu0 0
    %1171 = vmatprep.mubr.bf16.mxu0 0
    %1172 = vmatmul.mubr.bf16.gmra.mrb[0].mxu0 %v1137
    %v1173 = vpop.f32.mrb[0].mxu0
    %v1174 = vadd.f32 %v405, %v1173
    %v1175 = vpop.f32.mrb[0].mxu0
    %v1176 = vpop.f32.mrb[0].mxu0
    %v1177 = vpop.f32.mrb[0].mxu0
    %1178 = vdwg.mxu0
    %v1179 = vxor.u32 %v1174, 2147483648
    %v1180 = vmul.f32 %v1179, 1.442695
    %v1181 = vpow.pop %v1180
    %v1182 = vadd.f32 %v1181, 1.0
    %v1183 = vrcp.pop %v1182
    %v1184 = vmul.f32 1.0, %v1183
    %1186 = vrot.lane.b32.xlu0 %v1174, 96
    %v1187 = vpop.permute.xlu0 %1186
    %v1189 = vmul.f32 %v1184, %v1187
    %v1190 = vadd.f32 %v1131, %v1189
    %v1191 = vpack.c.bf16 %v1190, %v1190
    %v1193 = vsel %vm438, %v1191, 0
    %1195 = vmatprep.subr.bf16.mxu0 0
    %1196 = vmatpush1.bf16.msra.mxu0 %v434
    %1197 = vmatprep.subr.bf16.mxu0 0
    %1198 = vmatpush1.bf16.msra.mxu0 %v435
    %1199 = vmatprep.subr.bf16.mxu0 0
    %1200 = vmatpush1.bf16.msra.mxu0 0
    %1201 = vmatprep.subr.bf16.mxu0 0
    %1202 = vmatpush1.bf16.msra.mxu0 0
    %1203 = vmatprep.subr.bf16.mxu0 0
    %1204 = vmatpush1.bf16.msra.mxu0 0
    %1205 = vmatprep.subr.bf16.mxu0 0
    %1206 = vmatpush1.bf16.msra.mxu0 0
    %1207 = vmatprep.subr.bf16.mxu0 0
    %1208 = vmatpush1.bf16.msra.mxu0 0
    %1209 = vmatprep.subr.bf16.mxu0 0
    %1210 = vmatpush1.bf16.msra.mxu0 0
    %1211 = vmatprep.subr.bf16.mxu0 0
    %1212 = vmatpush1.bf16.msra.mxu0 0
    %1213 = vmatprep.subr.bf16.mxu0 0
    %1214 = vmatpush1.bf16.msra.mxu0 0
    %1215 = vmatprep.subr.bf16.mxu0 0
    %1216 = vmatpush1.bf16.msra.mxu0 0
    %1217 = vmatprep.subr.bf16.mxu0 0
    %1218 = vmatpush1.bf16.msra.mxu0 0
    %1219 = vmatprep.subr.bf16.mxu0 0
    %1220 = vmatpush1.bf16.msra.mxu0 0
    %1221 = vmatprep.subr.bf16.mxu0 0
    %1222 = vmatpush1.bf16.msra.mxu0 0
    %1223 = vmatprep.subr.bf16.mxu0 0
    %1224 = vmatpush1.bf16.msra.mxu0 0
    %1225 = vmatprep.subr.bf16.mxu0 0
    %1226 = vmatpush1.bf16.msra.mxu0 0
    %1227 = vmatprep.mubr.bf16.mxu0 0
    %1228 = vmatmul.mubr.bf16.gmra.mrb[0].mxu0 %v1193
    %v1229 = vpop.f32.mrb[0].mxu0
    %v1230 = vadd.f32 0.0, %v1229
    %v1231 = vpop.f32.mrb[0].mxu0
    %v1232 = vpop.f32.mrb[0].mxu0
    %v1233 = vpop.f32.mrb[0].mxu0
    %1234 = vdwg.mxu0
    %v1235 = vadd.f32 %v269, %v1230
    %v1236 = vxor.u32 %v1235, 2147483648
    %v1237 = vmul.f32 %v1236, 1.442695
    %v1238 = vpow.pop %v1237
    %v1239 = vadd.f32 %v1238, 1.0
    %v1240 = vrcp.pop %v1239
    %v1241 = vmul.f32 1.0, %v1240
    %1243 = vrot.lane.b32.xlu0 %v1235, 32
    %v1244 = vpop.permute.xlu0 %1243
    %v1246 = vmul.f32 %v1241, %v1244
    %1248 = vrot.lane.b32.xlu0 %v1246, 64
    %v1249 = vpop.permute.xlu0 %1248
    %v1251 = vadd.f32 %v1235, %v1249
    %v1252 = vtanh.pop %v1251
    %v1253 = vsub.f32 1.0, %v1241
    %1255 = vrot.lane.b32.xlu0 %v1252, 96
    %v1256 = vpop.permute.xlu0 %1255
    %v1258 = vmul.f32 %v1253, %v1256
    %1260 = vrot.lane.b32.xlu0 %v1190, 32
    %v1261 = vpop.permute.xlu0 %1260
    %v1263 = vmul.f32 %v1241, %v1261
    %v1264 = vadd.f32 %v1258, %v1263
    %v1265 = vadd.f32 %v272, %v749
    %v1266 = vxor.u32 %v1265, 2147483648
    %v1267 = vmul.f32 %v1266, 1.442695
    %v1268 = vpow.pop %v1267
    %v1269 = vadd.f32 %v1268, 1.0
    %v1270 = vrcp.pop %v1269
    %v1271 = vmul.f32 1.0, %v1270
    %1273 = vrot.lane.b32.xlu0 %v1265, 32
    %v1274 = vpop.permute.xlu0 %1273
    %v1276 = vmul.f32 %v1271, %v1274
    %1278 = vrot.lane.b32.xlu0 %v1276, 64
    %v1279 = vpop.permute.xlu0 %1278
    %v1281 = vadd.f32 %v1265, %v1279
    %v1282 = vtanh.pop %v1281
    %v1283 = vsub.f32 1.0, %v1271
    %1285 = vrot.lane.b32.xlu0 %v1282, 96
    %v1286 = vpop.permute.xlu0 %1285
    %v1288 = vmul.f32 %v1283, %v1286
    %v1289 = vmul.f32 %v1271, %v780
    %v1290 = vadd.f32 %v1288, %v1289
    %v1291 = vadd.f32 %v277, %v1039
    %v1292 = vxor.u32 %v1291, 2147483648
    %v1293 = vmul.f32 %v1292, 1.442695
    %v1294 = vpow.pop %v1293
    %v1295 = vadd.f32 %v1294, 1.0
    %v1296 = vrcp.pop %v1295
    %v1297 = vmul.f32 1.0, %v1296
    %1299 = vrot.lane.b32.xlu0 %v1291, 32
    %v1300 = vpop.permute.xlu0 %1299
    %v1302 = vmul.f32 %v1297, %v1300
    %1304 = vrot.lane.b32.xlu0 %v1302, 64
    %v1305 = vpop.permute.xlu0 %1304
    %v1307 = vadd.f32 %v1291, %v1305
    %v1308 = vtanh.pop %v1307
    %v1309 = vsub.f32 1.0, %v1297
    %1311 = vrot.lane.b32.xlu0 %v1308, 96
    %v1312 = vpop.permute.xlu0 %1311
    %v1314 = vmul.f32 %v1309, %v1312
    %v1315 = vmul.f32 %v1297, %v1070
    %v1316 = vadd.f32 %v1314, %v1315
    %v1317 = vpack.c.bf16 %v1264, %v1264
    %1319 = vrot.lane.b32.xlu0 %v1317, 96
    %v1320 = vpop.permute.xlu0 %1319
    %v1322 = vsel %vm438, %v1320, 0
    %1324 = vmatprep.subr.bf16.mxu0 0
    %1325 = vmatpush1.bf16.msra.mxu0 %v520
    %1326 = vmatprep.subr.bf16.mxu0 0
    %1327 = vmatpush1.bf16.msra.mxu0 %v521
    %1328 = vmatprep.subr.bf16.mxu0 0
    %1329 = vmatpush1.bf16.msra.mxu0 0
    %1330 = vmatprep.subr.bf16.mxu0 0
    %1331 = vmatpush1.bf16.msra.mxu0 0
    %1332 = vmatprep.subr.bf16.mxu0 0
    %1333 = vmatpush1.bf16.msra.mxu0 0
    %1334 = vmatprep.subr.bf16.mxu0 0
    %1335 = vmatpush1.bf16.msra.mxu0 0
    %1336 = vmatprep.subr.bf16.mxu0 0
    %1337 = vmatpush1.bf16.msra.mxu0 0
    %1338 = vmatprep.subr.bf16.mxu0 0
    %1339 = vmatpush1.bf16.msra.mxu0 0
    %1340 = vmatprep.subr.bf16.mxu0 0
    %1341 = vmatpush1.bf16.msra.mxu0 0
    %1342 = vmatprep.subr.bf16.mxu0 0
    %1343 = vmatpush1.bf16.msra.mxu0 0
    %1344 = vmatprep.subr.bf16.mxu0 0
    %1345 = vmatpush1.bf16.msra.mxu0 0
    %1346 = vmatprep.subr.bf16.mxu0 0
    %1347 = vmatpush1.bf16.msra.mxu0 0
    %1348 = vmatprep.subr.bf16.mxu0 0
    %1349 = vmatpush1.bf16.msra.mxu0 0
    %1350 = vmatprep.subr.bf16.mxu0 0
    %1351 = vmatpush1.bf16.msra.mxu0 0
    %1352 = vmatprep.subr.bf16.mxu0 0
    %1353 = vmatpush1.bf16.msra.mxu0 0
    %1354 = vmatprep.subr.bf16.mxu0 0
    %1355 = vmatpush1.bf16.msra.mxu0 0
    %1356 = vmatprep.mubr.bf16.mxu0 0
    %1357 = vmatmul.mubr.bf16.gmra.mrb[0].mxu0 %v1322
    %v1358 = vpop.f32.mrb[0].mxu0
    %v1359 = vadd.f32 %v409, %v1358
    %v1360 = vpop.f32.mrb[0].mxu0
    %v1361 = vpop.f32.mrb[0].mxu0
    %v1362 = vpop.f32.mrb[0].mxu0
    %1363 = vdwg.mxu0
    %v1364 = vxor.u32 %v1359, 2147483648
    %v1365 = vmul.f32 %v1364, 1.442695
    %v1366 = vpow.pop %v1365
    %v1367 = vadd.f32 %v1366, 1.0
    %v1368 = vrcp.pop %v1367
    %v1369 = vmul.f32 1.0, %v1368
    %1371 = vrot.lane.b32.xlu0 %v1359, 96
    %v1372 = vpop.permute.xlu0 %1371
    %v1374 = vmul.f32 %v1369, %v1372
    %v1375 = vpack.c.bf16 %v1374, %v1374
    %v1377 = vsel %vm438, %v1375, 0
    %1379 = vmatprep.subr.bf16.mxu0 0
    %1380 = vmatpush1.bf16.msra.mxu0 %v434
    %1381 = vmatprep.subr.bf16.mxu0 0
    %1382 = vmatpush1.bf16.msra.mxu0 %v435
    %1383 = vmatprep.subr.bf16.mxu0 0
    %1384 = vmatpush1.bf16.msra.mxu0 0
    %1385 = vmatprep.subr.bf16.mxu0 0
    %1386 = vmatpush1.bf16.msra.mxu0 0
    %1387 = vmatprep.subr.bf16.mxu0 0
    %1388 = vmatpush1.bf16.msra.mxu0 0
    %1389 = vmatprep.subr.bf16.mxu0 0
    %1390 = vmatpush1.bf16.msra.mxu0 0
    %1391 = vmatprep.subr.bf16.mxu0 0
    %1392 = vmatpush1.bf16.msra.mxu0 0
    %1393 = vmatprep.subr.bf16.mxu0 0
    %1394 = vmatpush1.bf16.msra.mxu0 0
    %1395 = vmatprep.subr.bf16.mxu0 0
    %1396 = vmatpush1.bf16.msra.mxu0 0
    %1397 = vmatprep.subr.bf16.mxu0 0
    %1398 = vmatpush1.bf16.msra.mxu0 0
    %1399 = vmatprep.subr.bf16.mxu0 0
    %1400 = vmatpush1.bf16.msra.mxu0 0
    %1401 = vmatprep.subr.bf16.mxu0 0
    %1402 = vmatpush1.bf16.msra.mxu0 0
    %1403 = vmatprep.subr.bf16.mxu0 0
    %1404 = vmatpush1.bf16.msra.mxu0 0
    %1405 = vmatprep.subr.bf16.mxu0 0
    %1406 = vmatpush1.bf16.msra.mxu0 0
    %1407 = vmatprep.subr.bf16.mxu0 0
    %1408 = vmatpush1.bf16.msra.mxu0 0
    %1409 = vmatprep.subr.bf16.mxu0 0
    %1410 = vmatpush1.bf16.msra.mxu0 0
    %1411 = vmatprep.mubr.bf16.mxu0 0
    %1412 = vmatmul.mubr.bf16.gmra.mrb[0].mxu0 %v1377
    %v1413 = vpop.f32.mrb[0].mxu0
    %v1414 = vadd.f32 0.0, %v1413
    %v1415 = vpop.f32.mrb[0].mxu0
    %v1416 = vpop.f32.mrb[0].mxu0
    %v1417 = vpop.f32.mrb[0].mxu0
    %1418 = vdwg.mxu0
    %v1419 = vadd.f32 %v280, %v1414
    %v1420 = vxor.u32 %v1419, 2147483648
    %v1421 = vmul.f32 %v1420, 1.442695
    %v1422 = vpow.pop %v1421
    %v1423 = vadd.f32 %v1422, 1.0
    %v1424 = vrcp.pop %v1423
    %v1425 = vmul.f32 1.0, %v1424
    %1427 = vrot.lane.b32.xlu0 %v1419, 32
    %v1428 = vpop.permute.xlu0 %1427
    %v1430 = vmul.f32 %v1425, %v1428
    %1432 = vrot.lane.b32.xlu0 %v1430, 64
    %v1433 = vpop.permute.xlu0 %1432
    %v1435 = vadd.f32 %v1419, %v1433
    %v1436 = vtanh.pop %v1435
    %v1437 = vsub.f32 1.0, %v1425
    %1439 = vrot.lane.b32.xlu0 %v1436, 96
    %v1440 = vpop.permute.xlu0 %1439
    %v1442 = vmul.f32 %v1437, %v1440
    %1444 = vrot.lane.b32.xlu0 %v1374, 32
    %v1445 = vpop.permute.xlu0 %1444
    %v1447 = vmul.f32 %v1425, %v1445
    %v1448 = vadd.f32 %v1442, %v1447
    %v1449 = vpack.c.bf16 %v1290, %v1290
    %1451 = vrot.lane.b32.xlu0 %v1449, 96
    %v1452 = vpop.permute.xlu0 %1451
    %v1454 = vsel %vm438, %v1452, 0
    %1456 = vmatprep.subr.bf16.mxu0 0
    %1457 = vmatpush1.bf16.msra.mxu0 %v520
    %1458 = vmatprep.subr.bf16.mxu0 0
    %1459 = vmatpush1.bf16.msra.mxu0 %v521
    %1460 = vmatprep.subr.bf16.mxu0 0
    %1461 = vmatpush1.bf16.msra.mxu0 0
    %1462 = vmatprep.subr.bf16.mxu0 0
    %1463 = vmatpush1.bf16.msra.mxu0 0
    %1464 = vmatprep.subr.bf16.mxu0 0
    %1465 = vmatpush1.bf16.msra.mxu0 0
    %1466 = vmatprep.subr.bf16.mxu0 0
    %1467 = vmatpush1.bf16.msra.mxu0 0
    %1468 = vmatprep.subr.bf16.mxu0 0
    %1469 = vmatpush1.bf16.msra.mxu0 0
    %1470 = vmatprep.subr.bf16.mxu0 0
    %1471 = vmatpush1.bf16.msra.mxu0 0
    %1472 = vmatprep.subr.bf16.mxu0 0
    %1473 = vmatpush1.bf16.msra.mxu0 0
    %1474 = vmatprep.subr.bf16.mxu0 0
    %1475 = vmatpush1.bf16.msra.mxu0 0
    %1476 = vmatprep.subr.bf16.mxu0 0
    %1477 = vmatpush1.bf16.msra.mxu0 0
    %1478 = vmatprep.subr.bf16.mxu0 0
    %1479 = vmatpush1.bf16.msra.mxu0 0
    %1480 = vmatprep.subr.bf16.mxu0 0
    %1481 = vmatpush1.bf16.msra.mxu0 0
    %1482 = vmatprep.subr.bf16.mxu0 0
    %1483 = vmatpush1.bf16.msra.mxu0 0
    %1484 = vmatprep.subr.bf16.mxu0 0
    %1485 = vmatpush1.bf16.msra.mxu0 0
    %1486 = vmatprep.subr.bf16.mxu0 0
    %1487 = vmatpush1.bf16.msra.mxu0 0
    %1488 = vmatprep.mubr.bf16.mxu0 0
    %1489 = vmatmul.mubr.bf16.gmra.mrb[0].mxu0 %v1454
    %v1490 = vpop.f32.mrb[0].mxu0
    %v1491 = vadd.f32 %v413, %v1490
    %v1492 = vpop.f32.mrb[0].mxu0
    %v1493 = vpop.f32.mrb[0].mxu0
    %v1494 = vpop.f32.mrb[0].mxu0
    %1495 = vdwg.mxu0
    %v1496 = vxor.u32 %v1491, 2147483648
    %v1497 = vmul.f32 %v1496, 1.442695
    %v1498 = vpow.pop %v1497
    %v1499 = vadd.f32 %v1498, 1.0
    %v1500 = vrcp.pop %v1499
    %v1501 = vmul.f32 1.0, %v1500
    %1503 = vrot.lane.b32.xlu0 %v1491, 96
    %v1504 = vpop.permute.xlu0 %1503
    %v1506 = vmul.f32 %v1501, %v1504
    %v1507 = vpack.c.bf16 %v1316, %v1316
    %1509 = vrot.lane.b32.xlu0 %v1507, 96
    %v1510 = vpop.permute.xlu0 %1509
    %v1512 = vsel %vm438, %v1510, 0
    %1514 = vmatprep.subr.bf16.mxu0 0
    %1515 = vmatpush1.bf16.msra.mxu0 %v520
    %1516 = vmatprep.subr.bf16.mxu0 0
    %1517 = vmatpush1.bf16.msra.mxu0 %v521
    %1518 = vmatprep.subr.bf16.mxu0 0
    %1519 = vmatpush1.bf16.msra.mxu0 0
    %1520 = vmatprep.subr.bf16.mxu0 0
    %1521 = vmatpush1.bf16.msra.mxu0 0
    %1522 = vmatprep.subr.bf16.mxu0 0
    %1523 = vmatpush1.bf16.msra.mxu0 0
    %1524 = vmatprep.subr.bf16.mxu0 0
    %1525 = vmatpush1.bf16.msra.mxu0 0
    %1526 = vmatprep.subr.bf16.mxu0 0
    %1527 = vmatpush1.bf16.msra.mxu0 0
    %1528 = vmatprep.subr.bf16.mxu0 0
    %1529 = vmatpush1.bf16.msra.mxu0 0
    %1530 = vmatprep.subr.bf16.mxu0 0
    %1531 = vmatpush1.bf16.msra.mxu0 0
    %1532 = vmatprep.subr.bf16.mxu0 0
    %1533 = vmatpush1.bf16.msra.mxu0 0
    %1534 = vmatprep.subr.bf16.mxu0 0
    %1535 = vmatpush1.bf16.msra.mxu0 0
    %1536 = vmatprep.subr.bf16.mxu0 0
    %1537 = vmatpush1.bf16.msra.mxu0 0
    %1538 = vmatprep.subr.bf16.mxu0 0
    %1539 = vmatpush1.bf16.msra.mxu0 0
    %1540 = vmatprep.subr.bf16.mxu0 0
    %1541 = vmatpush1.bf16.msra.mxu0 0
    %1542 = vmatprep.subr.bf16.mxu0 0
    %1543 = vmatpush1.bf16.msra.mxu0 0
    %1544 = vmatprep.subr.bf16.mxu0 0
    %1545 = vmatpush1.bf16.msra.mxu0 0
    %1546 = vmatprep.mubr.bf16.mxu0 0
    %1547 = vmatmul.mubr.bf16.gmra.mrb[0].mxu0 %v1512
    %v1548 = vpop.f32.mrb[0].mxu0
    %v1549 = vadd.f32 %v417, %v1548
    %v1550 = vpop.f32.mrb[0].mxu0
    %v1551 = vpop.f32.mrb[0].mxu0
    %v1552 = vpop.f32.mrb[0].mxu0
    %1553 = vdwg.mxu0
    %v1554 = vxor.u32 %v1549, 2147483648
    %v1555 = vmul.f32 %v1554, 1.442695
    %v1556 = vpow.pop %v1555
    %v1557 = vadd.f32 %v1556, 1.0
    %v1558 = vrcp.pop %v1557
    %v1559 = vmul.f32 1.0, %v1558
    %1561 = vrot.lane.b32.xlu0 %v1549, 96
    %v1562 = vpop.permute.xlu0 %1561
    %v1564 = vmul.f32 %v1559, %v1562
    %v1565 = vadd.f32 %v1506, %v1564
    %v1566 = vpack.c.bf16 %v1448, %v1448
    %1568 = vrot.lane.b32.xlu0 %v1566, 96
    %v1569 = vpop.permute.xlu0 %1568
    %v1571 = vsel %vm438, %v1569, 0
    %1573 = vmatprep.subr.bf16.mxu0 0
    %1574 = vmatpush1.bf16.msra.mxu0 %v520
    %1575 = vmatprep.subr.bf16.mxu0 0
    %1576 = vmatpush1.bf16.msra.mxu0 %v521
    %1577 = vmatprep.subr.bf16.mxu0 0
    %1578 = vmatpush1.bf16.msra.mxu0 0
    %1579 = vmatprep.subr.bf16.mxu0 0
    %1580 = vmatpush1.bf16.msra.mxu0 0
    %1581 = vmatprep.subr.bf16.mxu0 0
    %1582 = vmatpush1.bf16.msra.mxu0 0
    %1583 = vmatprep.subr.bf16.mxu0 0
    %1584 = vmatpush1.bf16.msra.mxu0 0
    %1585 = vmatprep.subr.bf16.mxu0 0
    %1586 = vmatpush1.bf16.msra.mxu0 0
    %1587 = vmatprep.subr.bf16.mxu0 0
    %1588 = vmatpush1.bf16.msra.mxu0 0
    %1589 = vmatprep.subr.bf16.mxu0 0
    %1590 = vmatpush1.bf16.msra.mxu0 0
    %1591 = vmatprep.subr.bf16.mxu0 0
    %1592 = vmatpush1.bf16.msra.mxu0 0
    %1593 = vmatprep.subr.bf16.mxu0 0
    %1594 = vmatpush1.bf16.msra.mxu0 0
    %1595 = vmatprep.subr.bf16.mxu0 0
    %1596 = vmatpush1.bf16.msra.mxu0 0
    %1597 = vmatprep.subr.bf16.mxu0 0
    %1598 = vmatpush1.bf16.msra.mxu0 0
    %1599 = vmatprep.subr.bf16.mxu0 0
    %1600 = vmatpush1.bf16.msra.mxu0 0
    %1601 = vmatprep.subr.bf16.mxu0 0
    %1602 = vmatpush1.bf16.msra.mxu0 0
    %1603 = vmatprep.subr.bf16.mxu0 0
    %1604 = vmatpush1.bf16.msra.mxu0 0
    %1605 = vmatprep.mubr.bf16.mxu0 0
    %1606 = vmatmul.mubr.bf16.gmra.mrb[0].mxu0 %v1571
    %v1607 = vpop.f32.mrb[0].mxu0
    %v1608 = vadd.f32 %v421, %v1607
    %v1609 = vpop.f32.mrb[0].mxu0
    %v1610 = vpop.f32.mrb[0].mxu0
    %v1611 = vpop.f32.mrb[0].mxu0
    %1612 = vdwg.mxu0
    %v1613 = vxor.u32 %v1608, 2147483648
    %v1614 = vmul.f32 %v1613, 1.442695
    %v1615 = vpow.pop %v1614
    %v1616 = vadd.f32 %v1615, 1.0
    %v1617 = vrcp.pop %v1616
    %v1618 = vmul.f32 1.0, %v1617
    %1620 = vrot.lane.b32.xlu0 %v1608, 96
    %v1621 = vpop.permute.xlu0 %1620
    %v1623 = vmul.f32 %v1618, %v1621
    %v1624 = vadd.f32 %v1565, %v1623
    %v1625 = vpack.c.bf16 %v1624, %v1624
    %v1627 = vsel %vm438, %v1625, 0
    %1629 = vmatprep.subr.bf16.mxu0 0
    %1630 = vmatpush1.bf16.msra.mxu0 %v434
    %1631 = vmatprep.subr.bf16.mxu0 0
    %1632 = vmatpush1.bf16.msra.mxu0 %v435
    %1633 = vmatprep.subr.bf16.mxu0 0
    %1634 = vmatpush1.bf16.msra.mxu0 0
    %1635 = vmatprep.subr.bf16.mxu0 0
    %1636 = vmatpush1.bf16.msra.mxu0 0
    %1637 = vmatprep.subr.bf16.mxu0 0
    %1638 = vmatpush1.bf16.msra.mxu0 0
    %1639 = vmatprep.subr.bf16.mxu0 0
    %1640 = vmatpush1.bf16.msra.mxu0 0
    %1641 = vmatprep.subr.bf16.mxu0 0
    %1642 = vmatpush1.bf16.msra.mxu0 0
    %1643 = vmatprep.subr.bf16.mxu0 0
    %1644 = vmatpush1.bf16.msra.mxu0 0
    %1645 = vmatprep.subr.bf16.mxu0 0
    %1646 = vmatpush1.bf16.msra.mxu0 0
    %1647 = vmatprep.subr.bf16.mxu0 0
    %1648 = vmatpush1.bf16.msra.mxu0 0
    %1649 = vmatprep.subr.bf16.mxu0 0
    %1650 = vmatpush1.bf16.msra.mxu0 0
    %1651 = vmatprep.subr.bf16.mxu0 0
    %1652 = vmatpush1.bf16.msra.mxu0 0
    %1653 = vmatprep.subr.bf16.mxu0 0
    %1654 = vmatpush1.bf16.msra.mxu0 0
    %1655 = vmatprep.subr.bf16.mxu0 0
    %1656 = vmatpush1.bf16.msra.mxu0 0
    %1657 = vmatprep.subr.bf16.mxu0 0
    %1658 = vmatpush1.bf16.msra.mxu0 0
    %1659 = vmatprep.subr.bf16.mxu0 0
    %1660 = vmatpush1.bf16.msra.mxu0 0
    %1661 = vmatprep.mubr.bf16.mxu0 0
    %1662 = vmatmul.mubr.bf16.gmra.mrb[0].mxu0 %v1627
    %v1663 = vpop.f32.mrb[0].mxu0
    %v1664 = vadd.f32 0.0, %v1663
    %v1665 = vpop.f32.mrb[0].mxu0
    %v1666 = vpop.f32.mrb[0].mxu0
    %v1667 = vpop.f32.mrb[0].mxu0
    %1668 = vdwg.mxu0
    %v1669 = vadd.f32 %v285, %v1664
    %v1670 = vxor.u32 %v1669, 2147483648
    %v1671 = vmul.f32 %v1670, 1.442695
    %v1672 = vpow.pop %v1671
    %v1673 = vadd.f32 %v1672, 1.0
    %v1674 = vrcp.pop %v1673
    %v1675 = vmul.f32 1.0, %v1674
    %1677 = vrot.lane.b32.xlu0 %v1669, 32
    %v1678 = vpop.permute.xlu0 %1677
    %v1680 = vmul.f32 %v1675, %v1678
    %1682 = vrot.lane.b32.xlu0 %v1680, 64
    %v1683 = vpop.permute.xlu0 %1682
    %v1685 = vadd.f32 %v1669, %v1683
    %v1686 = vtanh.pop %v1685
    %v1687 = vsub.f32 1.0, %v1675
    %1689 = vrot.lane.b32.xlu0 %v1686, 96
    %v1690 = vpop.permute.xlu0 %1689
    %v1692 = vmul.f32 %v1687, %v1690
    %1694 = vrot.lane.b32.xlu0 %v1624, 32
    %v1695 = vpop.permute.xlu0 %1694
    %v1697 = vmul.f32 %v1675, %v1695
    %v1698 = vadd.f32 %v1692, %v1697
    %v1699 = vpack.c.bf16 %v1698, %v1698
    %1701 = vrot.lane.b32.xlu0 %v1699, 96
    %v1702 = vpop.permute.xlu0 %1701
    %v1704 = vsel %vm438, %v1702, 0
    %1706 = vmatprep.subr.bf16.mxu0 0
    %1707 = vmatpush1.bf16.msra.mxu0 %v520
    %1708 = vmatprep.subr.bf16.mxu0 0
    %1709 = vmatpush1.bf16.msra.mxu0 %v521
    %1710 = vmatprep.subr.bf16.mxu0 0
    %1711 = vmatpush1.bf16.msra.mxu0 0
    %1712 = vmatprep.subr.bf16.mxu0 0
    %1713 = vmatpush1.bf16.msra.mxu0 0
    %1714 = vmatprep.subr.bf16.mxu0 0
    %1715 = vmatpush1.bf16.msra.mxu0 0
    %1716 = vmatprep.subr.bf16.mxu0 0
    %1717 = vmatpush1.bf16.msra.mxu0 0
    %1718 = vmatprep.subr.bf16.mxu0 0
    %1719 = vmatpush1.bf16.msra.mxu0 0
    %1720 = vmatprep.subr.bf16.mxu0 0
    %1721 = vmatpush1.bf16.msra.mxu0 0
    %1722 = vmatprep.subr.bf16.mxu0 0
    %1723 = vmatpush1.bf16.msra.mxu0 0
    %1724 = vmatprep.subr.bf16.mxu0 0
    %1725 = vmatpush1.bf16.msra.mxu0 0
    %1726 = vmatprep.subr.bf16.mxu0 0
    %1727 = vmatpush1.bf16.msra.mxu0 0
    %1728 = vmatprep.subr.bf16.mxu0 0
    %1729 = vmatpush1.bf16.msra.mxu0 0
    %1730 = vmatprep.subr.bf16.mxu0 0
    %1731 = vmatpush1.bf16.msra.mxu0 0
    %1732 = vmatprep.subr.bf16.mxu0 0
    %1733 = vmatpush1.bf16.msra.mxu0 0
    %1734 = vmatprep.subr.bf16.mxu0 0
    %1735 = vmatpush1.bf16.msra.mxu0 0
    %1736 = vmatprep.subr.bf16.mxu0 0
    %1737 = vmatpush1.bf16.msra.mxu0 0
    %1738 = vmatprep.mubr.bf16.mxu0 0
    %1739 = vmatmul.mubr.bf16.gmra.mrb[0].mxu0 %v1704
    %v1740 = vpop.f32.mrb[0].mxu0
    %v1741 = vadd.f32 %v425, %v1740
    %v1742 = vpop.f32.mrb[0].mxu0
    %v1743 = vpop.f32.mrb[0].mxu0
    %v1744 = vpop.f32.mrb[0].mxu0
    %1745 = vdwg.mxu0
    %v1746 = vxor.u32 %v1741, 2147483648
    %v1747 = vmul.f32 %v1746, 1.442695
    %v1748 = vpow.pop %v1747
    %v1749 = vadd.f32 %v1748, 1.0
    %v1750 = vrcp.pop %v1749
    %v1751 = vmul.f32 1.0, %v1750
    %1753 = vrot.lane.b32.xlu0 %v1741, 96
    %v1754 = vpop.permute.xlu0 %1753
    %v1756 = vmul.f32 %v1751, %v1754
    %v1757 = vpack.c.bf16 %v1756, %v1756
    %v1759 = vsel %vm438, %v1757, 0
    %1761 = vmatprep.subr.bf16.mxu0 0
    %1762 = vmatpush1.bf16.msra.mxu0 %v434
    %1763 = vmatprep.subr.bf16.mxu0 0
    %1764 = vmatpush1.bf16.msra.mxu0 %v435
    %1765 = vmatprep.subr.bf16.mxu0 0
    %1766 = vmatpush1.bf16.msra.mxu0 0
    %1767 = vmatprep.subr.bf16.mxu0 0
    %1768 = vmatpush1.bf16.msra.mxu0 0
    %1769 = vmatprep.subr.bf16.mxu0 0
    %1770 = vmatpush1.bf16.msra.mxu0 0
    %1771 = vmatprep.subr.bf16.mxu0 0
    %1772 = vmatpush1.bf16.msra.mxu0 0
    %1773 = vmatprep.subr.bf16.mxu0 0
    %1774 = vmatpush1.bf16.msra.mxu0 0
    %1775 = vmatprep.subr.bf16.mxu0 0
    %1776 = vmatpush1.bf16.msra.mxu0 0
    %1777 = vmatprep.subr.bf16.mxu0 0
    %1778 = vmatpush1.bf16.msra.mxu0 0
    %1779 = vmatprep.subr.bf16.mxu0 0
    %1780 = vmatpush1.bf16.msra.mxu0 0
    %1781 = vmatprep.subr.bf16.mxu0 0
    %1782 = vmatpush1.bf16.msra.mxu0 0
    %1783 = vmatprep.subr.bf16.mxu0 0
    %1784 = vmatpush1.bf16.msra.mxu0 0
    %1785 = vmatprep.subr.bf16.mxu0 0
    %1786 = vmatpush1.bf16.msra.mxu0 0
    %1787 = vmatprep.subr.bf16.mxu0 0
    %1788 = vmatpush1.bf16.msra.mxu0 0
    %1789 = vmatprep.subr.bf16.mxu0 0
    %1790 = vmatpush1.bf16.msra.mxu0 0
    %1791 = vmatprep.subr.bf16.mxu0 0
    %1792 = vmatpush1.bf16.msra.mxu0 0
    %1793 = vmatprep.mubr.bf16.mxu0 0
    %1794 = vmatmul.mubr.bf16.gmra.mrb[0].mxu0 %v1759
    %v1795 = vpop.f32.mrb[0].mxu0
    %v1796 = vadd.f32 0.0, %v1795
    %v1797 = vpop.f32.mrb[0].mxu0
    %v1798 = vpop.f32.mrb[0].mxu0
    %v1799 = vpop.f32.mrb[0].mxu0
    %1800 = vdwg.mxu0
    %v1801 = vadd.f32 %v288, %v1796
    %v1802 = vxor.u32 %v1801, 2147483648
    %v1803 = vmul.f32 %v1802, 1.442695
    %v1804 = vpow.pop %v1803
    %v1805 = vadd.f32 %v1804, 1.0
    %v1806 = vrcp.pop %v1805
    %v1807 = vmul.f32 1.0, %v1806
    %1809 = vrot.lane.b32.xlu0 %v1801, 32
    %v1810 = vpop.permute.xlu0 %1809
    %v1812 = vmul.f32 %v1807, %v1810
    %1814 = vrot.lane.b32.xlu0 %v1812, 64
    %v1815 = vpop.permute.xlu0 %1814
    %v1817 = vadd.f32 %v1801, %v1815
    %v1818 = vtanh.pop %v1817
    %v1819 = vsub.f32 1.0, %v1807
    %1821 = vrot.lane.b32.xlu0 %v1818, 96
    %v1822 = vpop.permute.xlu0 %1821
    %v1824 = vmul.f32 %v1819, %v1822
    %1826 = vrot.lane.b32.xlu0 %v1756, 32
    %v1827 = vpop.permute.xlu0 %1826
    %v1829 = vmul.f32 %v1807, %v1827
    %v1830 = vadd.f32 %v1824, %v1829
    %v1831 = vpack.c.bf16 %v1830, %v1830
    %v1832 = vld [vmem:[#allocation2 + $0x40] sm:$0xf]
    %v1833 = vld [vmem:[#allocation2 + $0x44] sm:$0xf]
    %v1834 = vld [vmem:[#allocation2 + $0x48] sm:$0xf]
    %v1835 = vld [vmem:[#allocation2 + $0x4c] sm:$0xf]
    %v1836 = vld [vmem:[#allocation4 + $0x30] sm:$0x1]
    %v1837 = vlaneseq
    %v1838 = vshrl.u32 %v1837, 7
    %v1839 = vsub.s32 0, %v1838
    %v1840 = vrot.slane %v1836, %v1839
    %1842 = vrot.lane.b32.xlu0 %v1831, 96
    %v1843 = vpop.permute.xlu0 %1842
    %v1848 = vunpack.c.l.b16 %v1832
    %v1849 = vunpack.c.l.b16 %v1833
    %v1850 = vunpack.c.l.b16 %v1834
    %v1851 = vunpack.c.l.b16 %v1835
    %v1852 = vpack.c.b16 %v1849, %v1848
    %v1853 = vpack.c.b16 %v1851, %v1850
    %v1857 = vsel %vm438, %v1843, 0
    %1859 = vmatprep.subr.bf16.mxu0 0
    %1860 = vmatpush1.bf16.msra.mxu0 %v1852
    %1861 = vmatprep.subr.bf16.mxu0 0
    %1862 = vmatpush1.bf16.msra.mxu0 %v1853
    %1863 = vmatprep.subr.bf16.mxu0 0
    %1864 = vmatpush1.bf16.msra.mxu0 0
    %1865 = vmatprep.subr.bf16.mxu0 0
    %1866 = vmatpush1.bf16.msra.mxu0 0
    %1867 = vmatprep.subr.bf16.mxu0 0
    %1868 = vmatpush1.bf16.msra.mxu0 0
    %1869 = vmatprep.subr.bf16.mxu0 0
    %1870 = vmatpush1.bf16.msra.mxu0 0
    %1871 = vmatprep.subr.bf16.mxu0 0
    %1872 = vmatpush1.bf16.msra.mxu0 0
    %1873 = vmatprep.subr.bf16.mxu0 0
    %1874 = vmatpush1.bf16.msra.mxu0 0
    %1875 = vmatprep.subr.bf16.mxu0 0
    %1876 = vmatpush1.bf16.msra.mxu0 0
    %1877 = vmatprep.subr.bf16.mxu0 0
    %1878 = vmatpush1.bf16.msra.mxu0 0
    %1879 = vmatprep.subr.bf16.mxu0 0
    %1880 = vmatpush1.bf16.msra.mxu0 0
    %1881 = vmatprep.subr.bf16.mxu0 0
    %1882 = vmatpush1.bf16.msra.mxu0 0
    %1883 = vmatprep.subr.bf16.mxu0 0
    %1884 = vmatpush1.bf16.msra.mxu0 0
    %1885 = vmatprep.subr.bf16.mxu0 0
    %1886 = vmatpush1.bf16.msra.mxu0 0
    %1887 = vmatprep.subr.bf16.mxu0 0
    %1888 = vmatpush1.bf16.msra.mxu0 0
    %1889 = vmatprep.subr.bf16.mxu0 0
    %1890 = vmatpush1.bf16.msra.mxu0 0
    %1891 = vmatprep.mubr.bf16.mxu0 0
    %1892 = vmatmul.mubr.bf16.gmra.mrb[0].mxu0 %v1857
    %v1893 = vpop.f32.mrb[0].mxu0
    %v1894 = vadd.f32 %v1840, %v1893
    %v1895 = vpop.f32.mrb[0].mxu0
    %v1896 = vpop.f32.mrb[0].mxu0
    %v1897 = vpop.f32.mrb[0].mxu0
    %1898 = vdwg.mxu0
    %v1899 = vld [vmem:[%s1] sm:$0xff]
    %v1900 = vmul.f32 %v1899, 0.01
    %v1901 = vmul.f32 %v1894, 0.5
    %v1902 = vmul.f32 %v1901, 1.442695
    %v1903 = vpow.pop %v1902
    %1905 = vrot.lane.b32.xlu0 %v1903, 112
    %v1906 = vpop.permute.xlu0 %1905
    %v1908 = vmul.f32 %v1900, %v1906
    %v1909 = vadd.f32 %v1908, %v1894
    %v1910 = vpack.c.bf16 %v1909, %v1909
    %v1911 = vld [vmem:[#allocation2 + $0x50] sm:$0xf]
    %v1912 = vld [vmem:[#allocation2 + $0x54] sm:$0xf]
    %v1913 = vld [vmem:[#allocation4 + $0x38] sm:$0x1]
    %v1914 = vlaneseq
    %v1915 = vshrl.u32 %v1914, 7
    %v1916 = vsub.s32 0, %v1915
    %v1917 = vrot.slane %v1913, %v1916
    %v1920 = vunpack.c.l.b16 %v1911
    %v1921 = vunpack.c.l.b16 %v1912
    %v1922 = vpack.c.b16 %v1921, %v1920
    %v1925 = vsel %vm197, %v1910, 0
    %1927 = vmatprep.subr.bf16.mxu0 0
    %1928 = vmatpush1.bf16.msra.mxu0 %v1922
    %1929 = vmatprep.subr.bf16.mxu0 0
    %1930 = vmatpush1.bf16.msra.mxu0 0
    %1931 = vmatprep.subr.bf16.mxu0 0
    %1932 = vmatpush1.bf16.msra.mxu0 0
    %1933 = vmatprep.subr.bf16.mxu0 0
    %1934 = vmatpush1.bf16.msra.mxu0 0
    %1935 = vmatprep.subr.bf16.mxu0 0
    %1936 = vmatpush1.bf16.msra.mxu0 0
    %1937 = vmatprep.subr.bf16.mxu0 0
    %1938 = vmatpush1.bf16.msra.mxu0 0
    %1939 = vmatprep.subr.bf16.mxu0 0
    %1940 = vmatpush1.bf16.msra.mxu0 0
    %1941 = vmatprep.subr.bf16.mxu0 0
    %1942 = vmatpush1.bf16.msra.mxu0 0
    %1943 = vmatprep.subr.bf16.mxu0 0
    %1944 = vmatpush1.bf16.msra.mxu0 0
    %1945 = vmatprep.subr.bf16.mxu0 0
    %1946 = vmatpush1.bf16.msra.mxu0 0
    %1947 = vmatprep.subr.bf16.mxu0 0
    %1948 = vmatpush1.bf16.msra.mxu0 0
    %1949 = vmatprep.subr.bf16.mxu0 0
    %1950 = vmatpush1.bf16.msra.mxu0 0
    %1951 = vmatprep.subr.bf16.mxu0 0
    %1952 = vmatpush1.bf16.msra.mxu0 0
    %1953 = vmatprep.subr.bf16.mxu0 0
    %1954 = vmatpush1.bf16.msra.mxu0 0
    %1955 = vmatprep.subr.bf16.mxu0 0
    %1956 = vmatpush1.bf16.msra.mxu0 0
    %1957 = vmatprep.subr.bf16.mxu0 0
    %1958 = vmatpush1.bf16.msra.mxu0 0
    %1959 = vmatprep.mubr.bf16.mxu0 0
    %1960 = vmatmul.mubr.bf16.gmra.mrb[0].mxu0 %v1925
    %v1961 = vpop.f32.mrb[0].mxu0
    %v1962 = vadd.f32 %v1917, %v1961
    %v1963 = vpop.f32.mrb[0].mxu0
    %v1964 = vpop.f32.mrb[0].mxu0
    %v1965 = vpop.f32.mrb[0].mxu0
    %1966 = vdwg.mxu0
    %v1967 = vtanh.pop %v1962
    %v1968 = vpack.c.bf16 %v1967, %v1967
    %v1973 = vunpack.c.l.b16 %v61
    %v1974 = vunpack.c.l.b16 %v62
    %v1975 = vunpack.c.l.b16 %v63
    %v1976 = vunpack.c.l.b16 %v64
    %v1977 = vpack.c.b16 %v1974, %v1973
    %v1978 = vpack.c.b16 %v1976, %v1975
    %v1982 = vsel %vm438, %v1968, 0
    %1984 = vmatprep.subr.bf16.mxu0 0
    %1985 = vmatpush1.bf16.msra.mxu0 %v1977
    %1986 = vmatprep.subr.bf16.mxu0 0
    %1987 = vmatpush1.bf16.msra.mxu0 %v1978
    %1988 = vmatprep.subr.bf16.mxu0 0
    %1989 = vmatpush1.bf16.msra.mxu0 0
    %1990 = vmatprep.subr.bf16.mxu0 0
    %1991 = vmatpush1.bf16.msra.mxu0 0
    %1992 = vmatprep.subr.bf16.mxu0 0
    %1993 = vmatpush1.bf16.msra.mxu0 0
    %1994 = vmatprep.subr.bf16.mxu0 0
    %1995 = vmatpush1.bf16.msra.mxu0 0
    %1996 = vmatprep.subr.bf16.mxu0 0
    %1997 = vmatpush1.bf16.msra.mxu0 0
    %1998 = vmatprep.subr.bf16.mxu0 0
    %1999 = vmatpush1.bf16.msra.mxu0 0
    %2000 = vmatprep.subr.bf16.mxu0 0
    %2001 = vmatpush1.bf16.msra.mxu0 0
    %2002 = vmatprep.subr.bf16.mxu0 0
    %2003 = vmatpush1.bf16.msra.mxu0 0
    %2004 = vmatprep.subr.bf16.mxu0 0
    %2005 = vmatpush1.bf16.msra.mxu0 0
    %2006 = vmatprep.subr.bf16.mxu0 0
    %2007 = vmatpush1.bf16.msra.mxu0 0
    %2008 = vmatprep.subr.bf16.mxu0 0
    %2009 = vmatpush1.bf16.msra.mxu0 0
    %2010 = vmatprep.subr.bf16.mxu0 0
    %2011 = vmatpush1.bf16.msra.mxu0 0
    %2012 = vmatprep.subr.bf16.mxu0 0
    %2013 = vmatpush1.bf16.msra.mxu0 0
    %2014 = vmatprep.subr.bf16.mxu0 0
    %2015 = vmatpush1.bf16.msra.mxu0 0
    %2016 = vmatprep.mubr.bf16.mxu0 0
    %2017 = vmatmul.mubr.bf16.gmra.mrb[0].mxu0 %v1982
    %v2018 = vpop.f32.mrb[0].mxu0
    %v2019 = vadd.f32 0.0, %v2018
    %v2020 = vpop.f32.mrb[0].mxu0
    %v2021 = vpop.f32.mrb[0].mxu0
    %v2022 = vpop.f32.mrb[0].mxu0
    %2023 = vdwg.mxu0
    %v2024 = vlaneseq
    %v2025 = vshrl.u32 %v2024, 7
    %v2026 = vsub.s32 0, %v2025
    %v2027 = vrot.slane %v378, %v2026
    %v2028 = vadd.f32 %v2027, %v2019
    %v2029 = vxor.u32 %v2028, 2147483648
    %v2030 = vmul.f32 %v2029, 1.442695
    %v2031 = vpow.pop %v2030
    %v2032 = vadd.f32 %v2031, 1.0
    %v2033 = vrcp.pop %v2032
    %v2034 = vmul.f32 1.0, %v2033
    %2036 = vrot.lane.b32.xlu0 %v2028, 32
    %v2037 = vpop.permute.xlu0 %2036
    %v2039 = vmul.f32 %v2034, %v2037
    %2041 = vrot.lane.b32.xlu0 %v2039, 64
    %v2042 = vpop.permute.xlu0 %2041
    %v2044 = vadd.f32 %v2028, %v2042
    %v2045 = vtanh.pop %v2044
    %v2046 = vsub.f32 1.0, %v2034
    %2048 = vrot.lane.b32.xlu0 %v2045, 96
    %v2049 = vpop.permute.xlu0 %2048
    %v2051 = vmul.f32 %v2046, %v2049
    %2053 = vrot.lane.b32.xlu0 %v1967, 32
    %v2054 = vpop.permute.xlu0 %2053
    %v2056 = vmul.f32 %v2034, %v2054
    %v2057 = vadd.f32 %v2051, %v2056
    %v2058 = vpack.c.bf16 %v2057, %v2057
    %2060 = vrot.lane.b32.xlu0 %v2058, 96
    %v2061 = vpop.permute.xlu0 %2060
    %v2063 = vsel %vm438, %v2061, 0
    %2065 = vmatprep.subr.bf16.mxu0 0
    %2066 = vmatpush1.bf16.msra.mxu0 %v520
    %2067 = vmatprep.subr.bf16.mxu0 0
    %2068 = vmatpush1.bf16.msra.mxu0 %v521
    %2069 = vmatprep.subr.bf16.mxu0 0
    %2070 = vmatpush1.bf16.msra.mxu0 0
    %2071 = vmatprep.subr.bf16.mxu0 0
    %2072 = vmatpush1.bf16.msra.mxu0 0
    %2073 = vmatprep.subr.bf16.mxu0 0
    %2074 = vmatpush1.bf16.msra.mxu0 0
    %2075 = vmatprep.subr.bf16.mxu0 0
    %2076 = vmatpush1.bf16.msra.mxu0 0
    %2077 = vmatprep.subr.bf16.mxu0 0
    %2078 = vmatpush1.bf16.msra.mxu0 0
    %2079 = vmatprep.subr.bf16.mxu0 0
    %2080 = vmatpush1.bf16.msra.mxu0 0
    %2081 = vmatprep.subr.bf16.mxu0 0
    %2082 = vmatpush1.bf16.msra.mxu0 0
    %2083 = vmatprep.subr.bf16.mxu0 0
    %2084 = vmatpush1.bf16.msra.mxu0 0
    %2085 = vmatprep.subr.bf16.mxu0 0
    %2086 = vmatpush1.bf16.msra.mxu0 0
    %2087 = vmatprep.subr.bf16.mxu0 0
    %2088 = vmatpush1.bf16.msra.mxu0 0
    %2089 = vmatprep.subr.bf16.mxu0 0
    %2090 = vmatpush1.bf16.msra.mxu0 0
    %2091 = vmatprep.subr.bf16.mxu0 0
    %2092 = vmatpush1.bf16.msra.mxu0 0
    %2093 = vmatprep.subr.bf16.mxu0 0
    %2094 = vmatpush1.bf16.msra.mxu0 0
    %2095 = vmatprep.subr.bf16.mxu0 0
    %2096 = vmatpush1.bf16.msra.mxu0 0
    %2097 = vmatprep.mubr.bf16.mxu0 0
    %2098 = vmatmul.mubr.bf16.gmra.mrb[0].mxu0 %v2063
    %v2099 = vpop.f32.mrb[0].mxu0
    %v2100 = vadd.f32 %v385, %v2099
    %v2101 = vpop.f32.mrb[0].mxu0
    %v2102 = vpop.f32.mrb[0].mxu0
    %v2103 = vpop.f32.mrb[0].mxu0
    %2104 = vdwg.mxu0
    %v2105 = vxor.u32 %v2100, 2147483648
    %v2106 = vmul.f32 %v2105, 1.442695
    %v2107 = vpow.pop %v2106
    %v2108 = vadd.f32 %v2107, 1.0
    %v2109 = vrcp.pop %v2108
    %v2110 = vmul.f32 1.0, %v2109
    %2112 = vrot.lane.b32.xlu0 %v2100, 96
    %v2113 = vpop.permute.xlu0 %2112
    %v2115 = vmul.f32 %v2110, %v2113
    %v2116 = vpack.c.bf16 %v2115, %v2115
    %v2118 = vsel %vm438, %v2116, 0
    %2120 = vmatprep.subr.bf16.mxu0 0
    %2121 = vmatpush1.bf16.msra.mxu0 %v1977
    %2122 = vmatprep.subr.bf16.mxu0 0
    %2123 = vmatpush1.bf16.msra.mxu0 %v1978
    %2124 = vmatprep.subr.bf16.mxu0 0
    %2125 = vmatpush1.bf16.msra.mxu0 0
    %2126 = vmatprep.subr.bf16.mxu0 0
    %2127 = vmatpush1.bf16.msra.mxu0 0
    %2128 = vmatprep.subr.bf16.mxu0 0
    %2129 = vmatpush1.bf16.msra.mxu0 0
    %2130 = vmatprep.subr.bf16.mxu0 0
    %2131 = vmatpush1.bf16.msra.mxu0 0
    %2132 = vmatprep.subr.bf16.mxu0 0
    %2133 = vmatpush1.bf16.msra.mxu0 0
    %2134 = vmatprep.subr.bf16.mxu0 0
    %2135 = vmatpush1.bf16.msra.mxu0 0
    %2136 = vmatprep.subr.bf16.mxu0 0
    %2137 = vmatpush1.bf16.msra.mxu0 0
    %2138 = vmatprep.subr.bf16.mxu0 0
    %2139 = vmatpush1.bf16.msra.mxu0 0
    %2140 = vmatprep.subr.bf16.mxu0 0
    %2141 = vmatpush1.bf16.msra.mxu0 0
    %2142 = vmatprep.subr.bf16.mxu0 0
    %2143 = vmatpush1.bf16.msra.mxu0 0
    %2144 = vmatprep.subr.bf16.mxu0 0
    %2145 = vmatpush1.bf16.msra.mxu0 0
    %2146 = vmatprep.subr.bf16.mxu0 0
    %2147 = vmatpush1.bf16.msra.mxu0 0
    %2148 = vmatprep.subr.bf16.mxu0 0
    %2149 = vmatpush1.bf16.msra.mxu0 0
    %2150 = vmatprep.subr.bf16.mxu0 0
    %2151 = vmatpush1.bf16.msra.mxu0 0
    %2152 = vmatprep.mubr.bf16.mxu0 0
    %2153 = vmatmul.mubr.bf16.gmra.mrb[0].mxu0 %v2118
    %v2154 = vpop.f32.mrb[0].mxu0
    %v2155 = vadd.f32 0.0, %v2154
    %v2156 = vpop.f32.mrb[0].mxu0
    %v2157 = vpop.f32.mrb[0].mxu0
    %v2158 = vpop.f32.mrb[0].mxu0
    %2159 = vdwg.mxu0
    %v2160 = vlaneseq
    %v2161 = vshrl.u32 %v2160, 7
    %v2162 = vsub.s32 0, %v2161
    %v2163 = vrot.slane %v379, %v2162
    %v2164 = vadd.f32 %v2163, %v2155
    %v2165 = vxor.u32 %v2164, 2147483648
    %v2166 = vmul.f32 %v2165, 1.442695
    %v2167 = vpow.pop %v2166
    %v2168 = vadd.f32 %v2167, 1.0
    %v2169 = vrcp.pop %v2168
    %v2170 = vmul.f32 1.0, %v2169
    %2172 = vrot.lane.b32.xlu0 %v2164, 32
    %v2173 = vpop.permute.xlu0 %2172
    %v2175 = vmul.f32 %v2170, %v2173
    %2177 = vrot.lane.b32.xlu0 %v2175, 64
    %v2178 = vpop.permute.xlu0 %2177
    %v2180 = vadd.f32 %v2164, %v2178
    %v2181 = vtanh.pop %v2180
    %v2182 = vsub.f32 1.0, %v2170
    %2184 = vrot.lane.b32.xlu0 %v2181, 96
    %v2185 = vpop.permute.xlu0 %2184
    %v2187 = vmul.f32 %v2182, %v2185
    %2189 = vrot.lane.b32.xlu0 %v2115, 32
    %v2190 = vpop.permute.xlu0 %2189
    %v2192 = vmul.f32 %v2170, %v2190
    %v2193 = vadd.f32 %v2187, %v2192
    %v2194 = vpack.c.bf16 %v2193, %v2193
    %2196 = vrot.lane.b32.xlu0 %v2194, 96
    %v2197 = vpop.permute.xlu0 %2196
    %v2199 = vsel %vm438, %v2197, 0
    %2201 = vmatprep.subr.bf16.mxu0 0
    %2202 = vmatpush1.bf16.msra.mxu0 %v520
    %2203 = vmatprep.subr.bf16.mxu0 0
    %2204 = vmatpush1.bf16.msra.mxu0 %v521
    %2205 = vmatprep.subr.bf16.mxu0 0
    %2206 = vmatpush1.bf16.msra.mxu0 0
    %2207 = vmatprep.subr.bf16.mxu0 0
    %2208 = vmatpush1.bf16.msra.mxu0 0
    %2209 = vmatprep.subr.bf16.mxu0 0
    %2210 = vmatpush1.bf16.msra.mxu0 0
    %2211 = vmatprep.subr.bf16.mxu0 0
    %2212 = vmatpush1.bf16.msra.mxu0 0
    %2213 = vmatprep.subr.bf16.mxu0 0
    %2214 = vmatpush1.bf16.msra.mxu0 0
    %2215 = vmatprep.subr.bf16.mxu0 0
    %2216 = vmatpush1.bf16.msra.mxu0 0
    %2217 = vmatprep.subr.bf16.mxu0 0
    %2218 = vmatpush1.bf16.msra.mxu0 0
    %2219 = vmatprep.subr.bf16.mxu0 0
    %2220 = vmatpush1.bf16.msra.mxu0 0
    %2221 = vmatprep.subr.bf16.mxu0 0
    %2222 = vmatpush1.bf16.msra.mxu0 0
    %2223 = vmatprep.subr.bf16.mxu0 0
    %2224 = vmatpush1.bf16.msra.mxu0 0
    %2225 = vmatprep.subr.bf16.mxu0 0
    %2226 = vmatpush1.bf16.msra.mxu0 0
    %2227 = vmatprep.subr.bf16.mxu0 0
    %2228 = vmatpush1.bf16.msra.mxu0 0
    %2229 = vmatprep.subr.bf16.mxu0 0
    %2230 = vmatpush1.bf16.msra.mxu0 0
    %2231 = vmatprep.subr.bf16.mxu0 0
    %2232 = vmatpush1.bf16.msra.mxu0 0
    %2233 = vmatprep.mubr.bf16.mxu0 0
    %2234 = vmatmul.mubr.bf16.gmra.mrb[0].mxu0 %v2199
    %v2235 = vpop.f32.mrb[0].mxu0
    %v2236 = vadd.f32 %v389, %v2235
    %v2237 = vpop.f32.mrb[0].mxu0
    %v2238 = vpop.f32.mrb[0].mxu0
    %v2239 = vpop.f32.mrb[0].mxu0
    %2240 = vdwg.mxu0
    %v2241 = vxor.u32 %v2236, 2147483648
    %v2242 = vmul.f32 %v2241, 1.442695
    %v2243 = vpow.pop %v2242
    %v2244 = vadd.f32 %v2243, 1.0
    %v2245 = vrcp.pop %v2244
    %v2246 = vmul.f32 1.0, %v2245
    %2248 = vrot.lane.b32.xlu0 %v2236, 96
    %v2249 = vpop.permute.xlu0 %2248
    %v2251 = vmul.f32 %v2246, %v2249
    %v2252 = vpack.c.bf16 %v2251, %v2251
    %v2254 = vsel %vm438, %v2252, 0
    %2256 = vmatprep.subr.bf16.mxu0 0
    %2257 = vmatpush1.bf16.msra.mxu0 %v1977
    %2258 = vmatprep.subr.bf16.mxu0 0
    %2259 = vmatpush1.bf16.msra.mxu0 %v1978
    %2260 = vmatprep.subr.bf16.mxu0 0
    %2261 = vmatpush1.bf16.msra.mxu0 0
    %2262 = vmatprep.subr.bf16.mxu0 0
    %2263 = vmatpush1.bf16.msra.mxu0 0
    %2264 = vmatprep.subr.bf16.mxu0 0
    %2265 = vmatpush1.bf16.msra.mxu0 0
    %2266 = vmatprep.subr.bf16.mxu0 0
    %2267 = vmatpush1.bf16.msra.mxu0 0
    %2268 = vmatprep.subr.bf16.mxu0 0
    %2269 = vmatpush1.bf16.msra.mxu0 0
    %2270 = vmatprep.subr.bf16.mxu0 0
    %2271 = vmatpush1.bf16.msra.mxu0 0
    %2272 = vmatprep.subr.bf16.mxu0 0
    %2273 = vmatpush1.bf16.msra.mxu0 0
    %2274 = vmatprep.subr.bf16.mxu0 0
    %2275 = vmatpush1.bf16.msra.mxu0 0
    %2276 = vmatprep.subr.bf16.mxu0 0
    %2277 = vmatpush1.bf16.msra.mxu0 0
    %2278 = vmatprep.subr.bf16.mxu0 0
    %2279 = vmatpush1.bf16.msra.mxu0 0
    %2280 = vmatprep.subr.bf16.mxu0 0
    %2281 = vmatpush1.bf16.msra.mxu0 0
    %2282 = vmatprep.subr.bf16.mxu0 0
    %2283 = vmatpush1.bf16.msra.mxu0 0
    %2284 = vmatprep.subr.bf16.mxu0 0
    %2285 = vmatpush1.bf16.msra.mxu0 0
    %2286 = vmatprep.subr.bf16.mxu0 0
    %2287 = vmatpush1.bf16.msra.mxu0 0
    %2288 = vmatprep.mubr.bf16.mxu0 0
    %2289 = vmatmul.mubr.bf16.gmra.mrb[0].mxu0 %v2254
    %v2290 = vpop.f32.mrb[0].mxu0
    %v2291 = vadd.f32 0.0, %v2290
    %v2292 = vpop.f32.mrb[0].mxu0
    %v2293 = vpop.f32.mrb[0].mxu0
    %v2294 = vpop.f32.mrb[0].mxu0
    %2295 = vdwg.mxu0
    %v2296 = vadd.f32 %v343, %v2291
    %v2297 = vxor.u32 %v2296, 2147483648
    %v2298 = vmul.f32 %v2297, 1.442695
    %v2299 = vpow.pop %v2298
    %v2300 = vadd.f32 %v2299, 1.0
    %v2301 = vrcp.pop %v2300
    %v2302 = vmul.f32 1.0, %v2301
    %2304 = vrot.lane.b32.xlu0 %v2296, 32
    %v2305 = vpop.permute.xlu0 %2304
    %v2307 = vmul.f32 %v2302, %v2305
    %2309 = vrot.lane.b32.xlu0 %v2307, 64
    %v2310 = vpop.permute.xlu0 %2309
    %v2312 = vadd.f32 %v2296, %v2310
    %v2313 = vtanh.pop %v2312
    %v2314 = vsub.f32 1.0, %v2302
    %2316 = vrot.lane.b32.xlu0 %v2313, 96
    %v2317 = vpop.permute.xlu0 %2316
    %v2319 = vmul.f32 %v2314, %v2317
    %2321 = vrot.lane.b32.xlu0 %v2251, 32
    %v2322 = vpop.permute.xlu0 %2321
    %v2324 = vmul.f32 %v2302, %v2322
    %v2325 = vadd.f32 %v2319, %v2324
    %v2326 = vpack.c.bf16 %v2325, %v2325
    %2328 = vrot.lane.b32.xlu0 %v2326, 96
    %v2329 = vpop.permute.xlu0 %2328
    %v2331 = vsel %vm438, %v2329, 0
    %2333 = vmatprep.subr.bf16.mxu0 0
    %2334 = vmatpush1.bf16.msra.mxu0 %v520
    %2335 = vmatprep.subr.bf16.mxu0 0
    %2336 = vmatpush1.bf16.msra.mxu0 %v521
    %2337 = vmatprep.subr.bf16.mxu0 0
    %2338 = vmatpush1.bf16.msra.mxu0 0
    %2339 = vmatprep.subr.bf16.mxu0 0
    %2340 = vmatpush1.bf16.msra.mxu0 0
    %2341 = vmatprep.subr.bf16.mxu0 0
    %2342 = vmatpush1.bf16.msra.mxu0 0
    %2343 = vmatprep.subr.bf16.mxu0 0
    %2344 = vmatpush1.bf16.msra.mxu0 0
    %2345 = vmatprep.subr.bf16.mxu0 0
    %2346 = vmatpush1.bf16.msra.mxu0 0
    %2347 = vmatprep.subr.bf16.mxu0 0
    %2348 = vmatpush1.bf16.msra.mxu0 0
    %2349 = vmatprep.subr.bf16.mxu0 0
    %2350 = vmatpush1.bf16.msra.mxu0 0
    %2351 = vmatprep.subr.bf16.mxu0 0
    %2352 = vmatpush1.bf16.msra.mxu0 0
    %2353 = vmatprep.subr.bf16.mxu0 0
    %2354 = vmatpush1.bf16.msra.mxu0 0
    %2355 = vmatprep.subr.bf16.mxu0 0
    %2356 = vmatpush1.bf16.msra.mxu0 0
    %2357 = vmatprep.subr.bf16.mxu0 0
    %2358 = vmatpush1.bf16.msra.mxu0 0
    %2359 = vmatprep.subr.bf16.mxu0 0
    %2360 = vmatpush1.bf16.msra.mxu0 0
    %2361 = vmatprep.subr.bf16.mxu0 0
    %2362 = vmatpush1.bf16.msra.mxu0 0
    %2363 = vmatprep.subr.bf16.mxu0 0
    %2364 = vmatpush1.bf16.msra.mxu0 0
    %2365 = vmatprep.mubr.bf16.mxu0 0
    %2366 = vmatmul.mubr.bf16.gmra.mrb[0].mxu0 %v2331
    %v2367 = vpop.f32.mrb[0].mxu0
    %v2368 = vadd.f32 %v393, %v2367
    %v2369 = vpop.f32.mrb[0].mxu0
    %v2370 = vpop.f32.mrb[0].mxu0
    %v2371 = vpop.f32.mrb[0].mxu0
    %2372 = vdwg.mxu0
    %v2373 = vxor.u32 %v2368, 2147483648
    %v2374 = vmul.f32 %v2373, 1.442695
    %v2375 = vpow.pop %v2374
    %v2376 = vadd.f32 %v2375, 1.0
    %v2377 = vrcp.pop %v2376
    %v2378 = vmul.f32 1.0, %v2377
    %2380 = vrot.lane.b32.xlu0 %v2368, 96
    %v2381 = vpop.permute.xlu0 %2380
    %v2383 = vmul.f32 %v2378, %v2381
    %v2384 = vpack.c.bf16 %v2383, %v2383
    %v2386 = vsel %vm438, %v2384, 0
    %2388 = vmatprep.subr.bf16.mxu0 0
    %2389 = vmatpush1.bf16.msra.mxu0 %v1977
    %2390 = vmatprep.subr.bf16.mxu0 0
    %2391 = vmatpush1.bf16.msra.mxu0 %v1978
    %2392 = vmatprep.subr.bf16.mxu0 0
    %2393 = vmatpush1.bf16.msra.mxu0 0
    %2394 = vmatprep.subr.bf16.mxu0 0
    %2395 = vmatpush1.bf16.msra.mxu0 0
    %2396 = vmatprep.subr.bf16.mxu0 0
    %2397 = vmatpush1.bf16.msra.mxu0 0
    %2398 = vmatprep.subr.bf16.mxu0 0
    %2399 = vmatpush1.bf16.msra.mxu0 0
    %2400 = vmatprep.subr.bf16.mxu0 0
    %2401 = vmatpush1.bf16.msra.mxu0 0
    %2402 = vmatprep.subr.bf16.mxu0 0
    %2403 = vmatpush1.bf16.msra.mxu0 0
    %2404 = vmatprep.subr.bf16.mxu0 0
    %2405 = vmatpush1.bf16.msra.mxu0 0
    %2406 = vmatprep.subr.bf16.mxu0 0
    %2407 = vmatpush1.bf16.msra.mxu0 0
    %2408 = vmatprep.subr.bf16.mxu0 0
    %2409 = vmatpush1.bf16.msra.mxu0 0
    %2410 = vmatprep.subr.bf16.mxu0 0
    %2411 = vmatpush1.bf16.msra.mxu0 0
    %2412 = vmatprep.subr.bf16.mxu0 0
    %2413 = vmatpush1.bf16.msra.mxu0 0
    %2414 = vmatprep.subr.bf16.mxu0 0
    %2415 = vmatpush1.bf16.msra.mxu0 0
    %2416 = vmatprep.subr.bf16.mxu0 0
    %2417 = vmatpush1.bf16.msra.mxu0 0
    %2418 = vmatprep.subr.bf16.mxu0 0
    %2419 = vmatpush1.bf16.msra.mxu0 0
    %2420 = vmatprep.mubr.bf16.mxu0 0
    %2421 = vmatmul.mubr.bf16.gmra.mrb[0].mxu0 %v2386
    %v2422 = vpop.f32.mrb[0].mxu0
    %v2423 = vadd.f32 0.0, %v2422
    %v2424 = vpop.f32.mrb[0].mxu0
    %v2425 = vpop.f32.mrb[0].mxu0
    %v2426 = vpop.f32.mrb[0].mxu0
    %2427 = vdwg.mxu0
    %v2428 = vadd.f32 %v346, %v2423
    %v2429 = vxor.u32 %v2428, 2147483648
    %v2430 = vmul.f32 %v2429, 1.442695
    %v2431 = vpow.pop %v2430
    %v2432 = vadd.f32 %v2431, 1.0
    %v2433 = vrcp.pop %v2432
    %v2434 = vmul.f32 1.0, %v2433
    %2436 = vrot.lane.b32.xlu0 %v2428, 32
    %v2437 = vpop.permute.xlu0 %2436
    %v2439 = vmul.f32 %v2434, %v2437
    %2441 = vrot.lane.b32.xlu0 %v2439, 64
    %v2442 = vpop.permute.xlu0 %2441
    %v2444 = vadd.f32 %v2428, %v2442
    %v2445 = vtanh.pop %v2444
    %v2446 = vsub.f32 1.0, %v2434
    %2448 = vrot.lane.b32.xlu0 %v2445, 96
    %v2449 = vpop.permute.xlu0 %2448
    %v2451 = vmul.f32 %v2446, %v2449
    %2453 = vrot.lane.b32.xlu0 %v2383, 32
    %v2454 = vpop.permute.xlu0 %2453
    %v2456 = vmul.f32 %v2434, %v2454
    %v2457 = vadd.f32 %v2451, %v2456
    %v2458 = vadd.f32 %v351, %v2291
    %v2459 = vxor.u32 %v2458, 2147483648
    %v2460 = vmul.f32 %v2459, 1.442695
    %v2461 = vpow.pop %v2460
    %v2462 = vadd.f32 %v2461, 1.0
    %v2463 = vrcp.pop %v2462
    %v2464 = vmul.f32 1.0, %v2463
    %2466 = vrot.lane.b32.xlu0 %v2458, 32
    %v2467 = vpop.permute.xlu0 %2466
    %v2469 = vmul.f32 %v2464, %v2467
    %2471 = vrot.lane.b32.xlu0 %v2469, 64
    %v2472 = vpop.permute.xlu0 %2471
    %v2474 = vadd.f32 %v2458, %v2472
    %v2475 = vtanh.pop %v2474
    %v2476 = vsub.f32 1.0, %v2464
    %2478 = vrot.lane.b32.xlu0 %v2475, 96
    %v2479 = vpop.permute.xlu0 %2478
    %v2481 = vmul.f32 %v2476, %v2479
    %v2482 = vmul.f32 %v2464, %v2322
    %v2483 = vadd.f32 %v2481, %v2482
    %v2484 = vpack.c.bf16 %v2457, %v2457
    %2486 = vrot.lane.b32.xlu0 %v2484, 96
    %v2487 = vpop.permute.xlu0 %2486
    %v2489 = vsel %vm438, %v2487, 0
    %2491 = vmatprep.subr.bf16.mxu0 0
    %2492 = vmatpush1.bf16.msra.mxu0 %v520
    %2493 = vmatprep.subr.bf16.mxu0 0
    %2494 = vmatpush1.bf16.msra.mxu0 %v521
    %2495 = vmatprep.subr.bf16.mxu0 0
    %2496 = vmatpush1.bf16.msra.mxu0 0
    %2497 = vmatprep.subr.bf16.mxu0 0
    %2498 = vmatpush1.bf16.msra.mxu0 0
    %2499 = vmatprep.subr.bf16.mxu0 0
    %2500 = vmatpush1.bf16.msra.mxu0 0
    %2501 = vmatprep.subr.bf16.mxu0 0
    %2502 = vmatpush1.bf16.msra.mxu0 0
    %2503 = vmatprep.subr.bf16.mxu0 0
    %2504 = vmatpush1.bf16.msra.mxu0 0
    %2505 = vmatprep.subr.bf16.mxu0 0
    %2506 = vmatpush1.bf16.msra.mxu0 0
    %2507 = vmatprep.subr.bf16.mxu0 0
    %2508 = vmatpush1.bf16.msra.mxu0 0
    %2509 = vmatprep.subr.bf16.mxu0 0
    %2510 = vmatpush1.bf16.msra.mxu0 0
    %2511 = vmatprep.subr.bf16.mxu0 0
    %2512 = vmatpush1.bf16.msra.mxu0 0
    %2513 = vmatprep.subr.bf16.mxu0 0
    %2514 = vmatpush1.bf16.msra.mxu0 0
    %2515 = vmatprep.subr.bf16.mxu0 0
    %2516 = vmatpush1.bf16.msra.mxu0 0
    %2517 = vmatprep.subr.bf16.mxu0 0
    %2518 = vmatpush1.bf16.msra.mxu0 0
    %2519 = vmatprep.subr.bf16.mxu0 0
    %2520 = vmatpush1.bf16.msra.mxu0 0
    %2521 = vmatprep.subr.bf16.mxu0 0
    %2522 = vmatpush1.bf16.msra.mxu0 0
    %2523 = vmatprep.mubr.bf16.mxu0 0
    %2524 = vmatmul.mubr.bf16.gmra.mrb[0].mxu0 %v2489
    %v2525 = vpop.f32.mrb[0].mxu0
    %v2526 = vadd.f32 %v397, %v2525
    %v2527 = vpop.f32.mrb[0].mxu0
    %v2528 = vpop.f32.mrb[0].mxu0
    %v2529 = vpop.f32.mrb[0].mxu0
    %2530 = vdwg.mxu0
    %v2531 = vxor.u32 %v2526, 2147483648
    %v2532 = vmul.f32 %v2531, 1.442695
    %v2533 = vpow.pop %v2532
    %v2534 = vadd.f32 %v2533, 1.0
    %v2535 = vrcp.pop %v2534
    %v2536 = vmul.f32 1.0, %v2535
    %2538 = vrot.lane.b32.xlu0 %v2526, 96
    %v2539 = vpop.permute.xlu0 %2538
    %v2541 = vmul.f32 %v2536, %v2539
    %v2542 = vpack.c.bf16 %v2541, %v2541
    %v2544 = vsel %vm438, %v2542, 0
    %2546 = vmatprep.subr.bf16.mxu0 0
    %2547 = vmatpush1.bf16.msra.mxu0 %v1977
    %2548 = vmatprep.subr.bf16.mxu0 0
    %2549 = vmatpush1.bf16.msra.mxu0 %v1978
    %2550 = vmatprep.subr.bf16.mxu0 0
    %2551 = vmatpush1.bf16.msra.mxu0 0
    %2552 = vmatprep.subr.bf16.mxu0 0
    %2553 = vmatpush1.bf16.msra.mxu0 0
    %2554 = vmatprep.subr.bf16.mxu0 0
    %2555 = vmatpush1.bf16.msra.mxu0 0
    %2556 = vmatprep.subr.bf16.mxu0 0
    %2557 = vmatpush1.bf16.msra.mxu0 0
    %2558 = vmatprep.subr.bf16.mxu0 0
    %2559 = vmatpush1.bf16.msra.mxu0 0
    %2560 = vmatprep.subr.bf16.mxu0 0
    %2561 = vmatpush1.bf16.msra.mxu0 0
    %2562 = vmatprep.subr.bf16.mxu0 0
    %2563 = vmatpush1.bf16.msra.mxu0 0
    %2564 = vmatprep.subr.bf16.mxu0 0
    %2565 = vmatpush1.bf16.msra.mxu0 0
    %2566 = vmatprep.subr.bf16.mxu0 0
    %2567 = vmatpush1.bf16.msra.mxu0 0
    %2568 = vmatprep.subr.bf16.mxu0 0
    %2569 = vmatpush1.bf16.msra.mxu0 0
    %2570 = vmatprep.subr.bf16.mxu0 0
    %2571 = vmatpush1.bf16.msra.mxu0 0
    %2572 = vmatprep.subr.bf16.mxu0 0
    %2573 = vmatpush1.bf16.msra.mxu0 0
    %2574 = vmatprep.subr.bf16.mxu0 0
    %2575 = vmatpush1.bf16.msra.mxu0 0
    %2576 = vmatprep.subr.bf16.mxu0 0
    %2577 = vmatpush1.bf16.msra.mxu0 0
    %2578 = vmatprep.mubr.bf16.mxu0 0
    %2579 = vmatmul.mubr.bf16.gmra.mrb[0].mxu0 %v2544
    %v2580 = vpop.f32.mrb[0].mxu0
    %v2581 = vadd.f32 0.0, %v2580
    %v2582 = vpop.f32.mrb[0].mxu0
    %v2583 = vpop.f32.mrb[0].mxu0
    %v2584 = vpop.f32.mrb[0].mxu0
    %2585 = vdwg.mxu0
    %v2586 = vadd.f32 %v354, %v2581
    %v2587 = vxor.u32 %v2586, 2147483648
    %v2588 = vmul.f32 %v2587, 1.442695
    %v2589 = vpow.pop %v2588
    %v2590 = vadd.f32 %v2589, 1.0
    %v2591 = vrcp.pop %v2590
    %v2592 = vmul.f32 1.0, %v2591
    %2594 = vrot.lane.b32.xlu0 %v2586, 32
    %v2595 = vpop.permute.xlu0 %2594
    %v2597 = vmul.f32 %v2592, %v2595
    %2599 = vrot.lane.b32.xlu0 %v2597, 64
    %v2600 = vpop.permute.xlu0 %2599
    %v2602 = vadd.f32 %v2586, %v2600
    %v2603 = vtanh.pop %v2602
    %v2604 = vsub.f32 1.0, %v2592
    %2606 = vrot.lane.b32.xlu0 %v2603, 96
    %v2607 = vpop.permute.xlu0 %2606
    %v2609 = vmul.f32 %v2604, %v2607
    %2611 = vrot.lane.b32.xlu0 %v2541, 32
    %v2612 = vpop.permute.xlu0 %2611
    %v2614 = vmul.f32 %v2592, %v2612
    %v2615 = vadd.f32 %v2609, %v2614
    %v2616 = vpack.c.bf16 %v2483, %v2483
    %2618 = vrot.lane.b32.xlu0 %v2616, 96
    %v2619 = vpop.permute.xlu0 %2618
    %v2621 = vsel %vm438, %v2619, 0
    %2623 = vmatprep.subr.bf16.mxu0 0
    %2624 = vmatpush1.bf16.msra.mxu0 %v520
    %2625 = vmatprep.subr.bf16.mxu0 0
    %2626 = vmatpush1.bf16.msra.mxu0 %v521
    %2627 = vmatprep.subr.bf16.mxu0 0
    %2628 = vmatpush1.bf16.msra.mxu0 0
    %2629 = vmatprep.subr.bf16.mxu0 0
    %2630 = vmatpush1.bf16.msra.mxu0 0
    %2631 = vmatprep.subr.bf16.mxu0 0
    %2632 = vmatpush1.bf16.msra.mxu0 0
    %2633 = vmatprep.subr.bf16.mxu0 0
    %2634 = vmatpush1.bf16.msra.mxu0 0
    %2635 = vmatprep.subr.bf16.mxu0 0
    %2636 = vmatpush1.bf16.msra.mxu0 0
    %2637 = vmatprep.subr.bf16.mxu0 0
    %2638 = vmatpush1.bf16.msra.mxu0 0
    %2639 = vmatprep.subr.bf16.mxu0 0
    %2640 = vmatpush1.bf16.msra.mxu0 0
    %2641 = vmatprep.subr.bf16.mxu0 0
    %2642 = vmatpush1.bf16.msra.mxu0 0
    %2643 = vmatprep.subr.bf16.mxu0 0
    %2644 = vmatpush1.bf16.msra.mxu0 0
    %2645 = vmatprep.subr.bf16.mxu0 0
    %2646 = vmatpush1.bf16.msra.mxu0 0
    %2647 = vmatprep.subr.bf16.mxu0 0
    %2648 = vmatpush1.bf16.msra.mxu0 0
    %2649 = vmatprep.subr.bf16.mxu0 0
    %2650 = vmatpush1.bf16.msra.mxu0 0
    %2651 = vmatprep.subr.bf16.mxu0 0
    %2652 = vmatpush1.bf16.msra.mxu0 0
    %2653 = vmatprep.subr.bf16.mxu0 0
    %2654 = vmatpush1.bf16.msra.mxu0 0
    %2655 = vmatprep.mubr.bf16.mxu0 0
    %2656 = vmatmul.mubr.bf16.gmra.mrb[0].mxu0 %v2621
    %v2657 = vpop.f32.mrb[0].mxu0
    %v2658 = vadd.f32 %v401, %v2657
    %v2659 = vpop.f32.mrb[0].mxu0
    %v2660 = vpop.f32.mrb[0].mxu0
    %v2661 = vpop.f32.mrb[0].mxu0
    %2662 = vdwg.mxu0
    %v2663 = vxor.u32 %v2658, 2147483648
    %v2664 = vmul.f32 %v2663, 1.442695
    %v2665 = vpow.pop %v2664
    %v2666 = vadd.f32 %v2665, 1.0
    %v2667 = vrcp.pop %v2666
    %v2668 = vmul.f32 1.0, %v2667
    %2670 = vrot.lane.b32.xlu0 %v2658, 96
    %v2671 = vpop.permute.xlu0 %2670
    %v2673 = vmul.f32 %v2668, %v2671
    %v2674 = vpack.c.bf16 %v2615, %v2615
    %2676 = vrot.lane.b32.xlu0 %v2674, 96
    %v2677 = vpop.permute.xlu0 %2676
    %v2679 = vsel %vm438, %v2677, 0
    %2681 = vmatprep.subr.bf16.mxu0 0
    %2682 = vmatpush1.bf16.msra.mxu0 %v520
    %2683 = vmatprep.subr.bf16.mxu0 0
    %2684 = vmatpush1.bf16.msra.mxu0 %v521
    %2685 = vmatprep.subr.bf16.mxu0 0
    %2686 = vmatpush1.bf16.msra.mxu0 0
    %2687 = vmatprep.subr.bf16.mxu0 0
    %2688 = vmatpush1.bf16.msra.mxu0 0
    %2689 = vmatprep.subr.bf16.mxu0 0
    %2690 = vmatpush1.bf16.msra.mxu0 0
    %2691 = vmatprep.subr.bf16.mxu0 0
    %2692 = vmatpush1.bf16.msra.mxu0 0
    %2693 = vmatprep.subr.bf16.mxu0 0
    %2694 = vmatpush1.bf16.msra.mxu0 0
    %2695 = vmatprep.subr.bf16.mxu0 0
    %2696 = vmatpush1.bf16.msra.mxu0 0
    %2697 = vmatprep.subr.bf16.mxu0 0
    %2698 = vmatpush1.bf16.msra.mxu0 0
    %2699 = vmatprep.subr.bf16.mxu0 0
    %2700 = vmatpush1.bf16.msra.mxu0 0
    %2701 = vmatprep.subr.bf16.mxu0 0
    %2702 = vmatpush1.bf16.msra.mxu0 0
    %2703 = vmatprep.subr.bf16.mxu0 0
    %2704 = vmatpush1.bf16.msra.mxu0 0
    %2705 = vmatprep.subr.bf16.mxu0 0
    %2706 = vmatpush1.bf16.msra.mxu0 0
    %2707 = vmatprep.subr.bf16.mxu0 0
    %2708 = vmatpush1.bf16.msra.mxu0 0
    %2709 = vmatprep.subr.bf16.mxu0 0
    %2710 = vmatpush1.bf16.msra.mxu0 0
    %2711 = vmatprep.subr.bf16.mxu0 0
    %2712 = vmatpush1.bf16.msra.mxu0 0
    %2713 = vmatprep.mubr.bf16.mxu0 0
    %2714 = vmatmul.mubr.bf16.gmra.mrb[0].mxu0 %v2679
    %v2715 = vpop.f32.mrb[0].mxu0
    %v2716 = vadd.f32 %v405, %v2715
    %v2717 = vpop.f32.mrb[0].mxu0
    %v2718 = vpop.f32.mrb[0].mxu0
    %v2719 = vpop.f32.mrb[0].mxu0
    %2720 = vdwg.mxu0
    %v2721 = vxor.u32 %v2716, 2147483648
    %v2722 = vmul.f32 %v2721, 1.442695
    %v2723 = vpow.pop %v2722
    %v2724 = vadd.f32 %v2723, 1.0
    %v2725 = vrcp.pop %v2724
    %v2726 = vmul.f32 1.0, %v2725
    %2728 = vrot.lane.b32.xlu0 %v2716, 96
    %v2729 = vpop.permute.xlu0 %2728
    %v2731 = vmul.f32 %v2726, %v2729
    %v2732 = vadd.f32 %v2673, %v2731
    %v2733 = vpack.c.bf16 %v2732, %v2732
    %v2735 = vsel %vm438, %v2733, 0
    %2737 = vmatprep.subr.bf16.mxu0 0
    %2738 = vmatpush1.bf16.msra.mxu0 %v1977
    %2739 = vmatprep.subr.bf16.mxu0 0
    %2740 = vmatpush1.bf16.msra.mxu0 %v1978
    %2741 = vmatprep.subr.bf16.mxu0 0
    %2742 = vmatpush1.bf16.msra.mxu0 0
    %2743 = vmatprep.subr.bf16.mxu0 0
    %2744 = vmatpush1.bf16.msra.mxu0 0
    %2745 = vmatprep.subr.bf16.mxu0 0
    %2746 = vmatpush1.bf16.msra.mxu0 0
    %2747 = vmatprep.subr.bf16.mxu0 0
    %2748 = vmatpush1.bf16.msra.mxu0 0
    %2749 = vmatprep.subr.bf16.mxu0 0
    %2750 = vmatpush1.bf16.msra.mxu0 0
    %2751 = vmatprep.subr.bf16.mxu0 0
    %2752 = vmatpush1.bf16.msra.mxu0 0
    %2753 = vmatprep.subr.bf16.mxu0 0
    %2754 = vmatpush1.bf16.msra.mxu0 0
    %2755 = vmatprep.subr.bf16.mxu0 0
    %2756 = vmatpush1.bf16.msra.mxu0 0
    %2757 = vmatprep.subr.bf16.mxu0 0
    %2758 = vmatpush1.bf16.msra.mxu0 0
    %2759 = vmatprep.subr.bf16.mxu0 0
    %2760 = vmatpush1.bf16.msra.mxu0 0
    %2761 = vmatprep.subr.bf16.mxu0 0
    %2762 = vmatpush1.bf16.msra.mxu0 0
    %2763 = vmatprep.subr.bf16.mxu0 0
    %2764 = vmatpush1.bf16.msra.mxu0 0
    %2765 = vmatprep.subr.bf16.mxu0 0
    %2766 = vmatpush1.bf16.msra.mxu0 0
    %2767 = vmatprep.subr.bf16.mxu0 0
    %2768 = vmatpush1.bf16.msra.mxu0 0
    %2769 = vmatprep.mubr.bf16.mxu0 0
    %2770 = vmatmul.mubr.bf16.gmra.mrb[0].mxu0 %v2735
    %v2771 = vpop.f32.mrb[0].mxu0
    %v2772 = vadd.f32 0.0, %v2771
    %v2773 = vpop.f32.mrb[0].mxu0
    %v2774 = vpop.f32.mrb[0].mxu0
    %v2775 = vpop.f32.mrb[0].mxu0
    %2776 = vdwg.mxu0
    %v2777 = vadd.f32 %v359, %v2772
    %v2778 = vxor.u32 %v2777, 2147483648
    %v2779 = vmul.f32 %v2778, 1.442695
    %v2780 = vpow.pop %v2779
    %v2781 = vadd.f32 %v2780, 1.0
    %v2782 = vrcp.pop %v2781
    %v2783 = vmul.f32 1.0, %v2782
    %2785 = vrot.lane.b32.xlu0 %v2777, 32
    %v2786 = vpop.permute.xlu0 %2785
    %v2788 = vmul.f32 %v2783, %v2786
    %2790 = vrot.lane.b32.xlu0 %v2788, 64
    %v2791 = vpop.permute.xlu0 %2790
    %v2793 = vadd.f32 %v2777, %v2791
    %v2794 = vtanh.pop %v2793
    %v2795 = vsub.f32 1.0, %v2783
    %2797 = vrot.lane.b32.xlu0 %v2794, 96
    %v2798 = vpop.permute.xlu0 %2797
    %v2800 = vmul.f32 %v2795, %v2798
    %2802 = vrot.lane.b32.xlu0 %v2732, 32
    %v2803 = vpop.permute.xlu0 %2802
    %v2805 = vmul.f32 %v2783, %v2803
    %v2806 = vadd.f32 %v2800, %v2805
    %v2807 = vadd.f32 %v362, %v2291
    %v2808 = vxor.u32 %v2807, 2147483648
    %v2809 = vmul.f32 %v2808, 1.442695
    %v2810 = vpow.pop %v2809
    %v2811 = vadd.f32 %v2810, 1.0
    %v2812 = vrcp.pop %v2811
    %v2813 = vmul.f32 1.0, %v2812
    %2815 = vrot.lane.b32.xlu0 %v2807, 32
    %v2816 = vpop.permute.xlu0 %2815
    %v2818 = vmul.f32 %v2813, %v2816
    %2820 = vrot.lane.b32.xlu0 %v2818, 64
    %v2821 = vpop.permute.xlu0 %2820
    %v2823 = vadd.f32 %v2807, %v2821
    %v2824 = vtanh.pop %v2823
    %v2825 = vsub.f32 1.0, %v2813
    %2827 = vrot.lane.b32.xlu0 %v2824, 96
    %v2828 = vpop.permute.xlu0 %2827
    %v2830 = vmul.f32 %v2825, %v2828
    %v2831 = vmul.f32 %v2813, %v2322
    %v2832 = vadd.f32 %v2830, %v2831
    %v2833 = vadd.f32 %v367, %v2581
    %v2834 = vxor.u32 %v2833, 2147483648
    %v2835 = vmul.f32 %v2834, 1.442695
    %v2836 = vpow.pop %v2835
    %v2837 = vadd.f32 %v2836, 1.0
    %v2838 = vrcp.pop %v2837
    %v2839 = vmul.f32 1.0, %v2838
    %2841 = vrot.lane.b32.xlu0 %v2833, 32
    %v2842 = vpop.permute.xlu0 %2841
    %v2844 = vmul.f32 %v2839, %v2842
    %2846 = vrot.lane.b32.xlu0 %v2844, 64
    %v2847 = vpop.permute.xlu0 %2846
    %v2849 = vadd.f32 %v2833, %v2847
    %v2850 = vtanh.pop %v2849
    %v2851 = vsub.f32 1.0, %v2839
    %2853 = vrot.lane.b32.xlu0 %v2850, 96
    %v2854 = vpop.permute.xlu0 %2853
    %v2856 = vmul.f32 %v2851, %v2854
    %v2857 = vmul.f32 %v2839, %v2612
    %v2858 = vadd.f32 %v2856, %v2857
    %v2859 = vpack.c.bf16 %v2457, %v2193
    %v2860 = vpack.c.bf16 %v2806, %v2483
    %v2861 = vpack.c.bf16 %v2858, %v2832
    %v2862 = vld [vmem:[#allocation2 + $0x58] sm:$0xf]
    %v2863 = vld [vmem:[#allocation2 + $0x5c] sm:$0xf]
    %v2864 = vld [vmem:[#allocation2 + $0x60] sm:$0xf]
    %v2865 = vld [vmem:[#allocation2 + $0x64] sm:$0xf]
    %v2866 = vld [vmem:[#allocation4 + $0x40] sm:$0x1]
    %v2867 = vlaneseq
    %v2868 = vshrl.u32 %v2867, 7
    %v2869 = vsub.s32 0, %v2868
    %v2870 = vrot.slane %v2866, %v2869
    %2874 = vrot.lane.b32.xlu0 %v2859, 96
    %v2875 = vpop.permute.xlu0 %2874
    %2876 = vrot.lane.b32.xlu0 %v2860, 96
    %v2877 = vpop.permute.xlu0 %2876
    %2878 = vrot.lane.b32.xlu0 %v2861, 96
    %v2879 = vpop.permute.xlu0 %2878
    %v2884 = vunpack.c.l.b16 %v2862
    %v2885 = vunpack.c.l.b16 %v2863
    %v2886 = vunpack.c.l.b16 %v2864
    %v2887 = vunpack.c.l.b16 %v2865
    %v2888 = vpack.c.b16 %v2885, %v2884
    %v2889 = vpack.c.b16 %v2887, %v2886
    %v2893 = vsel %vm438, %v2875, 0
    %v2896 = vsel %vm438, %v2877, 0
    %v2899 = vsel %vm438, %v2879, 0
    %2901 = vmatprep.subr.bf16.mxu0 0
    %2902 = vmatpush1.bf16.msra.mxu0 %v2888
    %2903 = vmatprep.subr.bf16.mxu0 0
    %2904 = vmatpush1.bf16.msra.mxu0 %v2889
    %2905 = vmatprep.subr.bf16.mxu0 0
    %2906 = vmatpush1.bf16.msra.mxu0 0
    %2907 = vmatprep.subr.bf16.mxu0 0
    %2908 = vmatpush1.bf16.msra.mxu0 0
    %2909 = vmatprep.subr.bf16.mxu0 0
    %2910 = vmatpush1.bf16.msra.mxu0 0
    %2911 = vmatprep.subr.bf16.mxu0 0
    %2912 = vmatpush1.bf16.msra.mxu0 0
    %2913 = vmatprep.subr.bf16.mxu0 0
    %2914 = vmatpush1.bf16.msra.mxu0 0
    %2915 = vmatprep.subr.bf16.mxu0 0
    %2916 = vmatpush1.bf16.msra.mxu0 0
    %2917 = vmatprep.subr.bf16.mxu0 0
    %2918 = vmatpush1.bf16.msra.mxu0 0
    %2919 = vmatprep.subr.bf16.mxu0 0
    %2920 = vmatpush1.bf16.msra.mxu0 0
    %2921 = vmatprep.subr.bf16.mxu0 0
    %2922 = vmatpush1.bf16.msra.mxu0 0
    %2923 = vmatprep.subr.bf16.mxu0 0
    %2924 = vmatpush1.bf16.msra.mxu0 0
    %2925 = vmatprep.subr.bf16.mxu0 0
    %2926 = vmatpush1.bf16.msra.mxu0 0
    %2927 = vmatprep.subr.bf16.mxu0 0
    %2928 = vmatpush1.bf16.msra.mxu0 0
    %2929 = vmatprep.subr.bf16.mxu0 0
    %2930 = vmatpush1.bf16.msra.mxu0 0
    %2931 = vmatprep.subr.bf16.mxu0 0
    %2932 = vmatpush1.bf16.msra.mxu0 0
    %2933 = vmatprep.mubr.bf16.mxu0 0
    %2934 = vmatmul.mubr.bf16.gmra.mrb[0].mxu0 %v2893
    %v2935 = vpop.f32.mrb[0].mxu0
    %v2936 = vadd.f32 %v2870, %v2935
    %v2937 = vpop.f32.mrb[0].mxu0
    %v2938 = vpop.f32.mrb[0].mxu0
    %v2939 = vadd.f32 %v2870, %v2938
    %v2940 = vpop.f32.mrb[0].mxu0
    %2941 = vmatprep.mubr.bf16.mxu0 0
    %2942 = vmatmul.mubr.bf16.gmra.mrb[0].mxu0 %v2896
    %v2943 = vpop.f32.mrb[0].mxu0
    %v2944 = vadd.f32 %v2870, %v2943
    %v2945 = vpop.f32.mrb[0].mxu0
    %v2946 = vpop.f32.mrb[0].mxu0
    %v2947 = vadd.f32 %v2870, %v2946
    %v2948 = vpop.f32.mrb[0].mxu0
    %2949 = vmatprep.mubr.bf16.mxu0 0
    %2950 = vmatmul.mubr.bf16.gmra.mrb[0].mxu0 %v2899
    %v2951 = vpop.f32.mrb[0].mxu0
    %v2952 = vadd.f32 %v2870, %v2951
    %v2953 = vpop.f32.mrb[0].mxu0
    %v2954 = vpop.f32.mrb[0].mxu0
    %v2955 = vadd.f32 %v2870, %v2954
    %v2956 = vpop.f32.mrb[0].mxu0
    %2957 = vdwg.mxu0
    %v2958 = vmax.f32 %v2936, 0.0
    %v2959 = vmax.f32 %v2939, 0.0
    %v2960 = vmax.f32 %v2944, 0.0
    %v2961 = vmax.f32 %v2947, 0.0
    %v2962 = vmax.f32 %v2952, 0.0
    %v2963 = vmax.f32 %v2955, 0.0
    %v2964 = vpack.c.bf16 %v2959, %v2958
    %v2965 = vpack.c.bf16 %v2961, %v2960
    %v2966 = vpack.c.bf16 %v2963, %v2962
    %v2967 = vld [vmem:[#allocation2 + $0x68] sm:$0xf]
    %v2968 = vld [vmem:[#allocation2 + $0x6c] sm:$0xf]
    %v2969 = vld [vmem:[#allocation2 + $0x70] sm:$0xf]
    %v2970 = vld [vmem:[#allocation2 + $0x74] sm:$0xf]
    %v2971 = vld [vmem:[#allocation2 + $0x78] sm:$0xf]
    %v2972 = vld [vmem:[#allocation2 + $0x7c] sm:$0xf]
    %v2973 = vld [vmem:[#allocation2 + $0x80] sm:$0xf]
    %v2974 = vld [vmem:[#allocation2 + $0x84] sm:$0xf]
    %v2975 = vld [vmem:[#allocation4 + $0x48] sm:$0x1]
    %v2976 = vlaneseq
    %v2977 = vshrl.u32 %v2976, 7
    %v2978 = vsub.s32 0, %v2977
    %v2979 = vrot.slane %v2975, %v2978
    %v2988 = vunpack.c.l.b16 %v2967
    %v2989 = vunpack.c.l.b16 %v2968
    %v2990 = vunpack.c.l.b16 %v2969
    %v2991 = vunpack.c.l.b16 %v2970
    %v2992 = vunpack.c.l.b16 %v2971
    %v2993 = vunpack.c.l.b16 %v2972
    %v2994 = vunpack.c.l.b16 %v2973
    %v2995 = vunpack.c.l.b16 %v2974
    %v2996 = vpack.c.b16 %v2989, %v2988
    %v2997 = vpack.c.b16 %v2991, %v2990
    %v2998 = vpack.c.b16 %v2993, %v2992
    %v2999 = vpack.c.b16 %v2995, %v2994
    %vm3004 = vcmask 523264
    %v3006 = vsel %vm3004, %v2964, 0
    %v3009 = vsel %vm3004, %v2965, 0
    %v3012 = vsel %vm3004, %v2966, 0
    %3014 = vmatprep.subr.bf16.mxu0 0
    %3015 = vmatpush1.bf16.msra.mxu0 %v2996
    %3016 = vmatprep.subr.bf16.mxu0 0
    %3017 = vmatpush1.bf16.msra.mxu0 %v2997
    %3018 = vmatprep.subr.bf16.mxu0 0
    %3019 = vmatpush1.bf16.msra.mxu0 %v2998
    %3020 = vmatprep.subr.bf16.mxu0 0
    %3021 = vmatpush1.bf16.msra.mxu0 %v2999
    %3022 = vmatprep.subr.bf16.mxu0 0
    %3023 = vmatpush1.bf16.msra.mxu0 0
    %3024 = vmatprep.subr.bf16.mxu0 0
    %3025 = vmatpush1.bf16.msra.mxu0 0
    %3026 = vmatprep.subr.bf16.mxu0 0
    %3027 = vmatpush1.bf16.msra.mxu0 0
    %3028 = vmatprep.subr.bf16.mxu0 0
    %3029 = vmatpush1.bf16.msra.mxu0 0
    %3030 = vmatprep.subr.bf16.mxu0 0
    %3031 = vmatpush1.bf16.msra.mxu0 0
    %3032 = vmatprep.subr.bf16.mxu0 0
    %3033 = vmatpush1.bf16.msra.mxu0 0
    %3034 = vmatprep.subr.bf16.mxu0 0
    %3035 = vmatpush1.bf16.msra.mxu0 0
    %3036 = vmatprep.subr.bf16.mxu0 0
    %3037 = vmatpush1.bf16.msra.mxu0 0
    %3038 = vmatprep.subr.bf16.mxu0 0
    %3039 = vmatpush1.bf16.msra.mxu0 0
    %3040 = vmatprep.subr.bf16.mxu0 0
    %3041 = vmatpush1.bf16.msra.mxu0 0
    %3042 = vmatprep.subr.bf16.mxu0 0
    %3043 = vmatpush1.bf16.msra.mxu0 0
    %3044 = vmatprep.subr.bf16.mxu0 0
    %3045 = vmatpush1.bf16.msra.mxu0 0
    %3046 = vmatprep.mubr.bf16.mxu0 0
    %3047 = vmatmul.mubr.bf16.gmra.mrb[0].mxu0 %v3006
    %v3048 = vpop.f32.mrb[0].mxu0
    %v3049 = vadd.f32 %v2979, %v3048
    %v3050 = vpop.f32.mrb[0].mxu0
    %v3051 = vpop.f32.mrb[0].mxu0
    %v3052 = vadd.f32 %v2979, %v3051
    %v3053 = vpop.f32.mrb[0].mxu0
    %3054 = vmatprep.mubr.bf16.mxu0 0
    %3055 = vmatmul.mubr.bf16.gmra.mrb[0].mxu0 %v3009
    %v3056 = vpop.f32.mrb[0].mxu0
    %v3057 = vadd.f32 %v2979, %v3056
    %v3058 = vpop.f32.mrb[0].mxu0
    %v3059 = vpop.f32.mrb[0].mxu0
    %v3060 = vadd.f32 %v2979, %v3059
    %v3061 = vpop.f32.mrb[0].mxu0
    %3062 = vmatprep.mubr.bf16.mxu0 0
    %3063 = vmatmul.mubr.bf16.gmra.mrb[0].mxu0 %v3012
    %v3064 = vpop.f32.mrb[0].mxu0
    %v3065 = vadd.f32 %v2979, %v3064
    %v3066 = vpop.f32.mrb[0].mxu0
    %v3067 = vpop.f32.mrb[0].mxu0
    %v3068 = vadd.f32 %v2979, %v3067
    %v3069 = vpop.f32.mrb[0].mxu0
    %3070 = vdwg.mxu0
    %v3071 = vmul.f32 %v88, %v56
    %v3072 = vmul.f32 %v102, %v56
    %v3073 = vmul.f32 %v109, %v56
    %v3074 = vmul.f32 %v123, %v56
    %v3075 = vmul.f32 %v130, %v56
    %v3076 = vmul.f32 %v137, %v56
    %vm3077 = vcmask 64512
    %v3078 = vsel %vm3077, %v3049, -inf
    %3079 = vmax.xlane.f32.xlu0 %v3078
    %v3080 = vpop.xlane.xlu0 %3079
    %v3081 = vsel %vm3077, %v3052, -inf
    %3082 = vmax.xlane.f32.xlu0 %v3081
    %v3083 = vpop.xlane.xlu0 %3082
    %v3084 = vsel %vm3077, %v3057, -inf
    %3085 = vmax.xlane.f32.xlu0 %v3084
    %v3086 = vpop.xlane.xlu0 %3085
    %v3087 = vsel %vm3077, %v3060, -inf
    %3088 = vmax.xlane.f32.xlu0 %v3087
    %v3089 = vpop.xlane.xlu0 %3088
    %v3090 = vsel %vm3077, %v3065, -inf
    %3091 = vmax.xlane.f32.xlu0 %v3090
    %v3092 = vpop.xlane.xlu0 %3091
    %v3093 = vsel %vm3077, %v3068, -inf
    %3094 = vmax.xlane.f32.xlu0 %v3093
    %v3095 = vpop.xlane.xlu0 %3094
    %v3096 = vsub.f32 %v3049, %v3080
    %v3097 = vsub.f32 %v3052, %v3083
    %v3098 = vsub.f32 %v3057, %v3086
    %v3099 = vsub.f32 %v3060, %v3089
    %v3100 = vsub.f32 %v3065, %v3092
    %v3101 = vsub.f32 %v3068, %v3095
    %v3102 = vmul.f32 %v3096, 1.442695
    %v3103 = vpow.pop %v3102
    %v3104 = vmul.f32 %v3097, 1.442695
    %v3105 = vpow.pop %v3104
    %v3106 = vmul.f32 %v3098, 1.442695
    %v3107 = vpow.pop %v3106
    %v3108 = vmul.f32 %v3099, 1.442695
    %v3109 = vpow.pop %v3108
    %v3110 = vmul.f32 %v3100, 1.442695
    %v3111 = vpow.pop %v3110
    %v3112 = vmul.f32 %v3101, 1.442695
    %v3113 = vpow.pop %v3112
    %v3114 = vsel %vm3077, %v3103, 0.0
    %3115 = vadd.xlane.f32.xlu0 %v3114
    %v3116 = vpop.xlane.xlu0 %3115
    %v3117 = vsel %vm3077, %v3105, 0.0
    %3118 = vadd.xlane.f32.xlu0 %v3117
    %v3119 = vpop.xlane.xlu0 %3118
    %v3120 = vsel %vm3077, %v3107, 0.0
    %3121 = vadd.xlane.f32.xlu0 %v3120
    %v3122 = vpop.xlane.xlu0 %3121
    %v3123 = vsel %vm3077, %v3109, 0.0
    %3124 = vadd.xlane.f32.xlu0 %v3123
    %v3125 = vpop.xlane.xlu0 %3124
    %v3126 = vsel %vm3077, %v3111, 0.0
    %3127 = vadd.xlane.f32.xlu0 %v3126
    %v3128 = vpop.xlane.xlu0 %3127
    %v3129 = vsel %vm3077, %v3113, 0.0
    %3130 = vadd.xlane.f32.xlu0 %v3129
    %v3131 = vpop.xlane.xlu0 %3130
    %v3132 = vlog2.pop %v3116
    %v3133 = vmul.f32 %v3132, 0.6931472
    %v3134 = vlog2.pop %v3119
    %v3135 = vmul.f32 %v3134, 0.6931472
    %v3136 = vlog2.pop %v3122
    %v3137 = vmul.f32 %v3136, 0.6931472
    %v3138 = vlog2.pop %v3125
    %v3139 = vmul.f32 %v3138, 0.6931472
    %v3140 = vlog2.pop %v3128
    %v3141 = vmul.f32 %v3140, 0.6931472
    %v3142 = vlog2.pop %v3131
    %v3143 = vmul.f32 %v3142, 0.6931472
    %v3144 = vadd.f32 %v3080, %v3133
    %v3145 = vadd.f32 %v3083, %v3135
    %v3146 = vadd.f32 %v3086, %v3137
    %v3147 = vadd.f32 %v3089, %v3139
    %v3148 = vadd.f32 %v3092, %v3141
    %v3149 = vadd.f32 %v3095, %v3143
    %v3150 = vsub.f32 %v3049, %v3144
    %v3151 = vsub.f32 %v3052, %v3145
    %v3152 = vsub.f32 %v3057, %v3146
    %v3153 = vsub.f32 %v3060, %v3147
    %v3154 = vsub.f32 %v3065, %v3148
    %v3155 = vsub.f32 %v3068, %v3149
    %v3156 = vmul.f32 %v3150, %v3071
    %v3157 = vmul.f32 %v3151, %v3072
    %v3158 = vmul.f32 %v3152, %v3073
    %v3159 = vmul.f32 %v3153, %v3074
    %v3160 = vmul.f32 %v3154, %v3075
    %v3161 = vmul.f32 %v3155, %v3076
    %v3162 = vsel %vm3077, %v3156, 0.0
    %v3163 = vsel %vm3077, %v3157, 0.0
    %v3164 = vadd.f32 %v3162, %v3163
    %v3165 = vsel %vm3077, %v3158, 0.0
    %v3166 = vadd.f32 %v3164, %v3165
    %v3167 = vsel %vm3077, %v3159, 0.0
    %v3168 = vadd.f32 %v3166, %v3167
    %v3169 = vsel %vm3077, %v3160, 0.0
    %v3170 = vadd.f32 %v3168, %v3169
    %v3171 = vsel %vm3077, %v3161, 0.0
    %v3172 = vadd.f32 %v3170, %v3171
    %3173 = vadd.xlane.f32.xlu0 %v3172
    %v3174 = vpop.xlane.xlu0 %3173
    %v3175 = vrot.slane %v3174, 4
    %v3176 = vadd.f32 %v3174, %v3175
    %v3177 = vrot.slane %v3176, 2
    %v3178 = vadd.f32 %v3176, %v3177
    %v3179 = vrot.slane %v3178, 1
    %v3180 = vadd.f32 %v3178, %v3179
    %s3181 = vtos %v3180
    %v3182 = vadd.f32 %v1894, 1.0
    %v3183 = vmul.f32 %v1894, %v1894
    %3185 = vrot.lane.b32.xlu0 %v3183, 16
    %v3186 = vpop.permute.xlu0 %3185
    %v3188 = vsub.f32 %v3182, %v3186
    %v3189 = vmul.f32 %v1894, 1.442695
    %v3190 = vpow.pop %v3189
    %v3191 = vsub.f32 %v3188, %v3190
    %v3192 = vmul.f32 %v56, %v3191
    %3194 = vrot.lane.b32.xlu0 %v3192, 112
    %v3195 = vpop.permute.xlu0 %3194
    %v3197 = vsel %vm197, %v3195, 0.0
    %3198 = vadd.xlane.f32.xlu0 %v3197
    %v3199 = vpop.xlane.xlu0 %3198
    %v3200 = vrot.slane %v3199, 4
    %v3201 = vadd.f32 %v3199, %v3200
    %v3202 = vrot.slane %v3201, 2
    %v3203 = vadd.f32 %v3201, %v3202
    %v3204 = vrot.slane %v3203, 1
    %v3205 = vadd.f32 %v3203, %v3204
    %s3206 = vtos %v3205
    %s3207 = smul.f32 %s3206, -0.5
    %s3208 = ssub.f32 0.0, %s3181
    %s3209 = smul.f32 %s3207, 0.005
    %s3210 = sadd.f32 %s3208, %s3209
    %v3211 = vstv %s3210
    %3212 = vst [vmem:[%s4] sm:$0xff] %v3211
    // Predicated region
    $region26: #{dvae_forward.1} parent=1 // pred_check
      _
    $region27: #{dvae_forward.1} parent=1 // pred_check_branch
      %3214 = sbr.rel (0) target = $region29
    $region28: #{dvae_forward.1} parent=1 // pred_region
      _
    $region29: #{dvae_forward.1} parent=1 // pred_fallthru
      _
    // Predicated region
    $region30: #{dvae_forward.1} parent=1 // pred_check
      _
    $region31: #{dvae_forward.1} parent=1 // pred_check_branch
      %3216 = sbr.rel (0) target = $region33
    $region32: #{dvae_forward.1} parent=1 // pred_region
      _
    $region33: #{dvae_forward.1} parent=1 // pred_fallthru
      _
    %3217 = vsyncpa [#allocation3], 1
    %3218 = vsyncpa [#allocation5], 1

</llo_original>
